<compile_context>
chip_gen: v6e
topology: v6e:2x2x1
jax: 0.10.0
libtpu: 0.0.40
codegen_flags: <defaults>
</compile_context>

<pallas_src>
import functools
import math

import jax
import jax.numpy as jnp
from jax.experimental import pallas as pl
from jax.experimental.pallas import tpu as pltpu


def _rup(x, m):
    return ((x + m - 1) // m) * m


# --------------------------------------------------------------------------
# Pallas GEMM kernel (bf16 x bf16 -> f32 acc, fused bias, bf16 store)
# --------------------------------------------------------------------------
def _mm_kernel(a_ref, w_ref, b_ref, o_ref):
    acc = jnp.dot(a_ref[...], w_ref[...], preferred_element_type=jnp.float32)
    acc = acc + b_ref[...]
    o_ref[...] = acc.astype(o_ref.dtype)


def _m_tile(M):
    Mp = _rup(M, 8)
    if Mp <= 256:
        return Mp, Mp                 # single M block
    return _rup(M, 256), 256          # 256-row tiles (>=2 parallel blocks)


def _n_tile(Np):
    if Np <= 512:
        return Np
    for nb in (512, 256, 128):
        if Np % nb == 0:
            return nb
    return 128


@functools.lru_cache(maxsize=None)
def _mm_call(Mp, Kp, Np, Mb, Nb):
    # VMEM budget from the actual (double-buffered) tiles; capped well below
    # v7x's 64 MiB physical VMEM per TensorCore.
    est = (2 * Mb * Kp * 2      # A panels (bf16, double buffered)
           + 2 * Kp * Nb * 2    # weight panels (bf16)
           + 2 * Nb * 4         # bias
           + 2 * Mb * Nb * 2)   # output tiles (bf16)
    vmem_limit = int(min(max(2 * est, 8 << 20), 48 << 20))
    return pl.pallas_call(
        _mm_kernel,
        out_shape=jax.ShapeDtypeStruct((Mp, Np), jnp.bfloat16),
        grid=(Mp // Mb, Np // Nb),
        in_specs=[pl.BlockSpec((Mb, Kp), lambda i, j: (i, 0)),
                  pl.BlockSpec((Kp, Nb), lambda i, j: (0, j)),
                  pl.BlockSpec((1, Nb), lambda i, j: (0, j))],
        out_specs=pl.BlockSpec((Mb, Nb), lambda i, j: (i, j)),
        compiler_params=pltpu.CompilerParams(
            dimension_semantics=("parallel", "parallel"),
            vmem_limit_bytes=vmem_limit),
    )


_PALLAS_MIN_M = 64   # below this the MXU is <7% occupied: use XLA instead


def _apply_act(x, act):
    if act == "gelu":
        return jax.nn.gelu(x, approximate=False)
    if act == "silu":
        return jax.nn.silu(x)
    return x


def matmul_bias_act(a, w, b=None, act="none"):
    """a: (M, K); w: (K, N) pre-transposed; b: (N,) or None."""
    M, K = a.shape
    K2, N = w.shape
    assert K == K2
    if M < _PALLAS_MIN_M:
        # Tiny GEMM: let XLA fuse it (f32) with the surrounding glue.
        out = jnp.dot(a.astype(jnp.float32), w.astype(jnp.float32))
        if b is not None:
            out = out + b.astype(jnp.float32)
        return _apply_act(out, act)
    Mp, Mb = _m_tile(M)
    Kp = _rup(K, 128)
    Np = _rup(N, 128)
    Nb = _n_tile(Np)
    a_p = jnp.pad(a.astype(jnp.bfloat16), ((0, Mp - M), (0, Kp - K)))
    w_p = jnp.pad(w.astype(jnp.bfloat16), ((0, Kp - K), (0, Np - N)))
    if b is None:
        b_p = jnp.zeros((1, Np), jnp.float32)
    else:
        b_p = jnp.pad(b.astype(jnp.float32), (0, Np - N)).reshape(1, Np)
    out = _mm_call(Mp, Kp, Np, Mb, Nb)(a_p, w_p, b_p)[:M, :N]
    return _apply_act(out, act)


# --------------------------------------------------------------------------
# Pallas attention kernel — one compiled variant shared by every block
# (kv_len is a scalar-prefetch input, q is pre-scaled on the host).
# --------------------------------------------------------------------------
def _attn_kernel(kvlen_ref, q_ref, k_ref, v_ref, o_ref):
    q = q_ref[0]
    k = k_ref[0]
    v = v_ref[0]
    s = jax.lax.dot_general(q, k, (((1,), (1,)), ((), ())),
                            preferred_element_type=jnp.float32)
    mask = jax.lax.broadcasted_iota(jnp.int32, s.shape, 1) < kvlen_ref[0]
    s = jnp.where(mask, s, -1e30)
    m = jnp.max(s, axis=-1, keepdims=True)
    p = jnp.exp(s - m)
    denom = jnp.sum(p, axis=-1, keepdims=True)
    o = jnp.dot(p.astype(v.dtype), v, preferred_element_type=jnp.float32)
    o_ref[0] = o * pl.reciprocal(denom, approx=True)


@functools.lru_cache(maxsize=None)
def _attn_call(BH, Sqp, Skvp, dp):
    return pl.pallas_call(
        _attn_kernel,
        out_shape=jax.ShapeDtypeStruct((BH, Sqp, dp), jnp.float32),
        grid_spec=pltpu.PrefetchScalarGridSpec(
            num_scalar_prefetch=1,
            grid=(BH,),
            in_specs=[pl.BlockSpec((1, Sqp, dp), lambda b, kv: (b, 0, 0)),
                      pl.BlockSpec((1, Skvp, dp), lambda b, kv: (b, 0, 0)),
                      pl.BlockSpec((1, Skvp, dp), lambda b, kv: (b, 0, 0))],
            out_specs=pl.BlockSpec((1, Sqp, dp), lambda b, kv: (b, 0, 0))),
        compiler_params=pltpu.CompilerParams(
            dimension_semantics=("parallel",),
            vmem_limit_bytes=16 << 20),
    )


def pallas_attention(q, k, v):
    """q: (BH, Sq, d) already scaled; k/v: (BH, Skv, d). Returns f32."""
    BH, Sq, d = q.shape
    Skv = k.shape[1]
    Sqp, Skvp, dp = _rup(Sq, 16), _rup(Skv, 16), _rup(d, 128)
    qp = jnp.pad(q.astype(jnp.bfloat16), ((0, 0), (0, Sqp - Sq), (0, dp - d)))
    kp = jnp.pad(k.astype(jnp.bfloat16), ((0, 0), (0, Skvp - Skv), (0, dp - d)))
    vp = jnp.pad(v.astype(jnp.bfloat16), ((0, 0), (0, Skvp - Skv), (0, dp - d)))
    kvlen = jnp.full((1,), Skv, dtype=jnp.int32)
    out = _attn_call(BH, Sqp, Skvp, dp)(kvlen, qp, kp, vp)
    return out[:, :Sq, :d]


# --------------------------------------------------------------------------
# Channels-last JAX glue (norms, im2col, pooling, upsampling) — fuses under jit
# --------------------------------------------------------------------------
def gelu(x):
    return jax.nn.gelu(x, approximate=False)


def silu(x):
    return jax.nn.silu(x)


def group_norm1(x, g, b, eps=1e-5):
    """GroupNorm(1, C) with channels-last x; statistics in f32."""
    xf = x.astype(jnp.float32)
    axes = tuple(range(1, x.ndim))
    mu = jnp.mean(xf, axis=axes, keepdims=True)
    var = jnp.mean((xf - mu) ** 2, axis=axes, keepdims=True)
    xn = (xf - mu) * jax.lax.rsqrt(var + eps)
    shape = (1,) * (x.ndim - 1) + (-1,)
    return xn * g.reshape(shape) + b.reshape(shape)


def layer_norm(x, g, b, eps=1e-5):
    xf = x.astype(jnp.float32)
    mu = jnp.mean(xf, axis=-1, keepdims=True)
    var = jnp.mean((xf - mu) ** 2, axis=-1, keepdims=True)
    return (xf - mu) * jax.lax.rsqrt(var + eps) * g + b


def linear_e(x, w, b=None, act="none"):
    shp = x.shape
    out = matmul_bias_act(x.reshape(-1, shp[-1]), w, b, act)
    return out.reshape(shp[:-1] + (w.shape[1],))


def conv1d(x, w, b=None):
    """x: (B, L, Cin); w: (k*Cin, Cout) pre-flattened; stride 1, 'same' pad."""
    B, L, Cin = x.shape
    CK, Cout = w.shape
    k = CK // Cin
    if k == 1:
        cols = x.reshape(B * L, Cin)
    else:
        pad = (k - 1) // 2
        xp = jnp.pad(x, ((0, 0), (pad, pad), (0, 0)))
        cols = jnp.concatenate([xp[:, i:i + L, :] for i in range(k)], axis=-1)
        cols = cols.reshape(B * L, k * Cin)
    return matmul_bias_act(cols, w, b).reshape(B, L, Cout)


def conv2d(x, w, b=None):
    """x: (B, H, W, Cin); w: (kh*kw*Cin, Cout) pre-flattened; 'same' pad."""
    B, H, W, Cin = x.shape
    CK, Cout = w.shape
    kk = CK // Cin
    if kk == 1:
        cols = x.reshape(B * H * W, Cin)
    else:
        kh = kw = int(round(math.sqrt(kk)))
        ph, pw = (kh - 1) // 2, (kw - 1) // 2
        xp = jnp.pad(x, ((0, 0), (ph, ph), (pw, pw), (0, 0)))
        cols = jnp.concatenate(
            [xp[:, di:di + H, dj:dj + W, :]
             for di in range(kh) for dj in range(kw)], axis=-1)
        cols = cols.reshape(B * H * W, kh * kw * Cin)
    return matmul_bias_act(cols, w, b).reshape(B, H, W, Cout)


def maxpool1d(x, k):
    B, L, C = x.shape
    return x.reshape(B, L // k, k, C).max(axis=2)


def maxpool2d(x, k):
    B, H, W, C = x.shape
    return x.reshape(B, H // k, k, W // k, k, C).max(axis=(2, 4))


def upsample1d(x, s):
    return jnp.repeat(x, s, axis=1)


def upsample2d(x, s):
    return jnp.repeat(jnp.repeat(x, s, axis=1), s, axis=2)


def pos_encoding(t, channels):
    inv_freq = 1.0 / (10000.0 ** (jnp.arange(0, channels, 2,
                                              dtype=jnp.float32) / channels))
    arg = t * inv_freq[None, :]
    return jnp.concatenate([jnp.sin(arg), jnp.cos(arg)], axis=-1)


# --------------------------------------------------------------------------
# Module blocks (channels-last activations)
# --------------------------------------------------------------------------
def double_conv(p, x, conv, residual=False):
    h = conv(x, p['w1'])
    h = group_norm1(h, p['g1'], p['b1'])
    h = gelu(h)
    h = conv(h, p['w2'])
    h = group_norm1(h, p['g2'], p['b2'])
    if residual:
        return gelu(x.astype(jnp.float32) + h)
    return h


def _add_emb(x, emb):
    emb = emb.reshape((emb.shape[0],) + (1,) * (x.ndim - 2) + (emb.shape[-1],))
    return x + emb


def down_block(p, x, emb_act, dim, rate):
    if dim == 1:
        x = maxpool1d(x, rate); conv = conv1d
    else:
        x = maxpool2d(x, rate); conv = conv2d
    x = double_conv(p['dc1'], x, conv, residual=True)
    x = double_conv(p['dc2'], x, conv, residual=False)
    if emb_act is not None:
        emb = linear_e(emb_act, p['emb_w'], p['emb_b'])
        x = _add_emb(x, emb)
    return x


def up_block(p, x, skip, emb_act, dim, scale):
    if dim == 1:
        x = upsample1d(x, scale); conv = conv1d
    else:
        x = upsample2d(x, scale); conv = conv2d
    x = jnp.concatenate([skip.astype(jnp.float32), x.astype(jnp.float32)],
                        axis=-1)
    x = double_conv(p['dc1'], x, conv, residual=True)
    x = double_conv(p['dc2'], x, conv, residual=False)
    if emb_act is not None:
        emb = linear_e(emb_act, p['emb_w'], p['emb_b'])
        x = _add_emb(x, emb)
    return x


def mha(p, q_in, kv_in, num_heads=4):
    """q_in: (B, Sq, C), kv_in: (B, Skv, C). Fused QKV when q_in is kv_in."""
    B, Sq, C = q_in.shape
    Skv = kv_in.shape[1]
    hd = C // num_heads
    if q_in is kv_in:
        qkv = linear_e(q_in, p['in_w'], p['in_b'])             # (B, Sq, 3C)
        qp, kp, vp = qkv[..., :C], qkv[..., C:2 * C], qkv[..., 2 * C:]
    else:
        qp = linear_e(q_in, p['in_w'][:, :C], p['in_b'][:C])
        kv = linear_e(kv_in, p['in_w'][:, C:], p['in_b'][C:])  # fused K+V GEMM
        kp, vp = kv[..., :C], kv[..., C:]

    def split(t, S):
        return (t.reshape(B, S, num_heads, hd)
                 .transpose(0, 2, 1, 3)
                 .reshape(B * num_heads, S, hd))

    scale = 1.0 / math.sqrt(hd)
    o = pallas_attention(split(qp, Sq) * scale, split(kp, Skv), split(vp, Skv))
    o = (o.reshape(B, num_heads, Sq, hd)
          .transpose(0, 2, 1, 3)
          .reshape(B, Sq, C))
    return linear_e(o, p['out_w'], p['out_b'])


def _attn_tail(p, att):
    ff = layer_norm(att, p['ff_ln_g'], p['ff_ln_b'])
    ff = linear_e(ff, p['ff_w1'], p['ff_b1'], act="gelu")
    ff = linear_e(ff, p['ff_w2'], p['ff_b2'])
    return ff + att


def self_attention(p, x):
    # x: (B, S, C) channels-last — no transposes needed.
    x = x.astype(jnp.float32)
    x_ln = layer_norm(x, p['ln_g'], p['ln_b'])
    att = mha(p, x_ln, x_ln) + x
    return _attn_tail(p, att)


def cross_attention(p, q, kv):
    # q: (B, Sq, C), kv: (B, Skv, C) (reference always uses k == v)
    # TODO(synk): single LayerNorm shared by query and key/value streams
    # (CrossAttention module definition not provided in the reference).
    q = q.astype(jnp.float32)
    kv = kv.astype(jnp.float32)
    q_ln = layer_norm(q, p['ln_g'], p['ln_b'])
    kv_ln = layer_norm(kv, p['ln_g'], p['ln_b'])
    att = mha(p, q_ln, kv_ln) + q
    return _attn_tail(p, att)


# --------------------------------------------------------------------------
# Deterministic parameter init (weights stored pre-flattened/transposed, bf16)
# --------------------------------------------------------------------------
class ParamGen:
    def __init__(self, seed=0):
        self.key = jax.random.PRNGKey(seed)

    def take(self, shape, scale=0.05):
        self.key, sub = jax.random.split(self.key)
        return jax.random.normal(sub, shape, jnp.float32) * scale

    def take_w(self, shape, scale=0.05):
        return self.take(shape, scale).astype(jnp.bfloat16)


def init_double_conv(pg, cin, cout, mid=None, dim=2):
    mid = mid or cout
    k = 9 if dim == 2 else 3
    return dict(w1=pg.take_w((cin * k, mid)),
                g1=jnp.ones((mid,)), b1=jnp.zeros((mid,)),
                w2=pg.take_w((mid * k, cout)),
                g2=jnp.ones((cout,)), b2=jnp.zeros((cout,)))


def init_down(pg, cin, cout, emb_dim, dim=1):
    return dict(dc1=init_double_conv(pg, cin, cin, dim=dim),
                dc2=init_double_conv(pg, cin, cout, dim=dim),
                emb_w=pg.take_w((emb_dim, cout)), emb_b=jnp.zeros((cout,)))


def init_up(pg, cin, cout, emb_dim, dim=1):
    return dict(dc1=init_double_conv(pg, cin, cin, dim=dim),
                dc2=init_double_conv(pg, cin, cout, mid=cin // 2, dim=dim),
                emb_w=pg.take_w((emb_dim, cout)), emb_b=jnp.zeros((cout,)))


def init_attention(pg, c):
    return dict(ln_g=jnp.ones((c,)), ln_b=jnp.zeros((c,)),
                in_w=pg.take_w((c, 3 * c)), in_b=jnp.zeros((3 * c,)),
                out_w=pg.take_w((c, c)), out_b=jnp.zeros((c,)),
                ff_ln_g=jnp.ones((c,)), ff_ln_b=jnp.zeros((c,)),
                ff_w1=pg.take_w((c, c)), ff_b1=jnp.zeros((c,)),
                ff_w2=pg.take_w((c, c)), ff_b2=jnp.zeros((c,)))


def init_model(pg, in_ch, out_ch, max_input_dim, transition_dim, time_dim=128):
    del max_input_dim  # only affects activation sizes, not parameter shapes
    P = {}
    P['transition_matrix'] = pg.take(
        (1, in_ch + 1, transition_dim, transition_dim), scale=1.0)
    # x branch (1D)
    P['inc'] = init_double_conv(pg, in_ch, 64, dim=1)
    P['down1'] = init_down(pg, 64, 128, time_dim, 1)
    P['sa1'] = init_attention(pg, 128)
    P['down2'] = init_down(pg, 128, 256, time_dim, 1)
    P['sa2'] = init_attention(pg, 256)
    P['down3'] = init_down(pg, 256, 256, time_dim, 1)
    P['sa3'] = init_attention(pg, 256)
    P['bot1'] = init_double_conv(pg, 256, 512, dim=1)
    P['bot2'] = init_double_conv(pg, 512, 512, dim=1)
    P['bot3'] = init_double_conv(pg, 512, 256, dim=1)
    P['up1'] = init_up(pg, 512, 128, time_dim, 1)
    P['sa4'] = init_attention(pg, 128)
    P['up2'] = init_up(pg, 256, 64, time_dim, 1)
    P['sa5'] = init_attention(pg, 64)
    P['up3'] = init_up(pg, 128, 64, time_dim, 1)
    P['sa6'] = init_attention(pg, 64)
    # m branch (2D)
    P['inc_mat'] = init_double_conv(pg, in_ch + 1, 64, dim=2)
    P['down1_mat'] = init_down(pg, 64, 128, time_dim, 2)
    P['sa1_mat'] = init_attention(pg, 128)
    P['down2_mat'] = init_down(pg, 128, 256, time_dim, 2)
    P['sa2_mat'] = init_attention(pg, 256)
    P['down3_mat'] = init_down(pg, 256, 256, time_dim, 2)
    P['sa3_mat'] = init_attention(pg, 256)
    P['bot1_mat'] = init_double_conv(pg, 256, 512, dim=2)
    P['bot2_mat'] = init_double_conv(pg, 512, 512, dim=2)
    P['bot3_mat'] = init_double_conv(pg, 512, 256, dim=2)
    P['up1_mat'] = init_up(pg, 512, 128, time_dim, 2)
    P['sa4_mat'] = init_attention(pg, 128)
    P['up2_mat'] = init_up(pg, 256, 64, time_dim, 2)
    P['sa5_mat'] = init_attention(pg, 64)
    P['up3_mat'] = init_up(pg, 128, 64, time_dim, 2)
    # cross-attention (only the ones used by the unconditional path)
    P['cams1'] = init_attention(pg, 128)
    P['cams2'] = init_attention(pg, 256)
    P['cams3'] = init_attention(pg, 256)
    P['cams4'] = init_attention(pg, 128)
    P['cams5'] = init_attention(pg, 64)
    P['casm1'] = init_attention(pg, 128)
    P['casm2'] = init_attention(pg, 256)
    P['casm3'] = init_attention(pg, 256)
    P['casm4'] = init_attention(pg, 128)
    P['casm5'] = init_attention(pg, 64)
    # output heads (1x1 convs), weights pre-flattened (Cin, Cout)
    P['outc'] = dict(w=pg.take_w((64, out_ch)), b=jnp.zeros((out_ch,)))
    P['outc_mat'] = dict(w=pg.take_w((64, out_ch + 1)),
                         b=jnp.zeros((out_ch + 1,)))
    return P


# --------------------------------------------------------------------------
# Full forward (unconditional path, y=None) — one jax.jit
# --------------------------------------------------------------------------
def forward_uncond(P, x, t, transition_dim, time_dim=128):
    T = transition_dim
    t = t[:, None].astype(jnp.float32)
    emb_act = silu(pos_encoding(t, time_dim))   # SiLU(t) computed once

    # channels-last layouts
    x = jnp.transpose(x, (0, 2, 1))                               # (B, L, Cin)
    m = jnp.transpose(P['transition_matrix'], (0, 2, 3, 1))       # (1, T, T, C)

    x1 = double_conv(P['inc'], x, conv1d)
    m1 = double_conv(P['inc_mat'], m, conv2d)

    x2 = down_block(P['down1'], x1, emb_act, 1, 2)
    x2 = self_attention(P['sa1'], x2)
    m2 = down_block(P['down1_mat'], m1, None, 2, 8)   # original: no t for down*_mat
    C2 = m2.shape[-1]
    m2 = m2.reshape(1, -1, C2)
    m2 = self_attention(P['sa1_mat'], m2)
    m2_ca = cross_attention(P['cams1'], m2, x2).reshape(1, T // 8, T // 8, C2)
    x2_ca = cross_attention(P['casm1'], x2, m2)

    x3 = down_block(P['down2'], x2_ca, emb_act, 1, 2)
    x3 = self_attention(P['sa2'], x3)
    m3 = down_block(P['down2_mat'], m2_ca, None, 2, 2)
    C3 = m3.shape[-1]
    m3 = m3.reshape(1, -1, C3)
    m3 = self_attention(P['sa2_mat'], m3)
    m3_ca = cross_attention(P['cams2'], m3, x3).reshape(1, T // 16, T // 16, C3)
    x3_ca = cross_attention(P['casm2'], x3, m3)

    x4 = down_block(P['down3'], x3_ca, emb_act, 1, 2)
    x4 = self_attention(P['sa3'], x4)
    # TODO(synk): original uses self.down2_mat here (channel-mismatch bug); using down3_mat.
    m4 = down_block(P['down3_mat'], m3_ca, None, 2, 2)
    C4 = m4.shape[-1]
    m4 = m4.reshape(1, -1, C4)
    m4 = self_attention(P['sa3_mat'], m4)
    m4_ca = cross_attention(P['cams3'], m4, x4).reshape(1, T // 32, T // 32, C4)
    x4_ca = cross_attention(P['casm3'], x4, m4)

    x4 = double_conv(P['bot1'], x4_ca, conv1d)
    x4 = double_conv(P['bot2'], x4, conv1d)
    x4 = double_conv(P['bot3'], x4, conv1d)
    m4 = double_conv(P['bot1_mat'], m4_ca, conv2d)
    m4 = double_conv(P['bot2_mat'], m4, conv2d)
    m4 = double_conv(P['bot3_mat'], m4, conv2d)

    xu = up_block(P['up1'], x4, x3_ca, emb_act, 1, 2)
    xu = self_attention(P['sa4'], xu)
    mu = up_block(P['up1_mat'], m4, m3_ca, emb_act, 2, 2)
    Cu = mu.shape[-1]
    mu = mu.reshape(1, -1, Cu)
    mu = self_attention(P['sa4_mat'], mu)
    m_ca = cross_attention(P['cams4'], mu, xu).reshape(1, T // 16, T // 16, Cu)
    x_ca = cross_attention(P['casm4'], xu, mu)

    x_next = up_block(P['up2'], x_ca, x2_ca, emb_act, 1, 2)
    x_next = self_attention(P['sa5'], x_next)
    m_next = up_block(P['up2_mat'], m_ca, m2_ca, emb_act, 2, 2)
    Cn = m_next.shape[-1]
    m_next = m_next.reshape(1, -1, Cn)
    m_next = self_attention(P['sa5_mat'], m_next)
    # TODO(synk): original uses cams4/casm4 here (128-ch attention on 64-ch tensors); using cams5/casm5.
    m_next_ca = cross_attention(P['cams5'], m_next, x_next).reshape(
        1, T // 8, T // 8, Cn)
    x_next_ca = cross_attention(P['casm5'], x_next, m_next)

    xo = up_block(P['up3'], x_next_ca, x1, emb_act, 1, 2)
    xo = self_attention(P['sa6'], xo)
    mo = up_block(P['up3_mat'], m_next_ca, m1, emb_act, 2, 8)
    mo = conv2d(mo, P['outc_mat']['w'], P['outc_mat']['b'])
    xo = conv1d(xo, P['outc']['w'], P['outc']['b'])

    # back to the reference (channels-first) output layout
    xo = jnp.transpose(xo, (0, 2, 1)).astype(jnp.float32)
    mo = jnp.transpose(mo, (0, 3, 1, 2)).astype(jnp.float32)
    return xo, mo


# --------------------------------------------------------------------------
if __name__ == "__main__":
    in_ch, out_ch = 4, 4
    max_input_dim = 16      # sequence length L (divisible by 8)
    transition_dim = 32     # matrix side T (divisible by 32)
    time_dim = 128
    batch = 1               # uncond path needs matching q/kv batch in cross-attn

    pg = ParamGen(seed=0)
    params = init_model(pg, in_ch, out_ch, max_input_dim, transition_dim,
                        time_dim)

    key = jax.random.PRNGKey(0)
    kx, kt = jax.random.split(key)
    x = jax.random.normal(kx, (batch, in_ch, max_input_dim), jnp.float32)
    t = jnp.array([10.0], dtype=jnp.float32)

    fwd = jax.jit(functools.partial(forward_uncond,
                                    transition_dim=transition_dim,
                                    time_dim=time_dim))
    xo, mo = fwd(params, x, t)
    xo, mo = jax.block_until_ready((xo, mo))

    assert xo.shape == (batch, out_ch, max_input_dim), xo.shape
    assert mo.shape == (1, out_ch + 1, transition_dim, transition_dim), mo.shape
    assert jnp.all(jnp.isfinite(xo)) and jnp.all(jnp.isfinite(mo))
    print("KERNEL_OK")
</pallas_src>

<mosaic_0001>
module attributes {stable_mosaic.version = 11 : i64} {
  func.func @_mm_kernel(%arg0: i32, %arg1: i32, %arg2: memref<256x128xbf16, #tpu.memory_space<vmem>>, %arg3: memref<128x128xbf16, #tpu.memory_space<vmem>>, %arg4: memref<1x128xf32, #tpu.memory_space<vmem>>, %arg5: memref<256x128xbf16, #tpu.memory_space<vmem>>) attributes {dimension_semantics = [#tpu.dimension_semantics<parallel>, #tpu.dimension_semantics<parallel>], iteration_bounds = array<i64: 4, 1>, scalar_prefetch = 0 : i64, scratch_operands = 0 : i64, tpu.core_type = #tpu.core_type<tc>, window_params = [{transform_indices = @transform_0, window_bounds = array<i64: 256, 128>}, {transform_indices = @transform_1, window_bounds = array<i64: 128, 128>}, {transform_indices = @transform_2, window_bounds = array<i64: 1, 128>}, {transform_indices = @transform_3, window_bounds = array<i64: 256, 128>}]} {
    %c0 = arith.constant 0 : index
    %c0_0 = arith.constant 0 : index
    %0 = vector.load %arg2[%c0, %c0_0] : memref<256x128xbf16, #tpu.memory_space<vmem>>, vector<256x128xbf16>
    %c0_1 = arith.constant 0 : index
    %c0_2 = arith.constant 0 : index
    %1 = vector.load %arg3[%c0_1, %c0_2] : memref<128x128xbf16, #tpu.memory_space<vmem>>, vector<128x128xbf16>
    %cst = arith.constant dense<0.000000e+00> : vector<256x128xf32>
    %2 = tpu.matmul %0, %1, %cst {dimension_numbers = #tpu.dot_dimension_numbers<[1], [0], [0], [1], [0, 0, 1, 1], [], []>} : vector<256x128xbf16>, vector<128x128xbf16>, vector<256x128xf32> -> vector<256x128xf32>
    %c0_3 = arith.constant 0 : index
    %c0_4 = arith.constant 0 : index
    %3 = vector.load %arg4[%c0_3, %c0_4] : memref<1x128xf32, #tpu.memory_space<vmem>>, vector<1x128xf32>
    %4 = vector.broadcast %3 : vector<1x128xf32> to vector<256x128xf32>
    %5 = arith.addf %2, %4 : vector<256x128xf32>
    %6 = arith.truncf %5 : vector<256x128xf32> to vector<256x128xbf16>
    %c0_5 = arith.constant 0 : index
    %c0_6 = arith.constant 0 : index
    %7 = vector.load %arg5[%c0_5, %c0_6] : memref<256x128xbf16, #tpu.memory_space<vmem>>, vector<256x128xbf16>
    tpu.vector_store %arg5[%c0_5, %c0_6], %6 {strides = array<i32>} : memref<256x128xbf16, #tpu.memory_space<vmem>>, vector<256x128xbf16>,
    return
  }
  func.func @transform_0(%arg0: i32, %arg1: i32) -> (i32, i32) {
    %c0_i32 = arith.constant 0 : i32
    %c0_i32_0 = arith.constant 0 : i32
    return %arg0, %c0_i32 : i32, i32
  }
  func.func @transform_1(%arg0: i32, %arg1: i32) -> (i32, i32) {
    %c0_i32 = arith.constant 0 : i32
    %c0_i32_0 = arith.constant 0 : i32
    return %c0_i32, %arg1 : i32, i32
  }
  func.func @transform_2(%arg0: i32, %arg1: i32) -> (i32, i32) {
    %c0_i32 = arith.constant 0 : i32
    %c0_i32_0 = arith.constant 0 : i32
    return %c0_i32, %arg1 : i32, i32
  }
  func.func @transform_3(%arg0: i32, %arg1: i32) -> (i32, i32) {
    %c0_i32 = arith.constant 0 : i32
    return %arg0, %arg1 : i32, i32
  }
}

module attributes {stable_mosaic.version = 11 : i64} {
  func.func @_mm_kernel(%arg0: i32, %arg1: i32, %arg2: memref<256x640xbf16, #tpu.memory_space<vmem>>, %arg3: memref<640x128xbf16, #tpu.memory_space<vmem>>, %arg4: memref<1x128xf32, #tpu.memory_space<vmem>>, %arg5: memref<256x128xbf16, #tpu.memory_space<vmem>>) attributes {dimension_semantics = [#tpu.dimension_semantics<parallel>, #tpu.dimension_semantics<parallel>], iteration_bounds = array<i64: 4, 1>, scalar_prefetch = 0 : i64, scratch_operands = 0 : i64, tpu.core_type = #tpu.core_type<tc>, window_params = [{transform_indices = @transform_0, window_bounds = array<i64: 256, 640>}, {transform_indices = @transform_1, window_bounds = array<i64: 640, 128>}, {transform_indices = @transform_2, window_bounds = array<i64: 1, 128>}, {transform_indices = @transform_3, window_bounds = array<i64: 256, 128>}]} {
    %c0 = arith.constant 0 : index
    %c0_0 = arith.constant 0 : index
    %0 = vector.load %arg2[%c0, %c0_0] : memref<256x640xbf16, #tpu.memory_space<vmem>>, vector<256x640xbf16>
    %c0_1 = arith.constant 0 : index
    %c0_2 = arith.constant 0 : index
    %1 = vector.load %arg3[%c0_1, %c0_2] : memref<640x128xbf16, #tpu.memory_space<vmem>>, vector<640x128xbf16>
    %cst = arith.constant dense<0.000000e+00> : vector<256x128xf32>
    %2 = tpu.matmul %0, %1, %cst {dimension_numbers = #tpu.dot_dimension_numbers<[1], [0], [0], [1], [0, 0, 1, 1], [], []>} : vector<256x640xbf16>, vector<640x128xbf16>, vector<256x128xf32> -> vector<256x128xf32>
    %c0_3 = arith.constant 0 : index
    %c0_4 = arith.constant 0 : index
    %3 = vector.load %arg4[%c0_3, %c0_4] : memref<1x128xf32, #tpu.memory_space<vmem>>, vector<1x128xf32>
    %4 = vector.broadcast %3 : vector<1x128xf32> to vector<256x128xf32>
    %5 = arith.addf %2, %4 : vector<256x128xf32>
    %6 = arith.truncf %5 : vector<256x128xf32> to vector<256x128xbf16>
    %c0_5 = arith.constant 0 : index
    %c0_6 = arith.constant 0 : index
    %7 = vector.load %arg5[%c0_5, %c0_6] : memref<256x128xbf16, #tpu.memory_space<vmem>>, vector<256x128xbf16>
    tpu.vector_store %arg5[%c0_5, %c0_6], %6 {strides = array<i32>} : memref<256x128xbf16, #tpu.memory_space<vmem>>, vector<256x128xbf16>,
    return
  }
  func.func @transform_0(%arg0: i32, %arg1: i32) -> (i32, i32) {
    %c0_i32 = arith.constant 0 : i32
    %c0_i32_0 = arith.constant 0 : i32
    return %arg0, %c0_i32 : i32, i32
  }
  func.func @transform_1(%arg0: i32, %arg1: i32) -> (i32, i32) {
    %c0_i32 = arith.constant 0 : i32
    %c0_i32_0 = arith.constant 0 : i32
    return %c0_i32, %arg1 : i32, i32
  }
  func.func @transform_2(%arg0: i32, %arg1: i32) -> (i32, i32) {
    %c0_i32 = arith.constant 0 : i32
    %c0_i32_0 = arith.constant 0 : i32
    return %c0_i32, %arg1 : i32, i32
  }
  func.func @transform_3(%arg0: i32, %arg1: i32) -> (i32, i32) {
    %c0_i32 = arith.constant 0 : i32
    return %arg0, %arg1 : i32, i32
  }
}

module attributes {stable_mosaic.version = 11 : i64} {
  func.func @_attn_kernel(%arg0: i32, %arg1: memref<1xi32, #tpu.memory_space<smem>>, %arg2: memref<1x16x128xbf16, #tpu.memory_space<vmem>>, %arg3: memref<1x16x128xbf16, #tpu.memory_space<vmem>>, %arg4: memref<1x16x128xbf16, #tpu.memory_space<vmem>>, %arg5: memref<1x16x128xf32, #tpu.memory_space<vmem>>) attributes {dimension_semantics = [#tpu.dimension_semantics<parallel>], iteration_bounds = array<i64: 4>, scalar_prefetch = 1 : i64, scratch_operands = 0 : i64, tpu.core_type = #tpu.core_type<tc>, window_params = [{transform_indices = @transform_0, window_bounds = array<i64: 1, 16, 128>}, {transform_indices = @transform_1, window_bounds = array<i64: 1, 16, 128>}, {transform_indices = @transform_2, window_bounds = array<i64: 1, 16, 128>}, {transform_indices = @transform_3, window_bounds = array<i64: 1, 16, 128>}]} {
    %c0 = arith.constant 0 : index
    %c0_0 = arith.constant 0 : index
    %c0_1 = arith.constant 0 : index
    %0 = vector.load %arg2[%c0, %c0_0, %c0_1] : memref<1x16x128xbf16, #tpu.memory_space<vmem>>, vector<1x16x128xbf16>
    %1 = vector.shape_cast %0 : vector<1x16x128xbf16> to vector<16x128xbf16>
    %c0_2 = arith.constant 0 : index
    %c0_3 = arith.constant 0 : index
    %c0_4 = arith.constant 0 : index
    %2 = vector.load %arg3[%c0_2, %c0_3, %c0_4] : memref<1x16x128xbf16, #tpu.memory_space<vmem>>, vector<1x16x128xbf16>
    %3 = vector.shape_cast %2 : vector<1x16x128xbf16> to vector<16x128xbf16>
    %c0_5 = arith.constant 0 : index
    %c0_6 = arith.constant 0 : index
    %c0_7 = arith.constant 0 : index
    %4 = vector.load %arg4[%c0_5, %c0_6, %c0_7] : memref<1x16x128xbf16, #tpu.memory_space<vmem>>, vector<1x16x128xbf16>
    %5 = vector.shape_cast %4 : vector<1x16x128xbf16> to vector<16x128xbf16>
    %cst = arith.constant dense<0.000000e+00> : vector<16x16xf32>
    %6 = tpu.matmul %1, %3, %cst {dimension_numbers = #tpu.dot_dimension_numbers<[1], [1], [0], [0], [0, 0, 1, 0], [], []>} : vector<16x128xbf16>, vector<16x128xbf16>, vector<16x16xf32> -> vector<16x16xf32>
    %7 = tpu.iota {dimensions = array<i32: 1>} : vector<16x16xi32>
    %c0_8 = arith.constant 0 : index
    %8 = memref.load %arg1[%c0_8] : memref<1xi32, #tpu.memory_space<smem>>
    %9 = vector.broadcast %8 : i32 to vector<16x16xi32>
    %10 = arith.cmpi slt, %7, %9 : vector<16x16xi32>
    %cst_9 = arith.constant -1.000000e+30 : f32
    %11 = vector.broadcast %cst_9 : f32 to vector<16x16xf32>
    %12 = arith.select %10, %6, %11 : vector<16x16xi1>, vector<16x16xf32>
    %cst_10 = arith.constant dense<0xFF800000> : vector<16xf32>
    %13 = vector.multi_reduction <maximumf>, %12, %cst_10 [1] : vector<16x16xf32> to vector<16xf32>
    %14 = vector.shape_cast %13 : vector<16xf32> to vector<16x1xf32>
    %15 = vector.broadcast %14 : vector<16x1xf32> to vector<16x16xf32>
    %16 = arith.subf %12, %15 : vector<16x16xf32>
    %17 = math.exp %16 : vector<16x16xf32>
    %cst_11 = arith.constant dense<0.000000e+00> : vector<16xf32>
    %18 = vector.multi_reduction <add>, %17, %cst_11 [1] : vector<16x16xf32> to vector<16xf32>
    %19 = vector.shape_cast %18 : vector<16xf32> to vector<16x1xf32>
    %20 = arith.truncf %17 : vector<16x16xf32> to vector<16x16xbf16>
    %cst_12 = arith.constant dense<0.000000e+00> : vector<16x128xf32>
    %21 = tpu.matmul %20, %5, %cst_12 {dimension_numbers = #tpu.dot_dimension_numbers<[1], [0], [0], [1], [0, 0, 1, 1], [], []>} : vector<16x16xbf16>, vector<16x128xbf16>, vector<16x128xf32> -> vector<16x128xf32>
    %22 = tpu.reciprocal %19 {approx = true} : vector<16x1xf32> -> vector<16x1xf32>
    %23 = vector.broadcast %22 : vector<16x1xf32> to vector<16x128xf32>
    %24 = arith.mulf %21, %23 : vector<16x128xf32>
    %c0_13 = arith.constant 0 : index
    %c0_14 = arith.constant 0 : index
    %c0_15 = arith.constant 0 : index
    %25 = vector.load %arg5[%c0_13, %c0_14, %c0_15] : memref<1x16x128xf32, #tpu.memory_space<vmem>>, vector<1x16x128xf32>
    %26 = vector.shape_cast %25 : vector<1x16x128xf32> to vector<16x128xf32>
    %27 = vector.shape_cast %24 : vector<16x128xf32> to vector<1x16x128xf32>
    tpu.vector_store %arg5[%c0_13, %c0_14, %c0_15], %27 {strides = array<i32>} : memref<1x16x128xf32, #tpu.memory_space<vmem>>, vector<1x16x128xf32>,
    return
  }
  func.func @transform_0(%arg0: i32, %arg1: memref<1xi32, #tpu.memory_space<smem>>) -> (i32, i32, i32) {
    %c0_i32 = arith.constant 0 : i32
    %c0_i32_0 = arith.constant 0 : i32
    %c0_i32_1 = arith.constant 0 : i32
    return %arg0, %c0_i32, %c0_i32_0 : i32, i32, i32
  }
  func.func @transform_1(%arg0: i32, %arg1: memref<1xi32, #tpu.memory_space<smem>>) -> (i32, i32, i32) {
    %c0_i32 = arith.constant 0 : i32
    %c0_i32_0 = arith.constant 0 : i32
    %c0_i32_1 = arith.constant 0 : i32
    return %arg0, %c0_i32, %c0_i32_0 : i32, i32, i32
  }
  func.func @transform_2(%arg0: i32, %arg1: memref<1xi32, #tpu.memory_space<smem>>) -> (i32, i32, i32) {
    %c0_i32 = arith.constant 0 : i32
    %c0_i32_0 = arith.constant 0 : i32
    %c0_i32_1 = arith.constant 0 : i32
    return %arg0, %c0_i32, %c0_i32_0 : i32, i32, i32
  }
  func.func @transform_3(%arg0: i32, %arg1: memref<1xi32, #tpu.memory_space<smem>>) -> (i32, i32, i32) {
    %c0_i32 = arith.constant 0 : i32
    %c0_i32_0 = arith.constant 0 : i32
    %c0_i32_1 = arith.constant 0 : i32
    return %arg0, %c0_i32, %c0_i32_0 : i32, i32, i32
  }
}

module attributes {stable_mosaic.version = 11 : i64} {
  func.func @_mm_kernel(%arg0: i32, %arg1: i32, %arg2: memref<256x1152xbf16, #tpu.memory_space<vmem>>, %arg3: memref<1152x128xbf16, #tpu.memory_space<vmem>>, %arg4: memref<1x128xf32, #tpu.memory_space<vmem>>, %arg5: memref<256x128xbf16, #tpu.memory_space<vmem>>) attributes {dimension_semantics = [#tpu.dimension_semantics<parallel>, #tpu.dimension_semantics<parallel>], iteration_bounds = array<i64: 4, 1>, scalar_prefetch = 0 : i64, scratch_operands = 0 : i64, tpu.core_type = #tpu.core_type<tc>, window_params = [{transform_indices = @transform_0, window_bounds = array<i64: 256, 1152>}, {transform_indices = @transform_1, window_bounds = array<i64: 1152, 128>}, {transform_indices = @transform_2, window_bounds = array<i64: 1, 128>}, {transform_indices = @transform_3, window_bounds = array<i64: 256, 128>}]} {
    %c0 = arith.constant 0 : index
    %c0_0 = arith.constant 0 : index
    %0 = vector.load %arg2[%c0, %c0_0] : memref<256x1152xbf16, #tpu.memory_space<vmem>>, vector<256x1152xbf16>
    %c0_1 = arith.constant 0 : index
    %c0_2 = arith.constant 0 : index
    %1 = vector.load %arg3[%c0_1, %c0_2] : memref<1152x128xbf16, #tpu.memory_space<vmem>>, vector<1152x128xbf16>
    %cst = arith.constant dense<0.000000e+00> : vector<256x128xf32>
    %2 = tpu.matmul %0, %1, %cst {dimension_numbers = #tpu.dot_dimension_numbers<[1], [0], [0], [1], [0, 0, 1, 1], [], []>} : vector<256x1152xbf16>, vector<1152x128xbf16>, vector<256x128xf32> -> vector<256x128xf32>
    %c0_3 = arith.constant 0 : index
    %c0_4 = arith.constant 0 : index
    %3 = vector.load %arg4[%c0_3, %c0_4] : memref<1x128xf32, #tpu.memory_space<vmem>>, vector<1x128xf32>
    %4 = vector.broadcast %3 : vector<1x128xf32> to vector<256x128xf32>
    %5 = arith.addf %2, %4 : vector<256x128xf32>
    %6 = arith.truncf %5 : vector<256x128xf32> to vector<256x128xbf16>
    %c0_5 = arith.constant 0 : index
    %c0_6 = arith.constant 0 : index
    %7 = vector.load %arg5[%c0_5, %c0_6] : memref<256x128xbf16, #tpu.memory_space<vmem>>, vector<256x128xbf16>
    tpu.vector_store %arg5[%c0_5, %c0_6], %6 {strides = array<i32>} : memref<256x128xbf16, #tpu.memory_space<vmem>>, vector<256x128xbf16>,
    return
  }
  func.func @transform_0(%arg0: i32, %arg1: i32) -> (i32, i32) {
    %c0_i32 = arith.constant 0 : i32
    %c0_i32_0 = arith.constant 0 : i32
    return %arg0, %c0_i32 : i32, i32
  }
  func.func @transform_1(%arg0: i32, %arg1: i32) -> (i32, i32) {
    %c0_i32 = arith.constant 0 : i32
    %c0_i32_0 = arith.constant 0 : i32
    return %c0_i32, %arg1 : i32, i32
  }
  func.func @transform_2(%arg0: i32, %arg1: i32) -> (i32, i32) {
    %c0_i32 = arith.constant 0 : i32
    %c0_i32_0 = arith.constant 0 : i32
    return %c0_i32, %arg1 : i32, i32
  }
  func.func @transform_3(%arg0: i32, %arg1: i32) -> (i32, i32) {
    %c0_i32 = arith.constant 0 : i32
    return %arg0, %arg1 : i32, i32
  }
}

</mosaic_0001>

<llo_original>
// kernel: forward_uncond.28
$region0: #{forward_uncond.28}
  #allocation0 [shape = 'u32[]', space=smem, size = 0x4, offset = 0x4, fixed_abs, tag = 'smem constant byte address 0x4 - core index']
  #allocation1 [shape = 'u32[144,128]{1,0:T(1,128)}', space=vmem, size = 0x12000, scoped, tag = 'internal scratch']
  %s0 = inlined_call_operand.vmem [shape: bf16[1024,128], index: 0, kind: input, shape index: {}]
  %s1 = inlined_call_operand.vmem [shape: bf16[128,128], index: 1, kind: input, shape index: {}]
  %s2 = inlined_call_operand.vmem [shape: f32[1,128], index: 2, kind: input, shape index: {}]
  %s3 = inlined_call_operand.vmem [shape: bf16[1024,128], index: 3, kind: output, shape index: {}]
  %s4 = sld [smem:[#allocation0]]
  $region45: #{forward_uncond.28} parent=0
    _
  %s6 = ssub.s32 1, %s4
  %s7 = scalar_select 0, %s6, %s4
  loop: start=0, step=1, limit=6
  $region2: #{forward_uncond.28} parent=0 // loop_pre_header
    _
  $region3: #{forward_uncond.28} parent=0 // loop_header
    %s9 = sphi 0, %s13
    %p10 = scmp.ge.s32.totalorder %s9, 6
    %s16 = sphi 0, %s28
    %s17 = sphi 0, %s24
    %s18 = sphi 0, %s16
    %s19 = sphi 0, %s17
    %s20 = sphi 0, %s18
    %s21 = sphi 0, %s19
    %s31 = sphi 0, %s33
    %s34 = sphi 0, %s31
    %s35 = sphi 0, %s34
    %s51 = sphi 0, %s35
    %s57 = sphi 0, %s59
    %s60 = sphi 0, %s57
    %s61 = sphi 0, %s60
    %s77 = sphi 0, %s61
    %s83 = sphi 0, %s85
    %s86 = sphi 0, %s83
    %s87 = sphi 0, %s86
    %s103 = sphi 0, %s87
    %s111 = sphi 0, %s113
    %s114 = sphi 0, %s111
    %s115 = sphi 0, %s114
    %s131 = sphi 0, %s115
  $region4: #{forward_uncond.28} parent=0 // loop_header_branch
    %12 = sbr.rel (%p10) target = $region8
  $region5: #{forward_uncond.28} parent=0 // loop_body
    %s14 = ssub.s32 %s9, 1
    %s15 = ssub.s32 %s9, 2
    %s22 = sadd.s32 1, %s17
    %p23 = scmp.ge.s32.totalorder %s22, 1
    %s24 = scalar_select %p23, 0, %s22
    %s25 = sadd.s32 1, %s16
    %s26 = scalar_select %p23, %s25, %s16
    %p27 = scmp.ge.s32.totalorder %s26, 4
    %s28 = scalar_select %p27, 0, %s26
    %s29 = ssub.s32 %s16, %s28
    %p30 = scmp.eq.s32.totalorder %s29, 0
    %s32 = sadd.s32 %s31, 1
    %s33 = scalar_select %p30, %s31, %s32
    %p36 = pneg %p30
    %p37 = scmp.eq.s32.totalorder %s9, 3
    %p38 = por %p36, %p37
    %p39 = scmp.ne.s32.totalorder %s31, %s34
    %p40 = scmp.eq.s32.totalorder %s9, 0
    %p41 = por %p39, %p40
    %p42 = scmp.ne.s32.totalorder %s31, %s34
    %p43 = scmp.eq.s32.totalorder %s14, 3
    %p44 = por %p42, %p43
    %p45 = scmp.ne.s32.totalorder %s34, %s35
    %p46 = scmp.eq.s32.totalorder %s14, 0
    %p47 = por %p45, %p46
    %p48 = scmp.ne.s32.totalorder %s34, %s35
    %p49 = scmp.eq.s32.totalorder %s15, 3
    %p50 = por %p48, %p49
    %p52 = scmp.ne.s32.totalorder %s35, %s51
    %p53 = scmp.eq.s32.totalorder %s15, 0
    %p54 = por %p52, %p53
    %s55 = ssub.s32 %s17, %s24
    %p56 = scmp.eq.s32.totalorder %s55, 0
    %s58 = sadd.s32 %s57, 1
    %s59 = scalar_select %p56, %s57, %s58
    %p62 = pneg %p56
    %p63 = scmp.eq.s32.totalorder %s9, 3
    %p64 = por %p62, %p63
    %p65 = scmp.ne.s32.totalorder %s57, %s60
    %p66 = scmp.eq.s32.totalorder %s9, 0
    %p67 = por %p65, %p66
    %p68 = scmp.ne.s32.totalorder %s57, %s60
    %p69 = scmp.eq.s32.totalorder %s14, 3
    %p70 = por %p68, %p69
    %p71 = scmp.ne.s32.totalorder %s60, %s61
    %p72 = scmp.eq.s32.totalorder %s14, 0
    %p73 = por %p71, %p72
    %p74 = scmp.ne.s32.totalorder %s60, %s61
    %p75 = scmp.eq.s32.totalorder %s15, 3
    %p76 = por %p74, %p75
    %p78 = scmp.ne.s32.totalorder %s61, %s77
    %p79 = scmp.eq.s32.totalorder %s15, 0
    %p80 = por %p78, %p79
    %s81 = ssub.s32 %s17, %s24
    %p82 = scmp.eq.s32.totalorder %s81, 0
    %s84 = sadd.s32 %s83, 1
    %s85 = scalar_select %p82, %s83, %s84
    %p88 = pneg %p82
    %p89 = scmp.eq.s32.totalorder %s9, 3
    %p90 = por %p88, %p89
    %p91 = scmp.ne.s32.totalorder %s83, %s86
    %p92 = scmp.eq.s32.totalorder %s9, 0
    %p93 = por %p91, %p92
    %p94 = scmp.ne.s32.totalorder %s83, %s86
    %p95 = scmp.eq.s32.totalorder %s14, 3
    %p96 = por %p94, %p95
    %p97 = scmp.ne.s32.totalorder %s86, %s87
    %p98 = scmp.eq.s32.totalorder %s14, 0
    %p99 = por %p97, %p98
    %p100 = scmp.ne.s32.totalorder %s86, %s87
    %p101 = scmp.eq.s32.totalorder %s15, 3
    %p102 = por %p100, %p101
    %p104 = scmp.ne.s32.totalorder %s87, %s103
    %p105 = scmp.eq.s32.totalorder %s15, 0
    %p106 = por %p104, %p105
    %s107 = ssub.s32 %s16, %s28
    %s108 = ssub.s32 %s17, %s24
    %s109 = sor.u32 %s107, %s108
    %p110 = scmp.eq.s32.totalorder %s109, 0
    %s112 = sadd.s32 %s111, 1
    %s113 = scalar_select %p110, %s111, %s112
    %p116 = pneg %p110
    %p117 = scmp.eq.s32.totalorder %s9, 3
    %p118 = por %p116, %p117
    %p119 = scmp.ne.s32.totalorder %s111, %s114
    %p120 = scmp.eq.s32.totalorder %s9, 0
    %p121 = por %p119, %p120
    %p122 = scmp.ne.s32.totalorder %s111, %s114
    %p123 = scmp.eq.s32.totalorder %s14, 3
    %p124 = por %p122, %p123
    %p125 = scmp.ne.s32.totalorder %s114, %s115
    %p126 = scmp.eq.s32.totalorder %s14, 0
    %p127 = por %p125, %p126
    %p128 = scmp.ne.s32.totalorder %s114, %s115
    %p129 = scmp.eq.s32.totalorder %s15, 3
    %p130 = por %p128, %p129
    %p132 = scmp.ne.s32.totalorder %s115, %s131
    %p133 = scmp.eq.s32.totalorder %s15, 0
    %p134 = por %p132, %p133
    %p135 = scmp.le.s32.totalorder 1, %s9
    %p136 = scmp.lt.s32.totalorder %s9, 5
    %p137 = pnand %p135, %p136
    %p138 = pneg %p137
    // Predicated region
    $region9: #{forward_uncond.28} parent=5 // pred_check
      _
    $region10: #{forward_uncond.28} parent=5 // pred_check_branch
      %140 = sbr.rel (%p137) target = $region12
    $region11: #{forward_uncond.28} parent=5 // pred_region
      %s141 = ssub.s32 %s9, 1
      // Predicated region
      $region13: #{forward_uncond.28} parent=11 // pred_check
        %p142 = pneg %p73
      $region14: #{forward_uncond.28} parent=11 // pred_check_branch
        %144 = sbr.rel (%p142) target = $region16
      $region15: #{forward_uncond.28} parent=11 // pred_region
        %p145 = scmp.lt.s32.totalorder %s19, 0
        %s146 = scalar_select %p145, %s19, 0
        %s147 = smul.addr %s146, 4
        %s148 = scalar_lea.vmem %s1, %s147
      $region16: #{forward_uncond.28} parent=11 // pred_fallthru
        _
      // Predicated region
      $region17: #{forward_uncond.28} parent=11 // pred_check
        %p149 = pneg %p99
      $region18: #{forward_uncond.28} parent=11 // pred_check_branch
        %151 = sbr.rel (%p149) target = $region20
      $region19: #{forward_uncond.28} parent=11 // pred_region
        %p152 = scmp.lt.s32.totalorder %s19, 0
        %s153 = scalar_select %p152, %s19, 0
        %s154 = scalar_lea.vmem %s2, %s153
      $region20: #{forward_uncond.28} parent=11 // pred_fallthru
        _
    $region12: #{forward_uncond.28} parent=5 // pred_fallthru
      _
    %p155 = scmp.lt.s32.totalorder %s9, 4
    // Predicated region
    $region21: #{forward_uncond.28} parent=5 // pred_check
      %p156 = pneg %p155
    $region22: #{forward_uncond.28} parent=5 // pred_check_branch
      %158 = sbr.rel (%p156) target = $region24
    $region23: #{forward_uncond.28} parent=5 // pred_region
      // Predicated region
      $region25: #{forward_uncond.28} parent=23 // pred_check
        %p159 = pneg %p41
      $region26: #{forward_uncond.28} parent=23 // pred_check_branch
        %161 = sbr.rel (%p159) target = $region28
      $region27: #{forward_uncond.28} parent=23 // pred_region
        %s162 = smul.u32 32, %s16
        %p163 = scmp.lt.s32.totalorder %s162, 127
        %s164 = scalar_select %p163, %s162, 127
        %s165 = smul.addr %s164, 4
        %s166 = scalar_lea.vmem %s0, %s165
        %s167 = smul.u32 32, %s16
      $region28: #{forward_uncond.28} parent=23 // pred_fallthru
        _
    $region24: #{forward_uncond.28} parent=5 // pred_fallthru
      _
    %p168 = scmp.le.s32.totalorder 1, %s9
    %p169 = scmp.lt.s32.totalorder %s9, 5
    %p170 = pnand %p168, %p169
    %p171 = pneg %p170
    // Predicated region
    $region29: #{forward_uncond.28} parent=5 // pred_check
      _
    $region30: #{forward_uncond.28} parent=5 // pred_check_branch
      %173 = sbr.rel (%p170) target = $region32
    $region31: #{forward_uncond.28} parent=5 // pred_region
      %s174 = ssub.s32 %s9, 1
      %s175 = smul.u32 32, %s18
      %p176 = scmp.lt.s32.totalorder %s175, 127
      %s177 = scalar_select %p176, %s175, 127
      %s178 = smul.addr %s177, 4
      %s179 = scalar_lea.vmem %s0, %s178
      %p180 = pneg %p47
      %p181 = pneg %p44
      %p182 = scmp.lt.s32.totalorder %s19, 0
      %s183 = scalar_select %p182, %s19, 0
      %s184 = smul.addr %s183, 4
      %s185 = scalar_lea.vmem %s1, %s184
      %p186 = pneg %p73
      %p187 = pneg %p70
      %p188 = scmp.lt.s32.totalorder %s19, 0
      %s189 = scalar_select %p188, %s19, 0
      %s190 = scalar_lea.vmem %s2, %s189
      %p191 = pneg %p99
      %p192 = pneg %p96
      %p193 = pneg %p127
      %p194 = pneg %p124
      %s195 = smul.u32 32, %s18
      %p196 = scmp.lt.s32.totalorder %s195, 127
      %s197 = scalar_select %p196, %s195, 127
      %p198 = scmp.lt.s32.totalorder %s19, 0
      %s199 = scalar_select %p198, %s19, 0
      %s200 = sadd.s32 %s199, %s197
      %s201 = smul.addr %s200, 4
      %s202 = scalar_lea.vmem %s3, %s201
      %s203 = smul.u32 32, %s18
      %p204 = scmp.lt.s32.totalorder %s203, 127
      %s205 = scalar_select %p204, %s203, 127
      %s206 = smul.addr %s205, 4
      %s207 = scalar_lea.vmem %s0, %s206
      %s208 = smul.u32 32, %s18
      %p209 = scmp.lt.s32.totalorder %s19, 0
      %s210 = scalar_select %p209, %s19, 0
      %s211 = smul.addr %s210, 4
      %s212 = scalar_lea.vmem %s1, %s211
      %p213 = scmp.lt.s32.totalorder %s19, 0
      %s214 = scalar_select %p213, %s19, 0
      %s215 = scalar_lea.vmem %s2, %s214
      %s216 = smul.u32 32, %s18
      %p217 = scmp.lt.s32.totalorder %s216, 127
      %s218 = scalar_select %p217, %s216, 127
      %p219 = scmp.lt.s32.totalorder %s19, 0
      %s220 = scalar_select %p219, %s19, 0
      %s221 = sadd.s32 %s220, %s218
      %s222 = smul.addr %s221, 4
      %s223 = scalar_lea.vmem %s3, %s222
      %s224 = smul.u32 32, %s18
      %v226 = vld [vmem:[%s207] sm:$0xf]
      %v227 = vld [vmem:[%s207 + $0x4] sm:$0xf]
      %v228 = vld [vmem:[%s207 + $0x8] sm:$0xf]
      %v229 = vld [vmem:[%s207 + $0xc] sm:$0xf]
      %v230 = vld [vmem:[%s207 + $0x10] sm:$0xf]
      %v231 = vld [vmem:[%s207 + $0x14] sm:$0xf]
      %v232 = vld [vmem:[%s207 + $0x18] sm:$0xf]
      %v233 = vld [vmem:[%s207 + $0x1c] sm:$0xf]
      %v234 = vld [vmem:[%s207 + $0x20] sm:$0xf]
      %v235 = vld [vmem:[%s207 + $0x24] sm:$0xf]
      %v236 = vld [vmem:[%s207 + $0x28] sm:$0xf]
      %v237 = vld [vmem:[%s207 + $0x2c] sm:$0xf]
      %v238 = vld [vmem:[%s207 + $0x30] sm:$0xf]
      %v239 = vld [vmem:[%s207 + $0x34] sm:$0xf]
      %v240 = vld [vmem:[%s207 + $0x38] sm:$0xf]
      %v241 = vld [vmem:[%s207 + $0x3c] sm:$0xf]
      %v242 = vld [vmem:[%s207 + $0x40] sm:$0xf]
      %v243 = vld [vmem:[%s207 + $0x44] sm:$0xf]
      %v244 = vld [vmem:[%s207 + $0x48] sm:$0xf]
      %v245 = vld [vmem:[%s207 + $0x4c] sm:$0xf]
      %v246 = vld [vmem:[%s207 + $0x50] sm:$0xf]
      %v247 = vld [vmem:[%s207 + $0x54] sm:$0xf]
      %v248 = vld [vmem:[%s207 + $0x58] sm:$0xf]
      %v249 = vld [vmem:[%s207 + $0x5c] sm:$0xf]
      %v250 = vld [vmem:[%s207 + $0x60] sm:$0xf]
      %v251 = vld [vmem:[%s207 + $0x64] sm:$0xf]
      %v252 = vld [vmem:[%s207 + $0x68] sm:$0xf]
      %v253 = vld [vmem:[%s207 + $0x6c] sm:$0xf]
      %v254 = vld [vmem:[%s207 + $0x70] sm:$0xf]
      %v255 = vld [vmem:[%s207 + $0x74] sm:$0xf]
      %v256 = vld [vmem:[%s207 + $0x78] sm:$0xf]
      %v257 = vld [vmem:[%s207 + $0x7c] sm:$0xf]
      %v258 = vld [vmem:[%s212] sm:$0xf]
      %v259 = vld [vmem:[%s212 + $0x4] sm:$0xf]
      %v260 = vld [vmem:[%s212 + $0x8] sm:$0xf]
      %v261 = vld [vmem:[%s212 + $0xc] sm:$0xf]
      %v262 = vld [vmem:[%s212 + $0x10] sm:$0xf]
      %v263 = vld [vmem:[%s212 + $0x14] sm:$0xf]
      %v264 = vld [vmem:[%s212 + $0x18] sm:$0xf]
      %v265 = vld [vmem:[%s212 + $0x1c] sm:$0xf]
      %v266 = vld [vmem:[%s212 + $0x20] sm:$0xf]
      %v267 = vld [vmem:[%s212 + $0x24] sm:$0xf]
      %v268 = vld [vmem:[%s212 + $0x28] sm:$0xf]
      %v269 = vld [vmem:[%s212 + $0x2c] sm:$0xf]
      %v270 = vld [vmem:[%s212 + $0x30] sm:$0xf]
      %v271 = vld [vmem:[%s212 + $0x34] sm:$0xf]
      %v272 = vld [vmem:[%s212 + $0x38] sm:$0xf]
      %v273 = vld [vmem:[%s212 + $0x3c] sm:$0xf]
      %v274 = vld [vmem:[%s215] sm:$0x1]
      %v276 = vlaneseq
      %v277 = vshrl.u32 %v276, 7
      %v278 = vsub.s32 0, %v277
      %v279 = vrot.slane %v274, %v278
      %v313 = vunpack.c.l.b16 %v226
      %v314 = vunpack.c.l.b16 %v227
      %v315 = vunpack.c.l.b16 %v228
      %v316 = vunpack.c.l.b16 %v229
      %v317 = vunpack.c.l.b16 %v230
      %v318 = vunpack.c.l.b16 %v231
      %v319 = vunpack.c.l.b16 %v232
      %v320 = vunpack.c.l.b16 %v233
      %v321 = vunpack.c.l.b16 %v234
      %v322 = vunpack.c.l.b16 %v235
      %v323 = vunpack.c.l.b16 %v236
      %v324 = vunpack.c.l.b16 %v237
      %v325 = vunpack.c.l.b16 %v238
      %v326 = vunpack.c.l.b16 %v239
      %v327 = vunpack.c.l.b16 %v240
      %v328 = vunpack.c.l.b16 %v241
      %v329 = vunpack.c.l.b16 %v242
      %v330 = vunpack.c.l.b16 %v243
      %v331 = vunpack.c.l.b16 %v244
      %v332 = vunpack.c.l.b16 %v245
      %v333 = vunpack.c.l.b16 %v246
      %v334 = vunpack.c.l.b16 %v247
      %v335 = vunpack.c.l.b16 %v248
      %v336 = vunpack.c.l.b16 %v249
      %v337 = vunpack.c.l.b16 %v250
      %v338 = vunpack.c.l.b16 %v251
      %v339 = vunpack.c.l.b16 %v252
      %v340 = vunpack.c.l.b16 %v253
      %v341 = vunpack.c.l.b16 %v254
      %v342 = vunpack.c.l.b16 %v255
      %v343 = vunpack.c.l.b16 %v256
      %v344 = vunpack.c.l.b16 %v257
      %v345 = vpack.c.b16 %v314, %v313
      %v346 = vpack.c.b16 %v316, %v315
      %v347 = vpack.c.b16 %v318, %v317
      %v348 = vpack.c.b16 %v320, %v319
      %v349 = vpack.c.b16 %v322, %v321
      %v350 = vpack.c.b16 %v324, %v323
      %v351 = vpack.c.b16 %v326, %v325
      %v352 = vpack.c.b16 %v328, %v327
      %v353 = vpack.c.b16 %v330, %v329
      %v354 = vpack.c.b16 %v332, %v331
      %v355 = vpack.c.b16 %v334, %v333
      %v356 = vpack.c.b16 %v336, %v335
      %v357 = vpack.c.b16 %v338, %v337
      %v358 = vpack.c.b16 %v340, %v339
      %v359 = vpack.c.b16 %v342, %v341
      %v360 = vpack.c.b16 %v344, %v343
      %v393 = vunpack.c.l.b16 %v258
      %v394 = vunpack.c.l.b16 %v259
      %v395 = vunpack.c.l.b16 %v260
      %v396 = vunpack.c.l.b16 %v261
      %v397 = vunpack.c.l.b16 %v262
      %v398 = vunpack.c.l.b16 %v263
      %v399 = vunpack.c.l.b16 %v264
      %v400 = vunpack.c.l.b16 %v265
      %v401 = vunpack.c.l.b16 %v266
      %v402 = vunpack.c.l.b16 %v267
      %v403 = vunpack.c.l.b16 %v268
      %v404 = vunpack.c.l.b16 %v269
      %v405 = vunpack.c.l.b16 %v270
      %v406 = vunpack.c.l.b16 %v271
      %v407 = vunpack.c.l.b16 %v272
      %v408 = vunpack.c.l.b16 %v273
      %v409 = vpack.c.b16 %v394, %v393
      %v410 = vpack.c.b16 %v396, %v395
      %v411 = vpack.c.b16 %v398, %v397
      %v412 = vpack.c.b16 %v400, %v399
      %v413 = vpack.c.b16 %v402, %v401
      %v414 = vpack.c.b16 %v404, %v403
      %v415 = vpack.c.b16 %v406, %v405
      %v416 = vpack.c.b16 %v408, %v407
      %425 = vmatprep.subr.bf16.mxu0 0
      %426 = vmatpush1.bf16.msra.mxu0 %v416
      %427 = vmatprep.subr.bf16.mxu0 0
      %428 = vmatpush1.bf16.msra.mxu0 %v415
      %429 = vmatprep.subr.bf16.mxu0 0
      %430 = vmatpush1.bf16.msra.mxu0 %v414
      %431 = vmatprep.subr.bf16.mxu0 0
      %432 = vmatpush1.bf16.msra.mxu0 %v413
      %433 = vmatprep.subr.bf16.mxu0 0
      %434 = vmatpush1.bf16.msra.mxu0 %v412
      %435 = vmatprep.subr.bf16.mxu0 0
      %436 = vmatpush1.bf16.msra.mxu0 %v411
      %437 = vmatprep.subr.bf16.mxu0 0
      %438 = vmatpush1.bf16.msra.mxu0 %v410
      %439 = vmatprep.subr.bf16.mxu0 0
      %440 = vmatpush1.bf16.msra.mxu0 %v409
      %441 = vmatprep.subr.bf16.mxu0 0
      %442 = vmatpush2.bf16.msra.mxu0 0
      %443 = vmatprep.subr.bf16.mxu0 0
      %444 = vmatpush2.bf16.msra.mxu0 0
      %445 = vmatprep.subr.bf16.mxu0 0
      %446 = vmatpush2.bf16.msra.mxu0 0
      %447 = vmatprep.subr.bf16.mxu0 0
      %448 = vmatpush2.bf16.msra.mxu0 0
      %449 = vmatprep.subr.bf16.mxu0 0
      %450 = vmatpush2.bf16.msra.mxu0 0
      %451 = vmatprep.subr.bf16.mxu0 0
      %452 = vmatpush2.bf16.msra.mxu0 0
      %453 = vmatprep.subr.bf16.mxu0 0
      %454 = vmatpush2.bf16.msra.mxu0 0
      %455 = vmatprep.subr.bf16.mxu0 0
      %456 = vmatpush2.bf16.msra.mxu0 0
      %457 = vmatprep.mubr.bf16.mxu0 0
      %458 = vmatmul.mubr.bf16.gmra.mxu0 %v345
      %v459 = vpop.f32.mrf.mxu0
      %v460 = vadd.f32 %v279, %v459
      %v461 = vpop.f32.mrf.mxu0
      %v462 = vpop.f32.mrf.mxu0
      %v463 = vadd.f32 %v279, %v462
      %v464 = vpop.f32.mrf.mxu0
      %465 = vmatprep.mubr.bf16.mxu0 0
      %466 = vmatmul.mubr.bf16.gmra.mxu0 %v346
      %v467 = vpop.f32.mrf.mxu0
      %v468 = vadd.f32 %v279, %v467
      %v469 = vpop.f32.mrf.mxu0
      %v470 = vpop.f32.mrf.mxu0
      %v471 = vadd.f32 %v279, %v470
      %v472 = vpop.f32.mrf.mxu0
      %473 = vmatprep.mubr.bf16.mxu0 0
      %474 = vmatmul.mubr.bf16.gmra.mxu0 %v347
      %v475 = vpop.f32.mrf.mxu0
      %v476 = vadd.f32 %v279, %v475
      %v477 = vpop.f32.mrf.mxu0
      %v478 = vpop.f32.mrf.mxu0
      %v479 = vadd.f32 %v279, %v478
      %v480 = vpop.f32.mrf.mxu0
      %481 = vmatprep.mubr.bf16.mxu0 0
      %482 = vmatmul.mubr.bf16.gmra.mxu0 %v348
      %v483 = vpop.f32.mrf.mxu0
      %v484 = vadd.f32 %v279, %v483
      %v485 = vpop.f32.mrf.mxu0
      %v486 = vpop.f32.mrf.mxu0
      %v487 = vadd.f32 %v279, %v486
      %v488 = vpop.f32.mrf.mxu0
      %489 = vmatprep.mubr.bf16.mxu0 0
      %490 = vmatmul.mubr.bf16.gmra.mxu0 %v349
      %v491 = vpop.f32.mrf.mxu0
      %v492 = vadd.f32 %v279, %v491
      %v493 = vpop.f32.mrf.mxu0
      %v494 = vpop.f32.mrf.mxu0
      %v495 = vadd.f32 %v279, %v494
      %v496 = vpop.f32.mrf.mxu0
      %497 = vmatprep.mubr.bf16.mxu0 0
      %498 = vmatmul.mubr.bf16.gmra.mxu0 %v350
      %v499 = vpop.f32.mrf.mxu0
      %v500 = vadd.f32 %v279, %v499
      %v501 = vpop.f32.mrf.mxu0
      %v502 = vpop.f32.mrf.mxu0
      %v503 = vadd.f32 %v279, %v502
      %v504 = vpop.f32.mrf.mxu0
      %505 = vmatprep.mubr.bf16.mxu0 0
      %506 = vmatmul.mubr.bf16.gmra.mxu0 %v351
      %v507 = vpop.f32.mrf.mxu0
      %v508 = vadd.f32 %v279, %v507
      %v509 = vpop.f32.mrf.mxu0
      %v510 = vpop.f32.mrf.mxu0
      %v511 = vadd.f32 %v279, %v510
      %v512 = vpop.f32.mrf.mxu0
      %513 = vmatprep.mubr.bf16.mxu0 0
      %514 = vmatmul.mubr.bf16.gmra.mxu0 %v352
      %v515 = vpop.f32.mrf.mxu0
      %v516 = vadd.f32 %v279, %v515
      %v517 = vpop.f32.mrf.mxu0
      %v518 = vpop.f32.mrf.mxu0
      %v519 = vadd.f32 %v279, %v518
      %v520 = vpop.f32.mrf.mxu0
      %521 = vmatprep.mubr.bf16.mxu0 0
      %522 = vmatmul.mubr.bf16.gmra.mxu0 %v353
      %v523 = vpop.f32.mrf.mxu0
      %v524 = vadd.f32 %v279, %v523
      %v525 = vpop.f32.mrf.mxu0
      %v526 = vpop.f32.mrf.mxu0
      %v527 = vadd.f32 %v279, %v526
      %v528 = vpop.f32.mrf.mxu0
      %529 = vmatprep.mubr.bf16.mxu0 0
      %530 = vmatmul.mubr.bf16.gmra.mxu0 %v354
      %v531 = vpop.f32.mrf.mxu0
      %v532 = vadd.f32 %v279, %v531
      %v533 = vpop.f32.mrf.mxu0
      %v534 = vpop.f32.mrf.mxu0
      %v535 = vadd.f32 %v279, %v534
      %v536 = vpop.f32.mrf.mxu0
      %537 = vmatprep.mubr.bf16.mxu0 0
      %538 = vmatmul.mubr.bf16.gmra.mxu0 %v355
      %v539 = vpop.f32.mrf.mxu0
      %v540 = vadd.f32 %v279, %v539
      %v541 = vpop.f32.mrf.mxu0
      %v542 = vpop.f32.mrf.mxu0
      %v543 = vadd.f32 %v279, %v542
      %v544 = vpop.f32.mrf.mxu0
      %545 = vmatprep.mubr.bf16.mxu0 0
      %546 = vmatmul.mubr.bf16.gmra.mxu0 %v356
      %v547 = vpop.f32.mrf.mxu0
      %v548 = vadd.f32 %v279, %v547
      %v549 = vpop.f32.mrf.mxu0
      %v550 = vpop.f32.mrf.mxu0
      %v551 = vadd.f32 %v279, %v550
      %v552 = vpop.f32.mrf.mxu0
      %553 = vmatprep.mubr.bf16.mxu0 0
      %554 = vmatmul.mubr.bf16.gmra.mxu0 %v357
      %v555 = vpop.f32.mrf.mxu0
      %v556 = vadd.f32 %v279, %v555
      %v557 = vpop.f32.mrf.mxu0
      %v558 = vpop.f32.mrf.mxu0
      %v559 = vadd.f32 %v279, %v558
      %v560 = vpop.f32.mrf.mxu0
      %561 = vmatprep.mubr.bf16.mxu0 0
      %562 = vmatmul.mubr.bf16.gmra.mxu0 %v358
      %v563 = vpop.f32.mrf.mxu0
      %v564 = vadd.f32 %v279, %v563
      %v565 = vpop.f32.mrf.mxu0
      %v566 = vpop.f32.mrf.mxu0
      %v567 = vadd.f32 %v279, %v566
      %v568 = vpop.f32.mrf.mxu0
      %569 = vmatprep.mubr.bf16.mxu0 0
      %570 = vmatmul.mubr.bf16.gmra.mxu0 %v359
      %v571 = vpop.f32.mrf.mxu0
      %v572 = vadd.f32 %v279, %v571
      %v573 = vpop.f32.mrf.mxu0
      %v574 = vpop.f32.mrf.mxu0
      %v575 = vadd.f32 %v279, %v574
      %v576 = vpop.f32.mrf.mxu0
      %577 = vmatprep.mubr.bf16.mxu0 0
      %578 = vmatmul.mubr.bf16.gmra.mxu0 %v360
      %v579 = vpop.f32.mrf.mxu0
      %v580 = vadd.f32 %v279, %v579
      %v581 = vpop.f32.mrf.mxu0
      %v582 = vpop.f32.mrf.mxu0
      %v583 = vadd.f32 %v279, %v582
      %v584 = vpop.f32.mrf.mxu0
      %585 = vdwg.mxu0
      %v586 = vpack.c.bf16 %v463, %v460
      %v587 = vpack.c.bf16 %v471, %v468
      %v588 = vpack.c.bf16 %v479, %v476
      %v589 = vpack.c.bf16 %v487, %v484
      %v590 = vpack.c.bf16 %v495, %v492
      %v591 = vpack.c.bf16 %v503, %v500
      %v592 = vpack.c.bf16 %v511, %v508
      %v593 = vpack.c.bf16 %v519, %v516
      %v594 = vpack.c.bf16 %v527, %v524
      %v595 = vpack.c.bf16 %v535, %v532
      %v596 = vpack.c.bf16 %v543, %v540
      %v597 = vpack.c.bf16 %v551, %v548
      %v598 = vpack.c.bf16 %v559, %v556
      %v599 = vpack.c.bf16 %v567, %v564
      %v600 = vpack.c.bf16 %v575, %v572
      %v601 = vpack.c.bf16 %v583, %v580
      %v618 = vunpack.c.l.b16 %v586
      %v619 = vunpack.c.h.b16 %v586
      %v620 = vunpack.c.l.b16 %v587
      %v621 = vunpack.c.h.b16 %v587
      %v622 = vunpack.c.l.b16 %v588
      %v623 = vunpack.c.h.b16 %v588
      %v624 = vunpack.c.l.b16 %v589
      %v625 = vunpack.c.h.b16 %v589
      %v626 = vunpack.c.l.b16 %v590
      %v627 = vunpack.c.h.b16 %v590
      %v628 = vunpack.c.l.b16 %v591
      %v629 = vunpack.c.h.b16 %v591
      %v630 = vunpack.c.l.b16 %v592
      %v631 = vunpack.c.h.b16 %v592
      %v632 = vunpack.c.l.b16 %v593
      %v633 = vunpack.c.h.b16 %v593
      %v634 = vunpack.c.l.b16 %v594
      %v635 = vunpack.c.h.b16 %v594
      %v636 = vunpack.c.l.b16 %v595
      %v637 = vunpack.c.h.b16 %v595
      %v638 = vunpack.c.l.b16 %v596
      %v639 = vunpack.c.h.b16 %v596
      %v640 = vunpack.c.l.b16 %v597
      %v641 = vunpack.c.h.b16 %v597
      %v642 = vunpack.c.l.b16 %v598
      %v643 = vunpack.c.h.b16 %v598
      %v644 = vunpack.c.l.b16 %v599
      %v645 = vunpack.c.h.b16 %v599
      %v646 = vunpack.c.l.b16 %v600
      %v647 = vunpack.c.h.b16 %v600
      %v648 = vunpack.c.l.b16 %v601
      %v649 = vunpack.c.h.b16 %v601
      %v650 = vpack.c.b16 %v618, %v618
      %v651 = vpack.c.b16 %v619, %v619
      %v652 = vpack.c.b16 %v620, %v620
      %v653 = vpack.c.b16 %v621, %v621
      %v654 = vpack.c.b16 %v622, %v622
      %v655 = vpack.c.b16 %v623, %v623
      %v656 = vpack.c.b16 %v624, %v624
      %v657 = vpack.c.b16 %v625, %v625
      %v658 = vpack.c.b16 %v626, %v626
      %v659 = vpack.c.b16 %v627, %v627
      %v660 = vpack.c.b16 %v628, %v628
      %v661 = vpack.c.b16 %v629, %v629
      %v662 = vpack.c.b16 %v630, %v630
      %v663 = vpack.c.b16 %v631, %v631
      %v664 = vpack.c.b16 %v632, %v632
      %v665 = vpack.c.b16 %v633, %v633
      %v666 = vpack.c.b16 %v634, %v634
      %v667 = vpack.c.b16 %v635, %v635
      %v668 = vpack.c.b16 %v636, %v636
      %v669 = vpack.c.b16 %v637, %v637
      %v670 = vpack.c.b16 %v638, %v638
      %v671 = vpack.c.b16 %v639, %v639
      %v672 = vpack.c.b16 %v640, %v640
      %v673 = vpack.c.b16 %v641, %v641
      %v674 = vpack.c.b16 %v642, %v642
      %v675 = vpack.c.b16 %v643, %v643
      %v676 = vpack.c.b16 %v644, %v644
      %v677 = vpack.c.b16 %v645, %v645
      %v678 = vpack.c.b16 %v646, %v646
      %v679 = vpack.c.b16 %v647, %v647
      %v680 = vpack.c.b16 %v648, %v648
      %v681 = vpack.c.b16 %v649, %v649
      %714 = vst [vmem:[%s223] sm:$0xf] %v650
      %715 = vst [vmem:[%s223 + $0x4] sm:$0xf] %v651
      %716 = vst [vmem:[%s223 + $0x8] sm:$0xf] %v652
      %717 = vst [vmem:[%s223 + $0xc] sm:$0xf] %v653
      %718 = vst [vmem:[%s223 + $0x10] sm:$0xf] %v654
      %719 = vst [vmem:[%s223 + $0x14] sm:$0xf] %v655
      %720 = vst [vmem:[%s223 + $0x18] sm:$0xf] %v656
      %721 = vst [vmem:[%s223 + $0x1c] sm:$0xf] %v657
      %722 = vst [vmem:[%s223 + $0x20] sm:$0xf] %v658
      %723 = vst [vmem:[%s223 + $0x24] sm:$0xf] %v659
      %724 = vst [vmem:[%s223 + $0x28] sm:$0xf] %v660
      %725 = vst [vmem:[%s223 + $0x2c] sm:$0xf] %v661
      %726 = vst [vmem:[%s223 + $0x30] sm:$0xf] %v662
      %727 = vst [vmem:[%s223 + $0x34] sm:$0xf] %v663
      %728 = vst [vmem:[%s223 + $0x38] sm:$0xf] %v664
      %729 = vst [vmem:[%s223 + $0x3c] sm:$0xf] %v665
      %730 = vst [vmem:[%s223 + $0x40] sm:$0xf] %v666
      %731 = vst [vmem:[%s223 + $0x44] sm:$0xf] %v667
      %732 = vst [vmem:[%s223 + $0x48] sm:$0xf] %v668
      %733 = vst [vmem:[%s223 + $0x4c] sm:$0xf] %v669
      %734 = vst [vmem:[%s223 + $0x50] sm:$0xf] %v670
      %735 = vst [vmem:[%s223 + $0x54] sm:$0xf] %v671
      %736 = vst [vmem:[%s223 + $0x58] sm:$0xf] %v672
      %737 = vst [vmem:[%s223 + $0x5c] sm:$0xf] %v673
      %738 = vst [vmem:[%s223 + $0x60] sm:$0xf] %v674
      %739 = vst [vmem:[%s223 + $0x64] sm:$0xf] %v675
      %740 = vst [vmem:[%s223 + $0x68] sm:$0xf] %v676
      %741 = vst [vmem:[%s223 + $0x6c] sm:$0xf] %v677
      %742 = vst [vmem:[%s223 + $0x70] sm:$0xf] %v678
      %743 = vst [vmem:[%s223 + $0x74] sm:$0xf] %v679
      %744 = vst [vmem:[%s223 + $0x78] sm:$0xf] %v680
      %745 = vst [vmem:[%s223 + $0x7c] sm:$0xf] %v681
      %s746 = smul.u32 32, %s18
      %p747 = scmp.lt.s32.totalorder %s746, 127
      %s748 = scalar_select %p747, %s746, 127
      %p749 = scmp.lt.s32.totalorder %s19, 0
      %s750 = scalar_select %p749, %s19, 0
      %s751 = sadd.s32 %s750, %s748
      %s752 = smul.addr %s751, 4
      %s753 = scalar_lea.vmem %s3, %s752
      // Predicated region
      $region33: #{forward_uncond.28} parent=31 // pred_check
        %p754 = pneg %p124
      $region34: #{forward_uncond.28} parent=31 // pred_check_branch
        %756 = sbr.rel (%p754) target = $region36
      $region35: #{forward_uncond.28} parent=31 // pred_region
        %s757 = smul.u32 32, %s18
      $region36: #{forward_uncond.28} parent=31 // pred_fallthru
        _
    $region32: #{forward_uncond.28} parent=5 // pred_fallthru
      _
    %p758 = scmp.le.s32.totalorder 2, %s9
    // Predicated region
    $region37: #{forward_uncond.28} parent=5 // pred_check
      %p759 = pneg %p758
    $region38: #{forward_uncond.28} parent=5 // pred_check_branch
      %761 = sbr.rel (%p759) target = $region40
    $region39: #{forward_uncond.28} parent=5 // pred_region
      %s762 = ssub.s32 %s9, 2
      // Predicated region
      $region41: #{forward_uncond.28} parent=39 // pred_check
        %p763 = pneg %p130
      $region42: #{forward_uncond.28} parent=39 // pred_check_branch
        %765 = sbr.rel (%p763) target = $region44
      $region43: #{forward_uncond.28} parent=39 // pred_region
        %s766 = smul.u32 32, %s20
        %p767 = scmp.lt.s32.totalorder %s766, 127
        %s768 = scalar_select %p767, %s766, 127
        %p769 = scmp.lt.s32.totalorder %s21, 0
        %s770 = scalar_select %p769, %s21, 0
        %s771 = sadd.s32 %s770, %s768
        %s772 = smul.addr %s771, 4
        %s773 = scalar_lea.vmem %s3, %s772
      $region44: #{forward_uncond.28} parent=39 // pred_fallthru
        _
    $region40: #{forward_uncond.28} parent=5 // pred_fallthru
      _
  $region6: #{forward_uncond.28} parent=0 // loop_footer
    %s13 = sadd.s32 1, %s9
  $region7: #{forward_uncond.28} parent=0 // loop_footer_branch
    %8 = sbr.rel target = $region3
  $region8: #{forward_uncond.28} parent=0 // loop_exit
    _

// kernel: forward_uncond.29
$region0: #{forward_uncond.29}
  #allocation0 [shape = 'u32[]', space=smem, size = 0x4, offset = 0x4, fixed_abs, tag = 'smem constant byte address 0x4 - core index']
  #allocation1 [shape = 'u32[144,128]{1,0:T(1,128)}', space=vmem, size = 0x12000, scoped, tag = 'internal scratch']
  %s0 = inlined_call_operand.vmem [shape: bf16[1024,640], index: 0, kind: input, shape index: {}]
  %s1 = inlined_call_operand.vmem [shape: bf16[640,128], index: 1, kind: input, shape index: {}]
  %s2 = inlined_call_operand.vmem [shape: f32[1,128], index: 2, kind: input, shape index: {}]
  %s3 = inlined_call_operand.vmem [shape: bf16[1024,128], index: 3, kind: output, shape index: {}]
  %s4 = sld [smem:[#allocation0]]
  $region45: #{forward_uncond.29} parent=0
    _
  %s6 = ssub.s32 1, %s4
  %s7 = scalar_select 0, %s6, %s4
  loop: start=0, step=1, limit=6
  $region2: #{forward_uncond.29} parent=0 // loop_pre_header
    _
  $region3: #{forward_uncond.29} parent=0 // loop_header
    %s9 = sphi 0, %s13
    %p10 = scmp.ge.s32.totalorder %s9, 6
    %s16 = sphi 0, %s28
    %s17 = sphi 0, %s24
    %s18 = sphi 0, %s16
    %s19 = sphi 0, %s17
    %s20 = sphi 0, %s18
    %s21 = sphi 0, %s19
    %s31 = sphi 0, %s33
    %s34 = sphi 0, %s31
    %s35 = sphi 0, %s34
    %s51 = sphi 0, %s35
    %s57 = sphi 0, %s59
    %s60 = sphi 0, %s57
    %s61 = sphi 0, %s60
    %s77 = sphi 0, %s61
    %s83 = sphi 0, %s85
    %s86 = sphi 0, %s83
    %s87 = sphi 0, %s86
    %s103 = sphi 0, %s87
    %s111 = sphi 0, %s113
    %s114 = sphi 0, %s111
    %s115 = sphi 0, %s114
    %s131 = sphi 0, %s115
  $region4: #{forward_uncond.29} parent=0 // loop_header_branch
    %12 = sbr.rel (%p10) target = $region8
  $region5: #{forward_uncond.29} parent=0 // loop_body
    %s14 = ssub.s32 %s9, 1
    %s15 = ssub.s32 %s9, 2
    %s22 = sadd.s32 1, %s17
    %p23 = scmp.ge.s32.totalorder %s22, 1
    %s24 = scalar_select %p23, 0, %s22
    %s25 = sadd.s32 1, %s16
    %s26 = scalar_select %p23, %s25, %s16
    %p27 = scmp.ge.s32.totalorder %s26, 4
    %s28 = scalar_select %p27, 0, %s26
    %s29 = ssub.s32 %s16, %s28
    %p30 = scmp.eq.s32.totalorder %s29, 0
    %s32 = sadd.s32 %s31, 1
    %s33 = scalar_select %p30, %s31, %s32
    %p36 = pneg %p30
    %p37 = scmp.eq.s32.totalorder %s9, 3
    %p38 = por %p36, %p37
    %p39 = scmp.ne.s32.totalorder %s31, %s34
    %p40 = scmp.eq.s32.totalorder %s9, 0
    %p41 = por %p39, %p40
    %p42 = scmp.ne.s32.totalorder %s31, %s34
    %p43 = scmp.eq.s32.totalorder %s14, 3
    %p44 = por %p42, %p43
    %p45 = scmp.ne.s32.totalorder %s34, %s35
    %p46 = scmp.eq.s32.totalorder %s14, 0
    %p47 = por %p45, %p46
    %p48 = scmp.ne.s32.totalorder %s34, %s35
    %p49 = scmp.eq.s32.totalorder %s15, 3
    %p50 = por %p48, %p49
    %p52 = scmp.ne.s32.totalorder %s35, %s51
    %p53 = scmp.eq.s32.totalorder %s15, 0
    %p54 = por %p52, %p53
    %s55 = ssub.s32 %s17, %s24
    %p56 = scmp.eq.s32.totalorder %s55, 0
    %s58 = sadd.s32 %s57, 1
    %s59 = scalar_select %p56, %s57, %s58
    %p62 = pneg %p56
    %p63 = scmp.eq.s32.totalorder %s9, 3
    %p64 = por %p62, %p63
    %p65 = scmp.ne.s32.totalorder %s57, %s60
    %p66 = scmp.eq.s32.totalorder %s9, 0
    %p67 = por %p65, %p66
    %p68 = scmp.ne.s32.totalorder %s57, %s60
    %p69 = scmp.eq.s32.totalorder %s14, 3
    %p70 = por %p68, %p69
    %p71 = scmp.ne.s32.totalorder %s60, %s61
    %p72 = scmp.eq.s32.totalorder %s14, 0
    %p73 = por %p71, %p72
    %p74 = scmp.ne.s32.totalorder %s60, %s61
    %p75 = scmp.eq.s32.totalorder %s15, 3
    %p76 = por %p74, %p75
    %p78 = scmp.ne.s32.totalorder %s61, %s77
    %p79 = scmp.eq.s32.totalorder %s15, 0
    %p80 = por %p78, %p79
    %s81 = ssub.s32 %s17, %s24
    %p82 = scmp.eq.s32.totalorder %s81, 0
    %s84 = sadd.s32 %s83, 1
    %s85 = scalar_select %p82, %s83, %s84
    %p88 = pneg %p82
    %p89 = scmp.eq.s32.totalorder %s9, 3
    %p90 = por %p88, %p89
    %p91 = scmp.ne.s32.totalorder %s83, %s86
    %p92 = scmp.eq.s32.totalorder %s9, 0
    %p93 = por %p91, %p92
    %p94 = scmp.ne.s32.totalorder %s83, %s86
    %p95 = scmp.eq.s32.totalorder %s14, 3
    %p96 = por %p94, %p95
    %p97 = scmp.ne.s32.totalorder %s86, %s87
    %p98 = scmp.eq.s32.totalorder %s14, 0
    %p99 = por %p97, %p98
    %p100 = scmp.ne.s32.totalorder %s86, %s87
    %p101 = scmp.eq.s32.totalorder %s15, 3
    %p102 = por %p100, %p101
    %p104 = scmp.ne.s32.totalorder %s87, %s103
    %p105 = scmp.eq.s32.totalorder %s15, 0
    %p106 = por %p104, %p105
    %s107 = ssub.s32 %s16, %s28
    %s108 = ssub.s32 %s17, %s24
    %s109 = sor.u32 %s107, %s108
    %p110 = scmp.eq.s32.totalorder %s109, 0
    %s112 = sadd.s32 %s111, 1
    %s113 = scalar_select %p110, %s111, %s112
    %p116 = pneg %p110
    %p117 = scmp.eq.s32.totalorder %s9, 3
    %p118 = por %p116, %p117
    %p119 = scmp.ne.s32.totalorder %s111, %s114
    %p120 = scmp.eq.s32.totalorder %s9, 0
    %p121 = por %p119, %p120
    %p122 = scmp.ne.s32.totalorder %s111, %s114
    %p123 = scmp.eq.s32.totalorder %s14, 3
    %p124 = por %p122, %p123
    %p125 = scmp.ne.s32.totalorder %s114, %s115
    %p126 = scmp.eq.s32.totalorder %s14, 0
    %p127 = por %p125, %p126
    %p128 = scmp.ne.s32.totalorder %s114, %s115
    %p129 = scmp.eq.s32.totalorder %s15, 3
    %p130 = por %p128, %p129
    %p132 = scmp.ne.s32.totalorder %s115, %s131
    %p133 = scmp.eq.s32.totalorder %s15, 0
    %p134 = por %p132, %p133
    %p135 = scmp.le.s32.totalorder 1, %s9
    %p136 = scmp.lt.s32.totalorder %s9, 5
    %p137 = pnand %p135, %p136
    %p138 = pneg %p137
    // Predicated region
    $region9: #{forward_uncond.29} parent=5 // pred_check
      _
    $region10: #{forward_uncond.29} parent=5 // pred_check_branch
      %140 = sbr.rel (%p137) target = $region12
    $region11: #{forward_uncond.29} parent=5 // pred_region
      %s141 = ssub.s32 %s9, 1
      // Predicated region
      $region13: #{forward_uncond.29} parent=11 // pred_check
        %p142 = pneg %p73
      $region14: #{forward_uncond.29} parent=11 // pred_check_branch
        %144 = sbr.rel (%p142) target = $region16
      $region15: #{forward_uncond.29} parent=11 // pred_region
        %p145 = scmp.lt.s32.totalorder %s19, 0
        %s146 = scalar_select %p145, %s19, 0
        %s147 = smul.addr %s146, 4
        %s148 = scalar_lea.vmem %s1, %s147
      $region16: #{forward_uncond.29} parent=11 // pred_fallthru
        _
      // Predicated region
      $region17: #{forward_uncond.29} parent=11 // pred_check
        %p149 = pneg %p99
      $region18: #{forward_uncond.29} parent=11 // pred_check_branch
        %151 = sbr.rel (%p149) target = $region20
      $region19: #{forward_uncond.29} parent=11 // pred_region
        %p152 = scmp.lt.s32.totalorder %s19, 0
        %s153 = scalar_select %p152, %s19, 0
        %s154 = scalar_lea.vmem %s2, %s153
      $region20: #{forward_uncond.29} parent=11 // pred_fallthru
        _
    $region12: #{forward_uncond.29} parent=5 // pred_fallthru
      _
    %p155 = scmp.lt.s32.totalorder %s9, 4
    // Predicated region
    $region21: #{forward_uncond.29} parent=5 // pred_check
      %p156 = pneg %p155
    $region22: #{forward_uncond.29} parent=5 // pred_check_branch
      %158 = sbr.rel (%p156) target = $region24
    $region23: #{forward_uncond.29} parent=5 // pred_region
      // Predicated region
      $region25: #{forward_uncond.29} parent=23 // pred_check
        %p159 = pneg %p41
      $region26: #{forward_uncond.29} parent=23 // pred_check_branch
        %161 = sbr.rel (%p159) target = $region28
      $region27: #{forward_uncond.29} parent=23 // pred_region
        %s162 = smul.u32 32, %s16
        %p163 = scmp.lt.s32.totalorder %s162, 127
        %s164 = scalar_select %p163, %s162, 127
        %s165 = smul.addr %s164, 5
        %s166 = smul.addr %s165, 4
        %s167 = scalar_lea.vmem %s0, %s166
        %s168 = smul.u32 32, %s16
      $region28: #{forward_uncond.29} parent=23 // pred_fallthru
        _
    $region24: #{forward_uncond.29} parent=5 // pred_fallthru
      _
    %p169 = scmp.le.s32.totalorder 1, %s9
    %p170 = scmp.lt.s32.totalorder %s9, 5
    %p171 = pnand %p169, %p170
    %p172 = pneg %p171
    // Predicated region
    $region29: #{forward_uncond.29} parent=5 // pred_check
      _
    $region30: #{forward_uncond.29} parent=5 // pred_check_branch
      %174 = sbr.rel (%p171) target = $region32
    $region31: #{forward_uncond.29} parent=5 // pred_region
      %s175 = ssub.s32 %s9, 1
      %s176 = smul.u32 32, %s18
      %p177 = scmp.lt.s32.totalorder %s176, 127
      %s178 = scalar_select %p177, %s176, 127
      %s179 = smul.addr %s178, 5
      %s180 = smul.addr %s179, 4
      %s181 = scalar_lea.vmem %s0, %s180
      %p182 = pneg %p47
      %p183 = pneg %p44
      %p184 = scmp.lt.s32.totalorder %s19, 0
      %s185 = scalar_select %p184, %s19, 0
      %s186 = smul.addr %s185, 4
      %s187 = scalar_lea.vmem %s1, %s186
      %p188 = pneg %p73
      %p189 = pneg %p70
      %p190 = scmp.lt.s32.totalorder %s19, 0
      %s191 = scalar_select %p190, %s19, 0
      %s192 = scalar_lea.vmem %s2, %s191
      %p193 = pneg %p99
      %p194 = pneg %p96
      %p195 = pneg %p127
      %p196 = pneg %p124
      %s197 = smul.u32 32, %s18
      %p198 = scmp.lt.s32.totalorder %s197, 127
      %s199 = scalar_select %p198, %s197, 127
      %p200 = scmp.lt.s32.totalorder %s19, 0
      %s201 = scalar_select %p200, %s19, 0
      %s202 = sadd.s32 %s201, %s199
      %s203 = smul.addr %s202, 4
      %s204 = scalar_lea.vmem %s3, %s203
      %s205 = smul.u32 32, %s18
      %p206 = scmp.lt.s32.totalorder %s205, 127
      %s207 = scalar_select %p206, %s205, 127
      %s208 = smul.addr %s207, 5
      %s209 = smul.addr %s208, 4
      %s210 = scalar_lea.vmem %s0, %s209
      %s211 = smul.u32 32, %s18
      %p212 = scmp.lt.s32.totalorder %s19, 0
      %s213 = scalar_select %p212, %s19, 0
      %s214 = smul.addr %s213, 4
      %s215 = scalar_lea.vmem %s1, %s214
      %p216 = scmp.lt.s32.totalorder %s19, 0
      %s217 = scalar_select %p216, %s19, 0
      %s218 = scalar_lea.vmem %s2, %s217
      %s219 = smul.u32 32, %s18
      %p220 = scmp.lt.s32.totalorder %s219, 127
      %s221 = scalar_select %p220, %s219, 127
      %p222 = scmp.lt.s32.totalorder %s19, 0
      %s223 = scalar_select %p222, %s19, 0
      %s224 = sadd.s32 %s223, %s221
      %s225 = smul.addr %s224, 4
      %s226 = scalar_lea.vmem %s3, %s225
      %s227 = smul.u32 32, %s18
      %v229 = vld [vmem:[%s210] sm:$0xff]
      %v230 = vld [vmem:[%s210 + $0x8] sm:$0xff]
      %v231 = vld [vmem:[%s210 + $0x10] sm:$0xf]
      %v232 = vld [vmem:[%s210 + $0x14] sm:$0xff]
      %v233 = vld [vmem:[%s210 + $0x1c] sm:$0xff]
      %v234 = vld [vmem:[%s210 + $0x24] sm:$0xf]
      %v235 = vld [vmem:[%s210 + $0x28] sm:$0xff]
      %v236 = vld [vmem:[%s210 + $0x30] sm:$0xff]
      %v237 = vld [vmem:[%s210 + $0x38] sm:$0xf]
      %v238 = vld [vmem:[%s210 + $0x3c] sm:$0xff]
      %v239 = vld [vmem:[%s210 + $0x44] sm:$0xff]
      %v240 = vld [vmem:[%s210 + $0x4c] sm:$0xf]
      %v241 = vld [vmem:[%s210 + $0x50] sm:$0xff]
      %v242 = vld [vmem:[%s210 + $0x58] sm:$0xff]
      %v243 = vld [vmem:[%s210 + $0x60] sm:$0xf]
      %v244 = vld [vmem:[%s210 + $0x64] sm:$0xff]
      %v245 = vld [vmem:[%s210 + $0x6c] sm:$0xff]
      %v246 = vld [vmem:[%s210 + $0x74] sm:$0xf]
      %v247 = vld [vmem:[%s210 + $0x78] sm:$0xff]
      %v248 = vld [vmem:[%s210 + $0x80] sm:$0xff]
      %v249 = vld [vmem:[%s210 + $0x88] sm:$0xf]
      %v250 = vld [vmem:[%s210 + $0x8c] sm:$0xff]
      %v251 = vld [vmem:[%s210 + $0x94] sm:$0xff]
      %v252 = vld [vmem:[%s210 + $0x9c] sm:$0xf]
      %v253 = vld [vmem:[%s210 + $0xa0] sm:$0xff]
      %v254 = vld [vmem:[%s210 + $0xa8] sm:$0xff]
      %v255 = vld [vmem:[%s210 + $0xb0] sm:$0xf]
      %v256 = vld [vmem:[%s210 + $0xb4] sm:$0xff]
      %v257 = vld [vmem:[%s210 + $0xbc] sm:$0xff]
      %v258 = vld [vmem:[%s210 + $0xc4] sm:$0xf]
      %v259 = vld [vmem:[%s210 + $0xc8] sm:$0xff]
      %v260 = vld [vmem:[%s210 + $0xd0] sm:$0xff]
      %v261 = vld [vmem:[%s210 + $0xd8] sm:$0xf]
      %v262 = vld [vmem:[%s210 + $0xdc] sm:$0xff]
      %v263 = vld [vmem:[%s210 + $0xe4] sm:$0xff]
      %v264 = vld [vmem:[%s210 + $0xec] sm:$0xf]
      %v265 = vld [vmem:[%s210 + $0xf0] sm:$0xff]
      %v266 = vld [vmem:[%s210 + $0xf8] sm:$0xff]
      %v267 = vld [vmem:[%s210 + $0x100] sm:$0xf]
      %v268 = vld [vmem:[%s210 + $0x104] sm:$0xff]
      %v269 = vld [vmem:[%s210 + $0x10c] sm:$0xff]
      %v270 = vld [vmem:[%s210 + $0x114] sm:$0xf]
      %v271 = vld [vmem:[%s210 + $0x118] sm:$0xff]
      %v272 = vld [vmem:[%s210 + $0x120] sm:$0xff]
      %v273 = vld [vmem:[%s210 + $0x128] sm:$0xf]
      %v274 = vld [vmem:[%s210 + $0x12c] sm:$0xff]
      %v275 = vld [vmem:[%s210 + $0x134] sm:$0xff]
      %v276 = vld [vmem:[%s210 + $0x13c] sm:$0xf]
      %v277 = vld [vmem:[%s210 + $0x140] sm:$0xff]
      %v278 = vld [vmem:[%s210 + $0x148] sm:$0xff]
      %v279 = vld [vmem:[%s210 + $0x150] sm:$0xf]
      %v280 = vld [vmem:[%s210 + $0x154] sm:$0xff]
      %v281 = vld [vmem:[%s210 + $0x15c] sm:$0xff]
      %v282 = vld [vmem:[%s210 + $0x164] sm:$0xf]
      %v283 = vld [vmem:[%s210 + $0x168] sm:$0xff]
      %v284 = vld [vmem:[%s210 + $0x170] sm:$0xff]
      %v285 = vld [vmem:[%s210 + $0x178] sm:$0xf]
      %v286 = vld [vmem:[%s210 + $0x17c] sm:$0xff]
      %v287 = vld [vmem:[%s210 + $0x184] sm:$0xff]
      %v288 = vld [vmem:[%s210 + $0x18c] sm:$0xf]
      %v289 = vld [vmem:[%s210 + $0x190] sm:$0xff]
      %v290 = vld [vmem:[%s210 + $0x198] sm:$0xff]
      %v291 = vld [vmem:[%s210 + $0x1a0] sm:$0xf]
      %v292 = vld [vmem:[%s210 + $0x1a4] sm:$0xff]
      %v293 = vld [vmem:[%s210 + $0x1ac] sm:$0xff]
      %v294 = vld [vmem:[%s210 + $0x1b4] sm:$0xf]
      %v295 = vld [vmem:[%s210 + $0x1b8] sm:$0xff]
      %v296 = vld [vmem:[%s210 + $0x1c0] sm:$0xff]
      %v297 = vld [vmem:[%s210 + $0x1c8] sm:$0xf]
      %v298 = vld [vmem:[%s210 + $0x1cc] sm:$0xff]
      %v299 = vld [vmem:[%s210 + $0x1d4] sm:$0xff]
      %v300 = vld [vmem:[%s210 + $0x1dc] sm:$0xf]
      %v301 = vld [vmem:[%s210 + $0x1e0] sm:$0xff]
      %v302 = vld [vmem:[%s210 + $0x1e8] sm:$0xff]
      %v303 = vld [vmem:[%s210 + $0x1f0] sm:$0xf]
      %v304 = vld [vmem:[%s210 + $0x1f4] sm:$0xff]
      %v305 = vld [vmem:[%s210 + $0x1fc] sm:$0xff]
      %v306 = vld [vmem:[%s210 + $0x204] sm:$0xf]
      %v307 = vld [vmem:[%s210 + $0x208] sm:$0xff]
      %v308 = vld [vmem:[%s210 + $0x210] sm:$0xff]
      %v309 = vld [vmem:[%s210 + $0x218] sm:$0xf]
      %v310 = vld [vmem:[%s210 + $0x21c] sm:$0xff]
      %v311 = vld [vmem:[%s210 + $0x224] sm:$0xff]
      %v312 = vld [vmem:[%s210 + $0x22c] sm:$0xf]
      %v313 = vld [vmem:[%s210 + $0x230] sm:$0xff]
      %v314 = vld [vmem:[%s210 + $0x238] sm:$0xff]
      %v315 = vld [vmem:[%s210 + $0x240] sm:$0xf]
      %v316 = vld [vmem:[%s210 + $0x244] sm:$0xff]
      %v317 = vld [vmem:[%s210 + $0x24c] sm:$0xff]
      %v318 = vld [vmem:[%s210 + $0x254] sm:$0xf]
      %v319 = vld [vmem:[%s210 + $0x258] sm:$0xff]
      %v320 = vld [vmem:[%s210 + $0x260] sm:$0xff]
      %v321 = vld [vmem:[%s210 + $0x268] sm:$0xf]
      %v322 = vld [vmem:[%s210 + $0x26c] sm:$0xff]
      %v323 = vld [vmem:[%s210 + $0x274] sm:$0xff]
      %v324 = vld [vmem:[%s210 + $0x27c] sm:$0xf]
      %v325 = vld [vmem:[%s215] sm:$0xf]
      %v326 = vld [vmem:[%s215 + $0x4] sm:$0xf]
      %v327 = vld [vmem:[%s215 + $0x8] sm:$0xf]
      %v328 = vld [vmem:[%s215 + $0xc] sm:$0xf]
      %v329 = vld [vmem:[%s215 + $0x10] sm:$0xf]
      %v330 = vld [vmem:[%s215 + $0x14] sm:$0xf]
      %v331 = vld [vmem:[%s215 + $0x18] sm:$0xf]
      %v332 = vld [vmem:[%s215 + $0x1c] sm:$0xf]
      %v333 = vld [vmem:[%s215 + $0x20] sm:$0xf]
      %v334 = vld [vmem:[%s215 + $0x24] sm:$0xf]
      %v335 = vld [vmem:[%s215 + $0x28] sm:$0xf]
      %v336 = vld [vmem:[%s215 + $0x2c] sm:$0xf]
      %v337 = vld [vmem:[%s215 + $0x30] sm:$0xf]
      %v338 = vld [vmem:[%s215 + $0x34] sm:$0xf]
      %v339 = vld [vmem:[%s215 + $0x38] sm:$0xf]
      %v340 = vld [vmem:[%s215 + $0x3c] sm:$0xf]
      %v341 = vld [vmem:[%s215 + $0x40] sm:$0xf]
      %v342 = vld [vmem:[%s215 + $0x44] sm:$0xf]
      %v343 = vld [vmem:[%s215 + $0x48] sm:$0xf]
      %v344 = vld [vmem:[%s215 + $0x4c] sm:$0xf]
      %v345 = vld [vmem:[%s215 + $0x50] sm:$0xf]
      %v346 = vld [vmem:[%s215 + $0x54] sm:$0xf]
      %v347 = vld [vmem:[%s215 + $0x58] sm:$0xf]
      %v348 = vld [vmem:[%s215 + $0x5c] sm:$0xf]
      %v349 = vld [vmem:[%s215 + $0x60] sm:$0xf]
      %v350 = vld [vmem:[%s215 + $0x64] sm:$0xf]
      %v351 = vld [vmem:[%s215 + $0x68] sm:$0xf]
      %v352 = vld [vmem:[%s215 + $0x6c] sm:$0xf]
      %v353 = vld [vmem:[%s215 + $0x70] sm:$0xf]
      %v354 = vld [vmem:[%s215 + $0x74] sm:$0xf]
      %v355 = vld [vmem:[%s215 + $0x78] sm:$0xf]
      %v356 = vld [vmem:[%s215 + $0x7c] sm:$0xf]
      %v357 = vld [vmem:[%s215 + $0x80] sm:$0xf]
      %v358 = vld [vmem:[%s215 + $0x84] sm:$0xf]
      %v359 = vld [vmem:[%s215 + $0x88] sm:$0xf]
      %v360 = vld [vmem:[%s215 + $0x8c] sm:$0xf]
      %v361 = vld [vmem:[%s215 + $0x90] sm:$0xf]
      %v362 = vld [vmem:[%s215 + $0x94] sm:$0xf]
      %v363 = vld [vmem:[%s215 + $0x98] sm:$0xf]
      %v364 = vld [vmem:[%s215 + $0x9c] sm:$0xf]
      %v365 = vld [vmem:[%s215 + $0xa0] sm:$0xf]
      %v366 = vld [vmem:[%s215 + $0xa4] sm:$0xf]
      %v367 = vld [vmem:[%s215 + $0xa8] sm:$0xf]
      %v368 = vld [vmem:[%s215 + $0xac] sm:$0xf]
      %v369 = vld [vmem:[%s215 + $0xb0] sm:$0xf]
      %v370 = vld [vmem:[%s215 + $0xb4] sm:$0xf]
      %v371 = vld [vmem:[%s215 + $0xb8] sm:$0xf]
      %v372 = vld [vmem:[%s215 + $0xbc] sm:$0xf]
      %v373 = vld [vmem:[%s215 + $0xc0] sm:$0xf]
      %v374 = vld [vmem:[%s215 + $0xc4] sm:$0xf]
      %v375 = vld [vmem:[%s215 + $0xc8] sm:$0xf]
      %v376 = vld [vmem:[%s215 + $0xcc] sm:$0xf]
      %v377 = vld [vmem:[%s215 + $0xd0] sm:$0xf]
      %v378 = vld [vmem:[%s215 + $0xd4] sm:$0xf]
      %v379 = vld [vmem:[%s215 + $0xd8] sm:$0xf]
      %v380 = vld [vmem:[%s215 + $0xdc] sm:$0xf]
      %v381 = vld [vmem:[%s215 + $0xe0] sm:$0xf]
      %v382 = vld [vmem:[%s215 + $0xe4] sm:$0xf]
      %v383 = vld [vmem:[%s215 + $0xe8] sm:$0xf]
      %v384 = vld [vmem:[%s215 + $0xec] sm:$0xf]
      %v385 = vld [vmem:[%s215 + $0xf0] sm:$0xf]
      %v386 = vld [vmem:[%s215 + $0xf4] sm:$0xf]
      %v387 = vld [vmem:[%s215 + $0xf8] sm:$0xf]
      %v388 = vld [vmem:[%s215 + $0xfc] sm:$0xf]
      %v389 = vld [vmem:[%s215 + $0x100] sm:$0xf]
      %v390 = vld [vmem:[%s215 + $0x104] sm:$0xf]
      %v391 = vld [vmem:[%s215 + $0x108] sm:$0xf]
      %v392 = vld [vmem:[%s215 + $0x10c] sm:$0xf]
      %v393 = vld [vmem:[%s215 + $0x110] sm:$0xf]
      %v394 = vld [vmem:[%s215 + $0x114] sm:$0xf]
      %v395 = vld [vmem:[%s215 + $0x118] sm:$0xf]
      %v396 = vld [vmem:[%s215 + $0x11c] sm:$0xf]
      %v397 = vld [vmem:[%s215 + $0x120] sm:$0xf]
      %v398 = vld [vmem:[%s215 + $0x124] sm:$0xf]
      %v399 = vld [vmem:[%s215 + $0x128] sm:$0xf]
      %v400 = vld [vmem:[%s215 + $0x12c] sm:$0xf]
      %v401 = vld [vmem:[%s215 + $0x130] sm:$0xf]
      %v402 = vld [vmem:[%s215 + $0x134] sm:$0xf]
      %v403 = vld [vmem:[%s215 + $0x138] sm:$0xf]
      %v404 = vld [vmem:[%s215 + $0x13c] sm:$0xf]
      %v405 = vld [vmem:[%s218] sm:$0x1]
      %v407 = vlaneseq
      %v408 = vshrl.u32 %v407, 7
      %v409 = vsub.s32 0, %v408
      %v410 = vrot.slane %v405, %v409
      %v508 = vunpack.c.l.b16 %v229
      %v509 = vunpack.c.h.b16 %v229
      %v510 = vunpack.c.l.b16 %v230
      %v511 = vunpack.c.h.b16 %v230
      %v512 = vunpack.c.l.b16 %v231
      %v513 = vunpack.c.l.b16 %v232
      %v514 = vunpack.c.h.b16 %v232
      %v515 = vunpack.c.l.b16 %v233
      %v516 = vunpack.c.h.b16 %v233
      %v517 = vunpack.c.l.b16 %v234
      %v518 = vunpack.c.l.b16 %v235
      %v519 = vunpack.c.h.b16 %v235
      %v520 = vunpack.c.l.b16 %v236
      %v521 = vunpack.c.h.b16 %v236
      %v522 = vunpack.c.l.b16 %v237
      %v523 = vunpack.c.l.b16 %v238
      %v524 = vunpack.c.h.b16 %v238
      %v525 = vunpack.c.l.b16 %v239
      %v526 = vunpack.c.h.b16 %v239
      %v527 = vunpack.c.l.b16 %v240
      %v528 = vunpack.c.l.b16 %v241
      %v529 = vunpack.c.h.b16 %v241
      %v530 = vunpack.c.l.b16 %v242
      %v531 = vunpack.c.h.b16 %v242
      %v532 = vunpack.c.l.b16 %v243
      %v533 = vunpack.c.l.b16 %v244
      %v534 = vunpack.c.h.b16 %v244
      %v535 = vunpack.c.l.b16 %v245
      %v536 = vunpack.c.h.b16 %v245
      %v537 = vunpack.c.l.b16 %v246
      %v538 = vunpack.c.l.b16 %v247
      %v539 = vunpack.c.h.b16 %v247
      %v540 = vunpack.c.l.b16 %v248
      %v541 = vunpack.c.h.b16 %v248
      %v542 = vunpack.c.l.b16 %v249
      %v543 = vunpack.c.l.b16 %v250
      %v544 = vunpack.c.h.b16 %v250
      %v545 = vunpack.c.l.b16 %v251
      %v546 = vunpack.c.h.b16 %v251
      %v547 = vunpack.c.l.b16 %v252
      %v548 = vunpack.c.l.b16 %v253
      %v549 = vunpack.c.h.b16 %v253
      %v550 = vunpack.c.l.b16 %v254
      %v551 = vunpack.c.h.b16 %v254
      %v552 = vunpack.c.l.b16 %v255
      %v553 = vunpack.c.l.b16 %v256
      %v554 = vunpack.c.h.b16 %v256
      %v555 = vunpack.c.l.b16 %v257
      %v556 = vunpack.c.h.b16 %v257
      %v557 = vunpack.c.l.b16 %v258
      %v558 = vunpack.c.l.b16 %v259
      %v559 = vunpack.c.h.b16 %v259
      %v560 = vunpack.c.l.b16 %v260
      %v561 = vunpack.c.h.b16 %v260
      %v562 = vunpack.c.l.b16 %v261
      %v563 = vunpack.c.l.b16 %v262
      %v564 = vunpack.c.h.b16 %v262
      %v565 = vunpack.c.l.b16 %v263
      %v566 = vunpack.c.h.b16 %v263
      %v567 = vunpack.c.l.b16 %v264
      %v568 = vunpack.c.l.b16 %v265
      %v569 = vunpack.c.h.b16 %v265
      %v570 = vunpack.c.l.b16 %v266
      %v571 = vunpack.c.h.b16 %v266
      %v572 = vunpack.c.l.b16 %v267
      %v573 = vunpack.c.l.b16 %v268
      %v574 = vunpack.c.h.b16 %v268
      %v575 = vunpack.c.l.b16 %v269
      %v576 = vunpack.c.h.b16 %v269
      %v577 = vunpack.c.l.b16 %v270
      %v578 = vunpack.c.l.b16 %v271
      %v579 = vunpack.c.h.b16 %v271
      %v580 = vunpack.c.l.b16 %v272
      %v581 = vunpack.c.h.b16 %v272
      %v582 = vunpack.c.l.b16 %v273
      %v583 = vunpack.c.l.b16 %v274
      %v584 = vunpack.c.h.b16 %v274
      %v585 = vunpack.c.l.b16 %v275
      %v586 = vunpack.c.h.b16 %v275
      %v587 = vunpack.c.l.b16 %v276
      %v588 = vunpack.c.l.b16 %v277
      %v589 = vunpack.c.h.b16 %v277
      %v590 = vunpack.c.l.b16 %v278
      %v591 = vunpack.c.h.b16 %v278
      %v592 = vunpack.c.l.b16 %v279
      %v593 = vunpack.c.l.b16 %v280
      %v594 = vunpack.c.h.b16 %v280
      %v595 = vunpack.c.l.b16 %v281
      %v596 = vunpack.c.h.b16 %v281
      %v597 = vunpack.c.l.b16 %v282
      %v598 = vunpack.c.l.b16 %v283
      %v599 = vunpack.c.h.b16 %v283
      %v600 = vunpack.c.l.b16 %v284
      %v601 = vunpack.c.h.b16 %v284
      %v602 = vunpack.c.l.b16 %v285
      %v603 = vunpack.c.l.b16 %v286
      %v604 = vunpack.c.h.b16 %v286
      %v605 = vunpack.c.l.b16 %v287
      %v606 = vunpack.c.h.b16 %v287
      %v607 = vunpack.c.l.b16 %v288
      %v608 = vunpack.c.l.b16 %v289
      %v609 = vunpack.c.h.b16 %v289
      %v610 = vunpack.c.l.b16 %v290
      %v611 = vunpack.c.h.b16 %v290
      %v612 = vunpack.c.l.b16 %v291
      %v613 = vunpack.c.l.b16 %v292
      %v614 = vunpack.c.h.b16 %v292
      %v615 = vunpack.c.l.b16 %v293
      %v616 = vunpack.c.h.b16 %v293
      %v617 = vunpack.c.l.b16 %v294
      %v618 = vunpack.c.l.b16 %v295
      %v619 = vunpack.c.h.b16 %v295
      %v620 = vunpack.c.l.b16 %v296
      %v621 = vunpack.c.h.b16 %v296
      %v622 = vunpack.c.l.b16 %v297
      %v623 = vunpack.c.l.b16 %v298
      %v624 = vunpack.c.h.b16 %v298
      %v625 = vunpack.c.l.b16 %v299
      %v626 = vunpack.c.h.b16 %v299
      %v627 = vunpack.c.l.b16 %v300
      %v628 = vunpack.c.l.b16 %v301
      %v629 = vunpack.c.h.b16 %v301
      %v630 = vunpack.c.l.b16 %v302
      %v631 = vunpack.c.h.b16 %v302
      %v632 = vunpack.c.l.b16 %v303
      %v633 = vunpack.c.l.b16 %v304
      %v634 = vunpack.c.h.b16 %v304
      %v635 = vunpack.c.l.b16 %v305
      %v636 = vunpack.c.h.b16 %v305
      %v637 = vunpack.c.l.b16 %v306
      %v638 = vunpack.c.l.b16 %v307
      %v639 = vunpack.c.h.b16 %v307
      %v640 = vunpack.c.l.b16 %v308
      %v641 = vunpack.c.h.b16 %v308
      %v642 = vunpack.c.l.b16 %v309
      %v643 = vunpack.c.l.b16 %v310
      %v644 = vunpack.c.h.b16 %v310
      %v645 = vunpack.c.l.b16 %v311
      %v646 = vunpack.c.h.b16 %v311
      %v647 = vunpack.c.l.b16 %v312
      %v648 = vunpack.c.l.b16 %v313
      %v649 = vunpack.c.h.b16 %v313
      %v650 = vunpack.c.l.b16 %v314
      %v651 = vunpack.c.h.b16 %v314
      %v652 = vunpack.c.l.b16 %v315
      %v653 = vunpack.c.l.b16 %v316
      %v654 = vunpack.c.h.b16 %v316
      %v655 = vunpack.c.l.b16 %v317
      %v656 = vunpack.c.h.b16 %v317
      %v657 = vunpack.c.l.b16 %v318
      %v658 = vunpack.c.l.b16 %v319
      %v659 = vunpack.c.h.b16 %v319
      %v660 = vunpack.c.l.b16 %v320
      %v661 = vunpack.c.h.b16 %v320
      %v662 = vunpack.c.l.b16 %v321
      %v663 = vunpack.c.l.b16 %v322
      %v664 = vunpack.c.h.b16 %v322
      %v665 = vunpack.c.l.b16 %v323
      %v666 = vunpack.c.h.b16 %v323
      %v667 = vunpack.c.l.b16 %v324
      %v668 = vpack.c.b16 %v513, %v508
      %v669 = vpack.c.b16 %v514, %v509
      %v670 = vpack.c.b16 %v515, %v510
      %v671 = vpack.c.b16 %v516, %v511
      %v672 = vpack.c.b16 %v517, %v512
      %v673 = vpack.c.b16 %v523, %v518
      %v674 = vpack.c.b16 %v524, %v519
      %v675 = vpack.c.b16 %v525, %v520
      %v676 = vpack.c.b16 %v526, %v521
      %v677 = vpack.c.b16 %v527, %v522
      %v678 = vpack.c.b16 %v533, %v528
      %v679 = vpack.c.b16 %v534, %v529
      %v680 = vpack.c.b16 %v535, %v530
      %v681 = vpack.c.b16 %v536, %v531
      %v682 = vpack.c.b16 %v537, %v532
      %v683 = vpack.c.b16 %v543, %v538
      %v684 = vpack.c.b16 %v544, %v539
      %v685 = vpack.c.b16 %v545, %v540
      %v686 = vpack.c.b16 %v546, %v541
      %v687 = vpack.c.b16 %v547, %v542
      %v688 = vpack.c.b16 %v553, %v548
      %v689 = vpack.c.b16 %v554, %v549
      %v690 = vpack.c.b16 %v555, %v550
      %v691 = vpack.c.b16 %v556, %v551
      %v692 = vpack.c.b16 %v557, %v552
      %v693 = vpack.c.b16 %v563, %v558
      %v694 = vpack.c.b16 %v564, %v559
      %v695 = vpack.c.b16 %v565, %v560
      %v696 = vpack.c.b16 %v566, %v561
      %v697 = vpack.c.b16 %v567, %v562
      %v698 = vpack.c.b16 %v573, %v568
      %v699 = vpack.c.b16 %v574, %v569
      %v700 = vpack.c.b16 %v575, %v570
      %v701 = vpack.c.b16 %v576, %v571
      %v702 = vpack.c.b16 %v577, %v572
      %v703 = vpack.c.b16 %v583, %v578
      %v704 = vpack.c.b16 %v584, %v579
      %v705 = vpack.c.b16 %v585, %v580
      %v706 = vpack.c.b16 %v586, %v581
      %v707 = vpack.c.b16 %v587, %v582
      %v708 = vpack.c.b16 %v593, %v588
      %v709 = vpack.c.b16 %v594, %v589
      %v710 = vpack.c.b16 %v595, %v590
      %v711 = vpack.c.b16 %v596, %v591
      %v712 = vpack.c.b16 %v597, %v592
      %v713 = vpack.c.b16 %v603, %v598
      %v714 = vpack.c.b16 %v604, %v599
      %v715 = vpack.c.b16 %v605, %v600
      %v716 = vpack.c.b16 %v606, %v601
      %v717 = vpack.c.b16 %v607, %v602
      %v718 = vpack.c.b16 %v613, %v608
      %v719 = vpack.c.b16 %v614, %v609
      %v720 = vpack.c.b16 %v615, %v610
      %v721 = vpack.c.b16 %v616, %v611
      %v722 = vpack.c.b16 %v617, %v612
      %v723 = vpack.c.b16 %v623, %v618
      %v724 = vpack.c.b16 %v624, %v619
      %v725 = vpack.c.b16 %v625, %v620
      %v726 = vpack.c.b16 %v626, %v621
      %v727 = vpack.c.b16 %v627, %v622
      %v728 = vpack.c.b16 %v633, %v628
      %v729 = vpack.c.b16 %v634, %v629
      %v730 = vpack.c.b16 %v635, %v630
      %v731 = vpack.c.b16 %v636, %v631
      %v732 = vpack.c.b16 %v637, %v632
      %v733 = vpack.c.b16 %v643, %v638
      %v734 = vpack.c.b16 %v644, %v639
      %v735 = vpack.c.b16 %v645, %v640
      %v736 = vpack.c.b16 %v646, %v641
      %v737 = vpack.c.b16 %v647, %v642
      %v738 = vpack.c.b16 %v653, %v648
      %v739 = vpack.c.b16 %v654, %v649
      %v740 = vpack.c.b16 %v655, %v650
      %v741 = vpack.c.b16 %v656, %v651
      %v742 = vpack.c.b16 %v657, %v652
      %v743 = vpack.c.b16 %v663, %v658
      %v744 = vpack.c.b16 %v664, %v659
      %v745 = vpack.c.b16 %v665, %v660
      %v746 = vpack.c.b16 %v666, %v661
      %v747 = vpack.c.b16 %v667, %v662
      %v908 = vunpack.c.l.b16 %v325
      %v909 = vunpack.c.l.b16 %v326
      %v910 = vunpack.c.l.b16 %v327
      %v911 = vunpack.c.l.b16 %v328
      %v912 = vunpack.c.l.b16 %v329
      %v913 = vunpack.c.l.b16 %v330
      %v914 = vunpack.c.l.b16 %v331
      %v915 = vunpack.c.l.b16 %v332
      %v916 = vunpack.c.l.b16 %v333
      %v917 = vunpack.c.l.b16 %v334
      %v918 = vunpack.c.l.b16 %v335
      %v919 = vunpack.c.l.b16 %v336
      %v920 = vunpack.c.l.b16 %v337
      %v921 = vunpack.c.l.b16 %v338
      %v922 = vunpack.c.l.b16 %v339
      %v923 = vunpack.c.l.b16 %v340
      %v924 = vunpack.c.l.b16 %v341
      %v925 = vunpack.c.l.b16 %v342
      %v926 = vunpack.c.l.b16 %v343
      %v927 = vunpack.c.l.b16 %v344
      %v928 = vunpack.c.l.b16 %v345
      %v929 = vunpack.c.l.b16 %v346
      %v930 = vunpack.c.l.b16 %v347
      %v931 = vunpack.c.l.b16 %v348
      %v932 = vunpack.c.l.b16 %v349
      %v933 = vunpack.c.l.b16 %v350
      %v934 = vunpack.c.l.b16 %v351
      %v935 = vunpack.c.l.b16 %v352
      %v936 = vunpack.c.l.b16 %v353
      %v937 = vunpack.c.l.b16 %v354
      %v938 = vunpack.c.l.b16 %v355
      %v939 = vunpack.c.l.b16 %v356
      %v940 = vunpack.c.l.b16 %v357
      %v941 = vunpack.c.l.b16 %v358
      %v942 = vunpack.c.l.b16 %v359
      %v943 = vunpack.c.l.b16 %v360
      %v944 = vunpack.c.l.b16 %v361
      %v945 = vunpack.c.l.b16 %v362
      %v946 = vunpack.c.l.b16 %v363
      %v947 = vunpack.c.l.b16 %v364
      %v948 = vunpack.c.l.b16 %v365
      %v949 = vunpack.c.l.b16 %v366
      %v950 = vunpack.c.l.b16 %v367
      %v951 = vunpack.c.l.b16 %v368
      %v952 = vunpack.c.l.b16 %v369
      %v953 = vunpack.c.l.b16 %v370
      %v954 = vunpack.c.l.b16 %v371
      %v955 = vunpack.c.l.b16 %v372
      %v956 = vunpack.c.l.b16 %v373
      %v957 = vunpack.c.l.b16 %v374
      %v958 = vunpack.c.l.b16 %v375
      %v959 = vunpack.c.l.b16 %v376
      %v960 = vunpack.c.l.b16 %v377
      %v961 = vunpack.c.l.b16 %v378
      %v962 = vunpack.c.l.b16 %v379
      %v963 = vunpack.c.l.b16 %v380
      %v964 = vunpack.c.l.b16 %v381
      %v965 = vunpack.c.l.b16 %v382
      %v966 = vunpack.c.l.b16 %v383
      %v967 = vunpack.c.l.b16 %v384
      %v968 = vunpack.c.l.b16 %v385
      %v969 = vunpack.c.l.b16 %v386
      %v970 = vunpack.c.l.b16 %v387
      %v971 = vunpack.c.l.b16 %v388
      %v972 = vunpack.c.l.b16 %v389
      %v973 = vunpack.c.l.b16 %v390
      %v974 = vunpack.c.l.b16 %v391
      %v975 = vunpack.c.l.b16 %v392
      %v976 = vunpack.c.l.b16 %v393
      %v977 = vunpack.c.l.b16 %v394
      %v978 = vunpack.c.l.b16 %v395
      %v979 = vunpack.c.l.b16 %v396
      %v980 = vunpack.c.l.b16 %v397
      %v981 = vunpack.c.l.b16 %v398
      %v982 = vunpack.c.l.b16 %v399
      %v983 = vunpack.c.l.b16 %v400
      %v984 = vunpack.c.l.b16 %v401
      %v985 = vunpack.c.l.b16 %v402
      %v986 = vunpack.c.l.b16 %v403
      %v987 = vunpack.c.l.b16 %v404
      %v988 = vpack.c.b16 %v909, %v908
      %v989 = vpack.c.b16 %v911, %v910
      %v990 = vpack.c.b16 %v913, %v912
      %v991 = vpack.c.b16 %v915, %v914
      %v992 = vpack.c.b16 %v917, %v916
      %v993 = vpack.c.b16 %v919, %v918
      %v994 = vpack.c.b16 %v921, %v920
      %v995 = vpack.c.b16 %v923, %v922
      %v996 = vpack.c.b16 %v925, %v924
      %v997 = vpack.c.b16 %v927, %v926
      %v998 = vpack.c.b16 %v929, %v928
      %v999 = vpack.c.b16 %v931, %v930
      %v1000 = vpack.c.b16 %v933, %v932
      %v1001 = vpack.c.b16 %v935, %v934
      %v1002 = vpack.c.b16 %v937, %v936
      %v1003 = vpack.c.b16 %v939, %v938
      %v1004 = vpack.c.b16 %v941, %v940
      %v1005 = vpack.c.b16 %v943, %v942
      %v1006 = vpack.c.b16 %v945, %v944
      %v1007 = vpack.c.b16 %v947, %v946
      %v1008 = vpack.c.b16 %v949, %v948
      %v1009 = vpack.c.b16 %v951, %v950
      %v1010 = vpack.c.b16 %v953, %v952
      %v1011 = vpack.c.b16 %v955, %v954
      %v1012 = vpack.c.b16 %v957, %v956
      %v1013 = vpack.c.b16 %v959, %v958
      %v1014 = vpack.c.b16 %v961, %v960
      %v1015 = vpack.c.b16 %v963, %v962
      %v1016 = vpack.c.b16 %v965, %v964
      %v1017 = vpack.c.b16 %v967, %v966
      %v1018 = vpack.c.b16 %v969, %v968
      %v1019 = vpack.c.b16 %v971, %v970
      %v1020 = vpack.c.b16 %v973, %v972
      %v1021 = vpack.c.b16 %v975, %v974
      %v1022 = vpack.c.b16 %v977, %v976
      %v1023 = vpack.c.b16 %v979, %v978
      %v1024 = vpack.c.b16 %v981, %v980
      %v1025 = vpack.c.b16 %v983, %v982
      %v1026 = vpack.c.b16 %v985, %v984
      %v1027 = vpack.c.b16 %v987, %v986
      %1068 = vmatprep.subr.bf16.mxu0 0
      %1069 = vmatpush1.bf16.msra.mxu0 %v995
      %1070 = vmatprep.subr.bf16.mxu0 0
      %1071 = vmatpush1.bf16.msra.mxu0 %v994
      %1072 = vmatprep.subr.bf16.mxu0 0
      %1073 = vmatpush1.bf16.msra.mxu0 %v993
      %1074 = vmatprep.subr.bf16.mxu0 0
      %1075 = vmatpush1.bf16.msra.mxu0 %v992
      %1076 = vmatprep.subr.bf16.mxu0 0
      %1077 = vmatpush1.bf16.msra.mxu0 %v991
      %1078 = vmatprep.subr.bf16.mxu0 0
      %1079 = vmatpush1.bf16.msra.mxu0 %v990
      %1080 = vmatprep.subr.bf16.mxu0 0
      %1081 = vmatpush1.bf16.msra.mxu0 %v989
      %1082 = vmatprep.subr.bf16.mxu0 0
      %1083 = vmatpush1.bf16.msra.mxu0 %v988
      %1084 = vmatprep.subr.bf16.mxu0 0
      %1085 = vmatpush2.bf16.msra.mxu0 %v1003
      %1086 = vmatprep.subr.bf16.mxu0 0
      %1087 = vmatpush2.bf16.msra.mxu0 %v1002
      %1088 = vmatprep.subr.bf16.mxu0 0
      %1089 = vmatpush2.bf16.msra.mxu0 %v1001
      %1090 = vmatprep.subr.bf16.mxu0 0
      %1091 = vmatpush2.bf16.msra.mxu0 %v1000
      %1092 = vmatprep.subr.bf16.mxu0 0
      %1093 = vmatpush2.bf16.msra.mxu0 %v999
      %1094 = vmatprep.subr.bf16.mxu0 0
      %1095 = vmatpush2.bf16.msra.mxu0 %v998
      %1096 = vmatprep.subr.bf16.mxu0 0
      %1097 = vmatpush2.bf16.msra.mxu0 %v997
      %1098 = vmatprep.subr.bf16.mxu0 0
      %1099 = vmatpush2.bf16.msra.mxu0 %v996
      %1100 = vmatprep.mubr.bf16.mxu0 %v669
      %1101 = vmatmul.mubr.bf16.gmra.mxu0 %v668
      %v1102 = vpop.f32.mrf.mxu0
      %v1103 = vadd.f32 %v410, %v1102
      %v1104 = vpop.f32.mrf.mxu0
      %v1105 = vpop.f32.mrf.mxu0
      %v1106 = vadd.f32 %v410, %v1105
      %v1107 = vpop.f32.mrf.mxu0
      %1108 = vmatprep.mubr.bf16.mxu0 %v674
      %1109 = vmatmul.mubr.bf16.gmra.mxu0 %v673
      %v1110 = vpop.f32.mrf.mxu0
      %v1111 = vadd.f32 %v410, %v1110
      %v1112 = vpop.f32.mrf.mxu0
      %v1113 = vpop.f32.mrf.mxu0
      %v1114 = vadd.f32 %v410, %v1113
      %v1115 = vpop.f32.mrf.mxu0
      %1116 = vmatprep.mubr.bf16.mxu0 %v679
      %1117 = vmatmul.mubr.bf16.gmra.mxu0 %v678
      %v1118 = vpop.f32.mrf.mxu0
      %v1119 = vadd.f32 %v410, %v1118
      %v1120 = vpop.f32.mrf.mxu0
      %v1121 = vpop.f32.mrf.mxu0
      %v1122 = vadd.f32 %v410, %v1121
      %v1123 = vpop.f32.mrf.mxu0
      %1124 = vmatprep.mubr.bf16.mxu0 %v684
      %1125 = vmatmul.mubr.bf16.gmra.mxu0 %v683
      %v1126 = vpop.f32.mrf.mxu0
      %v1127 = vadd.f32 %v410, %v1126
      %v1128 = vpop.f32.mrf.mxu0
      %v1129 = vpop.f32.mrf.mxu0
      %v1130 = vadd.f32 %v410, %v1129
      %v1131 = vpop.f32.mrf.mxu0
      %1132 = vmatprep.mubr.bf16.mxu0 %v689
      %1133 = vmatmul.mubr.bf16.gmra.mxu0 %v688
      %v1134 = vpop.f32.mrf.mxu0
      %v1135 = vadd.f32 %v410, %v1134
      %v1136 = vpop.f32.mrf.mxu0
      %v1137 = vpop.f32.mrf.mxu0
      %v1138 = vadd.f32 %v410, %v1137
      %v1139 = vpop.f32.mrf.mxu0
      %1140 = vmatprep.mubr.bf16.mxu0 %v694
      %1141 = vmatmul.mubr.bf16.gmra.mxu0 %v693
      %v1142 = vpop.f32.mrf.mxu0
      %v1143 = vadd.f32 %v410, %v1142
      %v1144 = vpop.f32.mrf.mxu0
      %v1145 = vpop.f32.mrf.mxu0
      %v1146 = vadd.f32 %v410, %v1145
      %v1147 = vpop.f32.mrf.mxu0
      %1148 = vmatprep.mubr.bf16.mxu0 %v699
      %1149 = vmatmul.mubr.bf16.gmra.mxu0 %v698
      %v1150 = vpop.f32.mrf.mxu0
      %v1151 = vadd.f32 %v410, %v1150
      %v1152 = vpop.f32.mrf.mxu0
      %v1153 = vpop.f32.mrf.mxu0
      %v1154 = vadd.f32 %v410, %v1153
      %v1155 = vpop.f32.mrf.mxu0
      %1156 = vmatprep.mubr.bf16.mxu0 %v704
      %1157 = vmatmul.mubr.bf16.gmra.mxu0 %v703
      %v1158 = vpop.f32.mrf.mxu0
      %v1159 = vadd.f32 %v410, %v1158
      %v1160 = vpop.f32.mrf.mxu0
      %v1161 = vpop.f32.mrf.mxu0
      %v1162 = vadd.f32 %v410, %v1161
      %v1163 = vpop.f32.mrf.mxu0
      %1164 = vmatprep.mubr.bf16.mxu0 %v709
      %1165 = vmatmul.mubr.bf16.gmra.mxu0 %v708
      %v1166 = vpop.f32.mrf.mxu0
      %v1167 = vadd.f32 %v410, %v1166
      %v1168 = vpop.f32.mrf.mxu0
      %v1169 = vpop.f32.mrf.mxu0
      %v1170 = vadd.f32 %v410, %v1169
      %v1171 = vpop.f32.mrf.mxu0
      %1172 = vmatprep.mubr.bf16.mxu0 %v714
      %1173 = vmatmul.mubr.bf16.gmra.mxu0 %v713
      %v1174 = vpop.f32.mrf.mxu0
      %v1175 = vadd.f32 %v410, %v1174
      %v1176 = vpop.f32.mrf.mxu0
      %v1177 = vpop.f32.mrf.mxu0
      %v1178 = vadd.f32 %v410, %v1177
      %v1179 = vpop.f32.mrf.mxu0
      %1180 = vmatprep.mubr.bf16.mxu0 %v719
      %1181 = vmatmul.mubr.bf16.gmra.mxu0 %v718
      %v1182 = vpop.f32.mrf.mxu0
      %v1183 = vadd.f32 %v410, %v1182
      %v1184 = vpop.f32.mrf.mxu0
      %v1185 = vpop.f32.mrf.mxu0
      %v1186 = vadd.f32 %v410, %v1185
      %v1187 = vpop.f32.mrf.mxu0
      %1188 = vmatprep.mubr.bf16.mxu0 %v724
      %1189 = vmatmul.mubr.bf16.gmra.mxu0 %v723
      %v1190 = vpop.f32.mrf.mxu0
      %v1191 = vadd.f32 %v410, %v1190
      %v1192 = vpop.f32.mrf.mxu0
      %v1193 = vpop.f32.mrf.mxu0
      %v1194 = vadd.f32 %v410, %v1193
      %v1195 = vpop.f32.mrf.mxu0
      %1196 = vmatprep.mubr.bf16.mxu0 %v729
      %1197 = vmatmul.mubr.bf16.gmra.mxu0 %v728
      %v1198 = vpop.f32.mrf.mxu0
      %v1199 = vadd.f32 %v410, %v1198
      %v1200 = vpop.f32.mrf.mxu0
      %v1201 = vpop.f32.mrf.mxu0
      %v1202 = vadd.f32 %v410, %v1201
      %v1203 = vpop.f32.mrf.mxu0
      %1204 = vmatprep.mubr.bf16.mxu0 %v734
      %1205 = vmatmul.mubr.bf16.gmra.mxu0 %v733
      %v1206 = vpop.f32.mrf.mxu0
      %v1207 = vadd.f32 %v410, %v1206
      %v1208 = vpop.f32.mrf.mxu0
      %v1209 = vpop.f32.mrf.mxu0
      %v1210 = vadd.f32 %v410, %v1209
      %v1211 = vpop.f32.mrf.mxu0
      %1212 = vmatprep.mubr.bf16.mxu0 %v739
      %1213 = vmatmul.mubr.bf16.gmra.mxu0 %v738
      %v1214 = vpop.f32.mrf.mxu0
      %v1215 = vadd.f32 %v410, %v1214
      %v1216 = vpop.f32.mrf.mxu0
      %v1217 = vpop.f32.mrf.mxu0
      %v1218 = vadd.f32 %v410, %v1217
      %v1219 = vpop.f32.mrf.mxu0
      %1220 = vmatprep.mubr.bf16.mxu0 %v744
      %1221 = vmatmul.mubr.bf16.gmra.mxu0 %v743
      %v1222 = vpop.f32.mrf.mxu0
      %v1223 = vadd.f32 %v410, %v1222
      %v1224 = vpop.f32.mrf.mxu0
      %v1225 = vpop.f32.mrf.mxu0
      %v1226 = vadd.f32 %v410, %v1225
      %v1227 = vpop.f32.mrf.mxu0
      %1228 = vdwg.mxu0
      %1229 = vmatprep.subr.bf16.mxu0 0
      %1230 = vmatpush1.bf16.msra.mxu0 %v1011
      %1231 = vmatprep.subr.bf16.mxu0 0
      %1232 = vmatpush1.bf16.msra.mxu0 %v1010
      %1233 = vmatprep.subr.bf16.mxu0 0
      %1234 = vmatpush1.bf16.msra.mxu0 %v1009
      %1235 = vmatprep.subr.bf16.mxu0 0
      %1236 = vmatpush1.bf16.msra.mxu0 %v1008
      %1237 = vmatprep.subr.bf16.mxu0 0
      %1238 = vmatpush1.bf16.msra.mxu0 %v1007
      %1239 = vmatprep.subr.bf16.mxu0 0
      %1240 = vmatpush1.bf16.msra.mxu0 %v1006
      %1241 = vmatprep.subr.bf16.mxu0 0
      %1242 = vmatpush1.bf16.msra.mxu0 %v1005
      %1243 = vmatprep.subr.bf16.mxu0 0
      %1244 = vmatpush1.bf16.msra.mxu0 %v1004
      %1245 = vmatprep.subr.bf16.mxu0 0
      %1246 = vmatpush2.bf16.msra.mxu0 %v1019
      %1247 = vmatprep.subr.bf16.mxu0 0
      %1248 = vmatpush2.bf16.msra.mxu0 %v1018
      %1249 = vmatprep.subr.bf16.mxu0 0
      %1250 = vmatpush2.bf16.msra.mxu0 %v1017
      %1251 = vmatprep.subr.bf16.mxu0 0
      %1252 = vmatpush2.bf16.msra.mxu0 %v1016
      %1253 = vmatprep.subr.bf16.mxu0 0
      %1254 = vmatpush2.bf16.msra.mxu0 %v1015
      %1255 = vmatprep.subr.bf16.mxu0 0
      %1256 = vmatpush2.bf16.msra.mxu0 %v1014
      %1257 = vmatprep.subr.bf16.mxu0 0
      %1258 = vmatpush2.bf16.msra.mxu0 %v1013
      %1259 = vmatprep.subr.bf16.mxu0 0
      %1260 = vmatpush2.bf16.msra.mxu0 %v1012
      %1261 = vmatprep.mubr.bf16.mxu0 %v671
      %1262 = vmatmul.mubr.bf16.gmra.mxu0 %v670
      %v1263 = vpop.f32.mrf.mxu0
      %v1264 = vadd.f32 %v1103, %v1263
      %v1265 = vpop.f32.mrf.mxu0
      %v1266 = vpop.f32.mrf.mxu0
      %v1267 = vadd.f32 %v1106, %v1266
      %v1268 = vpop.f32.mrf.mxu0
      %1269 = vmatprep.mubr.bf16.mxu0 %v676
      %1270 = vmatmul.mubr.bf16.gmra.mxu0 %v675
      %v1271 = vpop.f32.mrf.mxu0
      %v1272 = vadd.f32 %v1111, %v1271
      %v1273 = vpop.f32.mrf.mxu0
      %v1274 = vpop.f32.mrf.mxu0
      %v1275 = vadd.f32 %v1114, %v1274
      %v1276 = vpop.f32.mrf.mxu0
      %1277 = vmatprep.mubr.bf16.mxu0 %v681
      %1278 = vmatmul.mubr.bf16.gmra.mxu0 %v680
      %v1279 = vpop.f32.mrf.mxu0
      %v1280 = vadd.f32 %v1119, %v1279
      %v1281 = vpop.f32.mrf.mxu0
      %v1282 = vpop.f32.mrf.mxu0
      %v1283 = vadd.f32 %v1122, %v1282
      %v1284 = vpop.f32.mrf.mxu0
      %1285 = vmatprep.mubr.bf16.mxu0 %v686
      %1286 = vmatmul.mubr.bf16.gmra.mxu0 %v685
      %v1287 = vpop.f32.mrf.mxu0
      %v1288 = vadd.f32 %v1127, %v1287
      %v1289 = vpop.f32.mrf.mxu0
      %v1290 = vpop.f32.mrf.mxu0
      %v1291 = vadd.f32 %v1130, %v1290
      %v1292 = vpop.f32.mrf.mxu0
      %1293 = vmatprep.mubr.bf16.mxu0 %v691
      %1294 = vmatmul.mubr.bf16.gmra.mxu0 %v690
      %v1295 = vpop.f32.mrf.mxu0
      %v1296 = vadd.f32 %v1135, %v1295
      %v1297 = vpop.f32.mrf.mxu0
      %v1298 = vpop.f32.mrf.mxu0
      %v1299 = vadd.f32 %v1138, %v1298
      %v1300 = vpop.f32.mrf.mxu0
      %1301 = vmatprep.mubr.bf16.mxu0 %v696
      %1302 = vmatmul.mubr.bf16.gmra.mxu0 %v695
      %v1303 = vpop.f32.mrf.mxu0
      %v1304 = vadd.f32 %v1143, %v1303
      %v1305 = vpop.f32.mrf.mxu0
      %v1306 = vpop.f32.mrf.mxu0
      %v1307 = vadd.f32 %v1146, %v1306
      %v1308 = vpop.f32.mrf.mxu0
      %1309 = vmatprep.mubr.bf16.mxu0 %v701
      %1310 = vmatmul.mubr.bf16.gmra.mxu0 %v700
      %v1311 = vpop.f32.mrf.mxu0
      %v1312 = vadd.f32 %v1151, %v1311
      %v1313 = vpop.f32.mrf.mxu0
      %v1314 = vpop.f32.mrf.mxu0
      %v1315 = vadd.f32 %v1154, %v1314
      %v1316 = vpop.f32.mrf.mxu0
      %1317 = vmatprep.mubr.bf16.mxu0 %v706
      %1318 = vmatmul.mubr.bf16.gmra.mxu0 %v705
      %v1319 = vpop.f32.mrf.mxu0
      %v1320 = vadd.f32 %v1159, %v1319
      %v1321 = vpop.f32.mrf.mxu0
      %v1322 = vpop.f32.mrf.mxu0
      %v1323 = vadd.f32 %v1162, %v1322
      %v1324 = vpop.f32.mrf.mxu0
      %1325 = vmatprep.mubr.bf16.mxu0 %v711
      %1326 = vmatmul.mubr.bf16.gmra.mxu0 %v710
      %v1327 = vpop.f32.mrf.mxu0
      %v1328 = vadd.f32 %v1167, %v1327
      %v1329 = vpop.f32.mrf.mxu0
      %v1330 = vpop.f32.mrf.mxu0
      %v1331 = vadd.f32 %v1170, %v1330
      %v1332 = vpop.f32.mrf.mxu0
      %1333 = vmatprep.mubr.bf16.mxu0 %v716
      %1334 = vmatmul.mubr.bf16.gmra.mxu0 %v715
      %v1335 = vpop.f32.mrf.mxu0
      %v1336 = vadd.f32 %v1175, %v1335
      %v1337 = vpop.f32.mrf.mxu0
      %v1338 = vpop.f32.mrf.mxu0
      %v1339 = vadd.f32 %v1178, %v1338
      %v1340 = vpop.f32.mrf.mxu0
      %1341 = vmatprep.mubr.bf16.mxu0 %v721
      %1342 = vmatmul.mubr.bf16.gmra.mxu0 %v720
      %v1343 = vpop.f32.mrf.mxu0
      %v1344 = vadd.f32 %v1183, %v1343
      %v1345 = vpop.f32.mrf.mxu0
      %v1346 = vpop.f32.mrf.mxu0
      %v1347 = vadd.f32 %v1186, %v1346
      %v1348 = vpop.f32.mrf.mxu0
      %1349 = vmatprep.mubr.bf16.mxu0 %v726
      %1350 = vmatmul.mubr.bf16.gmra.mxu0 %v725
      %v1351 = vpop.f32.mrf.mxu0
      %v1352 = vadd.f32 %v1191, %v1351
      %v1353 = vpop.f32.mrf.mxu0
      %v1354 = vpop.f32.mrf.mxu0
      %v1355 = vadd.f32 %v1194, %v1354
      %v1356 = vpop.f32.mrf.mxu0
      %1357 = vmatprep.mubr.bf16.mxu0 %v731
      %1358 = vmatmul.mubr.bf16.gmra.mxu0 %v730
      %v1359 = vpop.f32.mrf.mxu0
      %v1360 = vadd.f32 %v1199, %v1359
      %v1361 = vpop.f32.mrf.mxu0
      %v1362 = vpop.f32.mrf.mxu0
      %v1363 = vadd.f32 %v1202, %v1362
      %v1364 = vpop.f32.mrf.mxu0
      %1365 = vmatprep.mubr.bf16.mxu0 %v736
      %1366 = vmatmul.mubr.bf16.gmra.mxu0 %v735
      %v1367 = vpop.f32.mrf.mxu0
      %v1368 = vadd.f32 %v1207, %v1367
      %v1369 = vpop.f32.mrf.mxu0
      %v1370 = vpop.f32.mrf.mxu0
      %v1371 = vadd.f32 %v1210, %v1370
      %v1372 = vpop.f32.mrf.mxu0
      %1373 = vmatprep.mubr.bf16.mxu0 %v741
      %1374 = vmatmul.mubr.bf16.gmra.mxu0 %v740
      %v1375 = vpop.f32.mrf.mxu0
      %v1376 = vadd.f32 %v1215, %v1375
      %v1377 = vpop.f32.mrf.mxu0
      %v1378 = vpop.f32.mrf.mxu0
      %v1379 = vadd.f32 %v1218, %v1378
      %v1380 = vpop.f32.mrf.mxu0
      %1381 = vmatprep.mubr.bf16.mxu0 %v746
      %1382 = vmatmul.mubr.bf16.gmra.mxu0 %v745
      %v1383 = vpop.f32.mrf.mxu0
      %v1384 = vadd.f32 %v1223, %v1383
      %v1385 = vpop.f32.mrf.mxu0
      %v1386 = vpop.f32.mrf.mxu0
      %v1387 = vadd.f32 %v1226, %v1386
      %v1388 = vpop.f32.mrf.mxu0
      %1389 = vdwg.mxu0
      %1390 = vmatprep.subr.bf16.mxu0 0
      %1391 = vmatpush1.bf16.msra.mxu0 %v1027
      %1392 = vmatprep.subr.bf16.mxu0 0
      %1393 = vmatpush1.bf16.msra.mxu0 %v1026
      %1394 = vmatprep.subr.bf16.mxu0 0
      %1395 = vmatpush1.bf16.msra.mxu0 %v1025
      %1396 = vmatprep.subr.bf16.mxu0 0
      %1397 = vmatpush1.bf16.msra.mxu0 %v1024
      %1398 = vmatprep.subr.bf16.mxu0 0
      %1399 = vmatpush1.bf16.msra.mxu0 %v1023
      %1400 = vmatprep.subr.bf16.mxu0 0
      %1401 = vmatpush1.bf16.msra.mxu0 %v1022
      %1402 = vmatprep.subr.bf16.mxu0 0
      %1403 = vmatpush1.bf16.msra.mxu0 %v1021
      %1404 = vmatprep.subr.bf16.mxu0 0
      %1405 = vmatpush1.bf16.msra.mxu0 %v1020
      %1406 = vmatprep.subr.bf16.mxu0 0
      %1407 = vmatpush2.bf16.msra.mxu0 0
      %1408 = vmatprep.subr.bf16.mxu0 0
      %1409 = vmatpush2.bf16.msra.mxu0 0
      %1410 = vmatprep.subr.bf16.mxu0 0
      %1411 = vmatpush2.bf16.msra.mxu0 0
      %1412 = vmatprep.subr.bf16.mxu0 0
      %1413 = vmatpush2.bf16.msra.mxu0 0
      %1414 = vmatprep.subr.bf16.mxu0 0
      %1415 = vmatpush2.bf16.msra.mxu0 0
      %1416 = vmatprep.subr.bf16.mxu0 0
      %1417 = vmatpush2.bf16.msra.mxu0 0
      %1418 = vmatprep.subr.bf16.mxu0 0
      %1419 = vmatpush2.bf16.msra.mxu0 0
      %1420 = vmatprep.subr.bf16.mxu0 0
      %1421 = vmatpush2.bf16.msra.mxu0 0
      %1422 = vmatprep.mubr.bf16.mxu0 0
      %1423 = vmatmul.mubr.bf16.gmra.mxu0 %v672
      %v1424 = vpop.f32.mrf.mxu0
      %v1425 = vadd.f32 %v1264, %v1424
      %v1426 = vpop.f32.mrf.mxu0
      %v1427 = vpop.f32.mrf.mxu0
      %v1428 = vadd.f32 %v1267, %v1427
      %v1429 = vpop.f32.mrf.mxu0
      %1430 = vmatprep.mubr.bf16.mxu0 0
      %1431 = vmatmul.mubr.bf16.gmra.mxu0 %v677
      %v1432 = vpop.f32.mrf.mxu0
      %v1433 = vadd.f32 %v1272, %v1432
      %v1434 = vpop.f32.mrf.mxu0
      %v1435 = vpop.f32.mrf.mxu0
      %v1436 = vadd.f32 %v1275, %v1435
      %v1437 = vpop.f32.mrf.mxu0
      %1438 = vmatprep.mubr.bf16.mxu0 0
      %1439 = vmatmul.mubr.bf16.gmra.mxu0 %v682
      %v1440 = vpop.f32.mrf.mxu0
      %v1441 = vadd.f32 %v1280, %v1440
      %v1442 = vpop.f32.mrf.mxu0
      %v1443 = vpop.f32.mrf.mxu0
      %v1444 = vadd.f32 %v1283, %v1443
      %v1445 = vpop.f32.mrf.mxu0
      %1446 = vmatprep.mubr.bf16.mxu0 0
      %1447 = vmatmul.mubr.bf16.gmra.mxu0 %v687
      %v1448 = vpop.f32.mrf.mxu0
      %v1449 = vadd.f32 %v1288, %v1448
      %v1450 = vpop.f32.mrf.mxu0
      %v1451 = vpop.f32.mrf.mxu0
      %v1452 = vadd.f32 %v1291, %v1451
      %v1453 = vpop.f32.mrf.mxu0
      %1454 = vmatprep.mubr.bf16.mxu0 0
      %1455 = vmatmul.mubr.bf16.gmra.mxu0 %v692
      %v1456 = vpop.f32.mrf.mxu0
      %v1457 = vadd.f32 %v1296, %v1456
      %v1458 = vpop.f32.mrf.mxu0
      %v1459 = vpop.f32.mrf.mxu0
      %v1460 = vadd.f32 %v1299, %v1459
      %v1461 = vpop.f32.mrf.mxu0
      %1462 = vmatprep.mubr.bf16.mxu0 0
      %1463 = vmatmul.mubr.bf16.gmra.mxu0 %v697
      %v1464 = vpop.f32.mrf.mxu0
      %v1465 = vadd.f32 %v1304, %v1464
      %v1466 = vpop.f32.mrf.mxu0
      %v1467 = vpop.f32.mrf.mxu0
      %v1468 = vadd.f32 %v1307, %v1467
      %v1469 = vpop.f32.mrf.mxu0
      %1470 = vmatprep.mubr.bf16.mxu0 0
      %1471 = vmatmul.mubr.bf16.gmra.mxu0 %v702
      %v1472 = vpop.f32.mrf.mxu0
      %v1473 = vadd.f32 %v1312, %v1472
      %v1474 = vpop.f32.mrf.mxu0
      %v1475 = vpop.f32.mrf.mxu0
      %v1476 = vadd.f32 %v1315, %v1475
      %v1477 = vpop.f32.mrf.mxu0
      %1478 = vmatprep.mubr.bf16.mxu0 0
      %1479 = vmatmul.mubr.bf16.gmra.mxu0 %v707
      %v1480 = vpop.f32.mrf.mxu0
      %v1481 = vadd.f32 %v1320, %v1480
      %v1482 = vpop.f32.mrf.mxu0
      %v1483 = vpop.f32.mrf.mxu0
      %v1484 = vadd.f32 %v1323, %v1483
      %v1485 = vpop.f32.mrf.mxu0
      %1486 = vmatprep.mubr.bf16.mxu0 0
      %1487 = vmatmul.mubr.bf16.gmra.mxu0 %v712
      %v1488 = vpop.f32.mrf.mxu0
      %v1489 = vadd.f32 %v1328, %v1488
      %v1490 = vpop.f32.mrf.mxu0
      %v1491 = vpop.f32.mrf.mxu0
      %v1492 = vadd.f32 %v1331, %v1491
      %v1493 = vpop.f32.mrf.mxu0
      %1494 = vmatprep.mubr.bf16.mxu0 0
      %1495 = vmatmul.mubr.bf16.gmra.mxu0 %v717
      %v1496 = vpop.f32.mrf.mxu0
      %v1497 = vadd.f32 %v1336, %v1496
      %v1498 = vpop.f32.mrf.mxu0
      %v1499 = vpop.f32.mrf.mxu0
      %v1500 = vadd.f32 %v1339, %v1499
      %v1501 = vpop.f32.mrf.mxu0
      %1502 = vmatprep.mubr.bf16.mxu0 0
      %1503 = vmatmul.mubr.bf16.gmra.mxu0 %v722
      %v1504 = vpop.f32.mrf.mxu0
      %v1505 = vadd.f32 %v1344, %v1504
      %v1506 = vpop.f32.mrf.mxu0
      %v1507 = vpop.f32.mrf.mxu0
      %v1508 = vadd.f32 %v1347, %v1507
      %v1509 = vpop.f32.mrf.mxu0
      %1510 = vmatprep.mubr.bf16.mxu0 0
      %1511 = vmatmul.mubr.bf16.gmra.mxu0 %v727
      %v1512 = vpop.f32.mrf.mxu0
      %v1513 = vadd.f32 %v1352, %v1512
      %v1514 = vpop.f32.mrf.mxu0
      %v1515 = vpop.f32.mrf.mxu0
      %v1516 = vadd.f32 %v1355, %v1515
      %v1517 = vpop.f32.mrf.mxu0
      %1518 = vmatprep.mubr.bf16.mxu0 0
      %1519 = vmatmul.mubr.bf16.gmra.mxu0 %v732
      %v1520 = vpop.f32.mrf.mxu0
      %v1521 = vadd.f32 %v1360, %v1520
      %v1522 = vpop.f32.mrf.mxu0
      %v1523 = vpop.f32.mrf.mxu0
      %v1524 = vadd.f32 %v1363, %v1523
      %v1525 = vpop.f32.mrf.mxu0
      %1526 = vmatprep.mubr.bf16.mxu0 0
      %1527 = vmatmul.mubr.bf16.gmra.mxu0 %v737
      %v1528 = vpop.f32.mrf.mxu0
      %v1529 = vadd.f32 %v1368, %v1528
      %v1530 = vpop.f32.mrf.mxu0
      %v1531 = vpop.f32.mrf.mxu0
      %v1532 = vadd.f32 %v1371, %v1531
      %v1533 = vpop.f32.mrf.mxu0
      %1534 = vmatprep.mubr.bf16.mxu0 0
      %1535 = vmatmul.mubr.bf16.gmra.mxu0 %v742
      %v1536 = vpop.f32.mrf.mxu0
      %v1537 = vadd.f32 %v1376, %v1536
      %v1538 = vpop.f32.mrf.mxu0
      %v1539 = vpop.f32.mrf.mxu0
      %v1540 = vadd.f32 %v1379, %v1539
      %v1541 = vpop.f32.mrf.mxu0
      %1542 = vmatprep.mubr.bf16.mxu0 0
      %1543 = vmatmul.mubr.bf16.gmra.mxu0 %v747
      %v1544 = vpop.f32.mrf.mxu0
      %v1545 = vadd.f32 %v1384, %v1544
      %v1546 = vpop.f32.mrf.mxu0
      %v1547 = vpop.f32.mrf.mxu0
      %v1548 = vadd.f32 %v1387, %v1547
      %v1549 = vpop.f32.mrf.mxu0
      %1550 = vdwg.mxu0
      %v1551 = vpack.c.bf16 %v1428, %v1425
      %v1552 = vpack.c.bf16 %v1436, %v1433
      %v1553 = vpack.c.bf16 %v1444, %v1441
      %v1554 = vpack.c.bf16 %v1452, %v1449
      %v1555 = vpack.c.bf16 %v1460, %v1457
      %v1556 = vpack.c.bf16 %v1468, %v1465
      %v1557 = vpack.c.bf16 %v1476, %v1473
      %v1558 = vpack.c.bf16 %v1484, %v1481
      %v1559 = vpack.c.bf16 %v1492, %v1489
      %v1560 = vpack.c.bf16 %v1500, %v1497
      %v1561 = vpack.c.bf16 %v1508, %v1505
      %v1562 = vpack.c.bf16 %v1516, %v1513
      %v1563 = vpack.c.bf16 %v1524, %v1521
      %v1564 = vpack.c.bf16 %v1532, %v1529
      %v1565 = vpack.c.bf16 %v1540, %v1537
      %v1566 = vpack.c.bf16 %v1548, %v1545
      %v1583 = vunpack.c.l.b16 %v1551
      %v1584 = vunpack.c.h.b16 %v1551
      %v1585 = vunpack.c.l.b16 %v1552
      %v1586 = vunpack.c.h.b16 %v1552
      %v1587 = vunpack.c.l.b16 %v1553
      %v1588 = vunpack.c.h.b16 %v1553
      %v1589 = vunpack.c.l.b16 %v1554
      %v1590 = vunpack.c.h.b16 %v1554
      %v1591 = vunpack.c.l.b16 %v1555
      %v1592 = vunpack.c.h.b16 %v1555
      %v1593 = vunpack.c.l.b16 %v1556
      %v1594 = vunpack.c.h.b16 %v1556
      %v1595 = vunpack.c.l.b16 %v1557
      %v1596 = vunpack.c.h.b16 %v1557
      %v1597 = vunpack.c.l.b16 %v1558
      %v1598 = vunpack.c.h.b16 %v1558
      %v1599 = vunpack.c.l.b16 %v1559
      %v1600 = vunpack.c.h.b16 %v1559
      %v1601 = vunpack.c.l.b16 %v1560
      %v1602 = vunpack.c.h.b16 %v1560
      %v1603 = vunpack.c.l.b16 %v1561
      %v1604 = vunpack.c.h.b16 %v1561
      %v1605 = vunpack.c.l.b16 %v1562
      %v1606 = vunpack.c.h.b16 %v1562
      %v1607 = vunpack.c.l.b16 %v1563
      %v1608 = vunpack.c.h.b16 %v1563
      %v1609 = vunpack.c.l.b16 %v1564
      %v1610 = vunpack.c.h.b16 %v1564
      %v1611 = vunpack.c.l.b16 %v1565
      %v1612 = vunpack.c.h.b16 %v1565
      %v1613 = vunpack.c.l.b16 %v1566
      %v1614 = vunpack.c.h.b16 %v1566
      %v1615 = vpack.c.b16 %v1583, %v1583
      %v1616 = vpack.c.b16 %v1584, %v1584
      %v1617 = vpack.c.b16 %v1585, %v1585
      %v1618 = vpack.c.b16 %v1586, %v1586
      %v1619 = vpack.c.b16 %v1587, %v1587
      %v1620 = vpack.c.b16 %v1588, %v1588
      %v1621 = vpack.c.b16 %v1589, %v1589
      %v1622 = vpack.c.b16 %v1590, %v1590
      %v1623 = vpack.c.b16 %v1591, %v1591
      %v1624 = vpack.c.b16 %v1592, %v1592
      %v1625 = vpack.c.b16 %v1593, %v1593
      %v1626 = vpack.c.b16 %v1594, %v1594
      %v1627 = vpack.c.b16 %v1595, %v1595
      %v1628 = vpack.c.b16 %v1596, %v1596
      %v1629 = vpack.c.b16 %v1597, %v1597
      %v1630 = vpack.c.b16 %v1598, %v1598
      %v1631 = vpack.c.b16 %v1599, %v1599
      %v1632 = vpack.c.b16 %v1600, %v1600
      %v1633 = vpack.c.b16 %v1601, %v1601
      %v1634 = vpack.c.b16 %v1602, %v1602
      %v1635 = vpack.c.b16 %v1603, %v1603
      %v1636 = vpack.c.b16 %v1604, %v1604
      %v1637 = vpack.c.b16 %v1605, %v1605
      %v1638 = vpack.c.b16 %v1606, %v1606
      %v1639 = vpack.c.b16 %v1607, %v1607
      %v1640 = vpack.c.b16 %v1608, %v1608
      %v1641 = vpack.c.b16 %v1609, %v1609
      %v1642 = vpack.c.b16 %v1610, %v1610
      %v1643 = vpack.c.b16 %v1611, %v1611
      %v1644 = vpack.c.b16 %v1612, %v1612
      %v1645 = vpack.c.b16 %v1613, %v1613
      %v1646 = vpack.c.b16 %v1614, %v1614
      %1679 = vst [vmem:[%s226] sm:$0xf] %v1615
      %1680 = vst [vmem:[%s226 + $0x4] sm:$0xf] %v1616
      %1681 = vst [vmem:[%s226 + $0x8] sm:$0xf] %v1617
      %1682 = vst [vmem:[%s226 + $0xc] sm:$0xf] %v1618
      %1683 = vst [vmem:[%s226 + $0x10] sm:$0xf] %v1619
      %1684 = vst [vmem:[%s226 + $0x14] sm:$0xf] %v1620
      %1685 = vst [vmem:[%s226 + $0x18] sm:$0xf] %v1621
      %1686 = vst [vmem:[%s226 + $0x1c] sm:$0xf] %v1622
      %1687 = vst [vmem:[%s226 + $0x20] sm:$0xf] %v1623
      %1688 = vst [vmem:[%s226 + $0x24] sm:$0xf] %v1624
      %1689 = vst [vmem:[%s226 + $0x28] sm:$0xf] %v1625
      %1690 = vst [vmem:[%s226 + $0x2c] sm:$0xf] %v1626
      %1691 = vst [vmem:[%s226 + $0x30] sm:$0xf] %v1627
      %1692 = vst [vmem:[%s226 + $0x34] sm:$0xf] %v1628
      %1693 = vst [vmem:[%s226 + $0x38] sm:$0xf] %v1629
      %1694 = vst [vmem:[%s226 + $0x3c] sm:$0xf] %v1630
      %1695 = vst [vmem:[%s226 + $0x40] sm:$0xf] %v1631
      %1696 = vst [vmem:[%s226 + $0x44] sm:$0xf] %v1632
      %1697 = vst [vmem:[%s226 + $0x48] sm:$0xf] %v1633
      %1698 = vst [vmem:[%s226 + $0x4c] sm:$0xf] %v1634
      %1699 = vst [vmem:[%s226 + $0x50] sm:$0xf] %v1635
      %1700 = vst [vmem:[%s226 + $0x54] sm:$0xf] %v1636
      %1701 = vst [vmem:[%s226 + $0x58] sm:$0xf] %v1637
      %1702 = vst [vmem:[%s226 + $0x5c] sm:$0xf] %v1638
      %1703 = vst [vmem:[%s226 + $0x60] sm:$0xf] %v1639
      %1704 = vst [vmem:[%s226 + $0x64] sm:$0xf] %v1640
      %1705 = vst [vmem:[%s226 + $0x68] sm:$0xf] %v1641
      %1706 = vst [vmem:[%s226 + $0x6c] sm:$0xf] %v1642
      %1707 = vst [vmem:[%s226 + $0x70] sm:$0xf] %v1643
      %1708 = vst [vmem:[%s226 + $0x74] sm:$0xf] %v1644
      %1709 = vst [vmem:[%s226 + $0x78] sm:$0xf] %v1645
      %1710 = vst [vmem:[%s226 + $0x7c] sm:$0xf] %v1646
      %s1711 = smul.u32 32, %s18
      %p1712 = scmp.lt.s32.totalorder %s1711, 127
      %s1713 = scalar_select %p1712, %s1711, 127
      %p1714 = scmp.lt.s32.totalorder %s19, 0
      %s1715 = scalar_select %p1714, %s19, 0
      %s1716 = sadd.s32 %s1715, %s1713
      %s1717 = smul.addr %s1716, 4
      %s1718 = scalar_lea.vmem %s3, %s1717
      // Predicated region
      $region33: #{forward_uncond.29} parent=31 // pred_check
        %p1719 = pneg %p124
      $region34: #{forward_uncond.29} parent=31 // pred_check_branch
        %1721 = sbr.rel (%p1719) target = $region36
      $region35: #{forward_uncond.29} parent=31 // pred_region
        %s1722 = smul.u32 32, %s18
      $region36: #{forward_uncond.29} parent=31 // pred_fallthru
        _
    $region32: #{forward_uncond.29} parent=5 // pred_fallthru
      _
    %p1723 = scmp.le.s32.totalorder 2, %s9
    // Predicated region
    $region37: #{forward_uncond.29} parent=5 // pred_check
      %p1724 = pneg %p1723
    $region38: #{forward_uncond.29} parent=5 // pred_check_branch
      %1726 = sbr.rel (%p1724) target = $region40
    $region39: #{forward_uncond.29} parent=5 // pred_region
      %s1727 = ssub.s32 %s9, 2
      // Predicated region
      $region41: #{forward_uncond.29} parent=39 // pred_check
        %p1728 = pneg %p130
      $region42: #{forward_uncond.29} parent=39 // pred_check_branch
        %1730 = sbr.rel (%p1728) target = $region44
      $region43: #{forward_uncond.29} parent=39 // pred_region
        %s1731 = smul.u32 32, %s20
        %p1732 = scmp.lt.s32.totalorder %s1731, 127
        %s1733 = scalar_select %p1732, %s1731, 127
        %p1734 = scmp.lt.s32.totalorder %s21, 0
        %s1735 = scalar_select %p1734, %s21, 0
        %s1736 = sadd.s32 %s1735, %s1733
        %s1737 = smul.addr %s1736, 4
        %s1738 = scalar_lea.vmem %s3, %s1737
      $region44: #{forward_uncond.29} parent=39 // pred_fallthru
        _
    $region40: #{forward_uncond.29} parent=5 // pred_fallthru
      _
  $region6: #{forward_uncond.29} parent=0 // loop_footer
    %s13 = sadd.s32 1, %s9
  $region7: #{forward_uncond.29} parent=0 // loop_footer_branch
    %8 = sbr.rel target = $region3
  $region8: #{forward_uncond.29} parent=0 // loop_exit
    _

// kernel: forward_uncond.31
$region0: #{forward_uncond.31}
  #allocation0 [shape = 'u32[]', space=smem, size = 0x4, offset = 0x4, fixed_abs, tag = 'smem constant byte address 0x4 - core index']
  #allocation1 [shape = 'u32[144,128]{1,0:T(1,128)}', space=vmem, size = 0x12000, scoped, tag = 'internal scratch']
  #allocation2 [shape = 's32[1]{0}', space=sflag, size = 0x4, scoped, tag = 'scoped memory for forward_uncond.31']
  #allocation3 [shape = 's32[1]{0:T(128)S(6)}', space=smem, size = 0x200, scoped, tag = 'prefetched SMEM operand 0']
  %s0 = inlined_call_operand.<no memory space> [shape: s32[1], index: 0, kind: input, shape index: {}]
  %s1 = inlined_call_operand.vmem [shape: bf16[4,16,128], index: 1, kind: input, shape index: {}]
  %s2 = inlined_call_operand.vmem [shape: bf16[4,16,128], index: 2, kind: input, shape index: {}]
  %s3 = inlined_call_operand.vmem [shape: bf16[4,16,128], index: 3, kind: input, shape index: {}]
  %s4 = inlined_call_operand.vmem [shape: f32[4,16,128], index: 4, kind: output, shape index: {}]
  %s5 = sld [smem:[#allocation0]]
  $region45: #{forward_uncond.31} parent=0
    _
  %s7 = ssub.s32 1, %s5
  %s8 = scalar_select 0, %s7, %s5
  %9 = sst [smem:[#allocation3]] %s0
  loop: start=0, step=1, limit=6
  $region2: #{forward_uncond.31} parent=0 // loop_pre_header
    _
  $region3: #{forward_uncond.31} parent=0 // loop_header
    %s11 = sphi 0, %s15
    %p12 = scmp.ge.s32.totalorder %s11, 6
    %s21 = sphi 0, %s23
    %s24 = sphi 0, %s21
    %s25 = sphi 0, %s24
    %s41 = sphi 0, %s25
    %s47 = sphi 0, %s49
    %s50 = sphi 0, %s47
    %s51 = sphi 0, %s50
    %s67 = sphi 0, %s51
    %s73 = sphi 0, %s75
    %s76 = sphi 0, %s73
    %s77 = sphi 0, %s76
    %s93 = sphi 0, %s77
    %s99 = sphi 0, %s101
    %s102 = sphi 0, %s99
    %s103 = sphi 0, %s102
    %s119 = sphi 0, %s103
  $region4: #{forward_uncond.31} parent=0 // loop_header_branch
    %14 = sbr.rel (%p12) target = $region8
  $region5: #{forward_uncond.31} parent=0 // loop_body
    %s16 = ssub.s32 %s11, 1
    %s17 = ssub.s32 %s11, 2
    %s18 = sadd.s32 %s11, 1
    %s19 = ssub.s32 %s11, %s18
    %p20 = scmp.eq.s32.totalorder %s19, 0
    %s22 = sadd.s32 %s21, 1
    %s23 = scalar_select %p20, %s21, %s22
    %p26 = pneg %p20
    %p27 = scmp.eq.s32.totalorder %s11, 3
    %p28 = por %p26, %p27
    %p29 = scmp.ne.s32.totalorder %s21, %s24
    %p30 = scmp.eq.s32.totalorder %s11, 0
    %p31 = por %p29, %p30
    %p32 = scmp.ne.s32.totalorder %s21, %s24
    %p33 = scmp.eq.s32.totalorder %s16, 3
    %p34 = por %p32, %p33
    %p35 = scmp.ne.s32.totalorder %s24, %s25
    %p36 = scmp.eq.s32.totalorder %s16, 0
    %p37 = por %p35, %p36
    %p38 = scmp.ne.s32.totalorder %s24, %s25
    %p39 = scmp.eq.s32.totalorder %s17, 3
    %p40 = por %p38, %p39
    %p42 = scmp.ne.s32.totalorder %s25, %s41
    %p43 = scmp.eq.s32.totalorder %s17, 0
    %p44 = por %p42, %p43
    %s45 = ssub.s32 %s11, %s18
    %p46 = scmp.eq.s32.totalorder %s45, 0
    %s48 = sadd.s32 %s47, 1
    %s49 = scalar_select %p46, %s47, %s48
    %p52 = pneg %p46
    %p53 = scmp.eq.s32.totalorder %s11, 3
    %p54 = por %p52, %p53
    %p55 = scmp.ne.s32.totalorder %s47, %s50
    %p56 = scmp.eq.s32.totalorder %s11, 0
    %p57 = por %p55, %p56
    %p58 = scmp.ne.s32.totalorder %s47, %s50
    %p59 = scmp.eq.s32.totalorder %s16, 3
    %p60 = por %p58, %p59
    %p61 = scmp.ne.s32.totalorder %s50, %s51
    %p62 = scmp.eq.s32.totalorder %s16, 0
    %p63 = por %p61, %p62
    %p64 = scmp.ne.s32.totalorder %s50, %s51
    %p65 = scmp.eq.s32.totalorder %s17, 3
    %p66 = por %p64, %p65
    %p68 = scmp.ne.s32.totalorder %s51, %s67
    %p69 = scmp.eq.s32.totalorder %s17, 0
    %p70 = por %p68, %p69
    %s71 = ssub.s32 %s11, %s18
    %p72 = scmp.eq.s32.totalorder %s71, 0
    %s74 = sadd.s32 %s73, 1
    %s75 = scalar_select %p72, %s73, %s74
    %p78 = pneg %p72
    %p79 = scmp.eq.s32.totalorder %s11, 3
    %p80 = por %p78, %p79
    %p81 = scmp.ne.s32.totalorder %s73, %s76
    %p82 = scmp.eq.s32.totalorder %s11, 0
    %p83 = por %p81, %p82
    %p84 = scmp.ne.s32.totalorder %s73, %s76
    %p85 = scmp.eq.s32.totalorder %s16, 3
    %p86 = por %p84, %p85
    %p87 = scmp.ne.s32.totalorder %s76, %s77
    %p88 = scmp.eq.s32.totalorder %s16, 0
    %p89 = por %p87, %p88
    %p90 = scmp.ne.s32.totalorder %s76, %s77
    %p91 = scmp.eq.s32.totalorder %s17, 3
    %p92 = por %p90, %p91
    %p94 = scmp.ne.s32.totalorder %s77, %s93
    %p95 = scmp.eq.s32.totalorder %s17, 0
    %p96 = por %p94, %p95
    %s97 = ssub.s32 %s11, %s18
    %p98 = scmp.eq.s32.totalorder %s97, 0
    %s100 = sadd.s32 %s99, 1
    %s101 = scalar_select %p98, %s99, %s100
    %p104 = pneg %p98
    %p105 = scmp.eq.s32.totalorder %s11, 3
    %p106 = por %p104, %p105
    %p107 = scmp.ne.s32.totalorder %s99, %s102
    %p108 = scmp.eq.s32.totalorder %s11, 0
    %p109 = por %p107, %p108
    %p110 = scmp.ne.s32.totalorder %s99, %s102
    %p111 = scmp.eq.s32.totalorder %s16, 3
    %p112 = por %p110, %p111
    %p113 = scmp.ne.s32.totalorder %s102, %s103
    %p114 = scmp.eq.s32.totalorder %s16, 0
    %p115 = por %p113, %p114
    %p116 = scmp.ne.s32.totalorder %s102, %s103
    %p117 = scmp.eq.s32.totalorder %s17, 3
    %p118 = por %p116, %p117
    %p120 = scmp.ne.s32.totalorder %s103, %s119
    %p121 = scmp.eq.s32.totalorder %s17, 0
    %p122 = por %p120, %p121
    %p123 = scmp.le.s32.totalorder 1, %s11
    %p124 = scmp.lt.s32.totalorder %s11, 5
    %p125 = pnand %p123, %p124
    %p126 = pneg %p125
    // Predicated region
    $region9: #{forward_uncond.31} parent=5 // pred_check
      _
    $region10: #{forward_uncond.31} parent=5 // pred_check_branch
      %128 = sbr.rel (%p125) target = $region12
    $region11: #{forward_uncond.31} parent=5 // pred_region
      %s129 = ssub.s32 %s11, 1
    $region12: #{forward_uncond.31} parent=5 // pred_fallthru
      _
    %p130 = scmp.lt.s32.totalorder %s11, 4
    // Predicated region
    $region13: #{forward_uncond.31} parent=5 // pred_check
      %p131 = pneg %p130
    $region14: #{forward_uncond.31} parent=5 // pred_check_branch
      %133 = sbr.rel (%p131) target = $region16
    $region15: #{forward_uncond.31} parent=5 // pred_region
      // Predicated region
      $region17: #{forward_uncond.31} parent=15 // pred_check
        %p134 = pneg %p31
      $region18: #{forward_uncond.31} parent=15 // pred_check_branch
        %136 = sbr.rel (%p134) target = $region20
      $region19: #{forward_uncond.31} parent=15 // pred_region
        %p137 = scmp.lt.s32.totalorder %s11, 3
        %s138 = scalar_select %p137, %s11, 3
        %s139 = smul.addr %s138, 2
        %s140 = smul.addr %s139, 4
        %s141 = scalar_lea.vmem %s1, %s140
      $region20: #{forward_uncond.31} parent=15 // pred_fallthru
        _
      // Predicated region
      $region21: #{forward_uncond.31} parent=15 // pred_check
        %p142 = pneg %p57
      $region22: #{forward_uncond.31} parent=15 // pred_check_branch
        %144 = sbr.rel (%p142) target = $region24
      $region23: #{forward_uncond.31} parent=15 // pred_region
        %p145 = scmp.lt.s32.totalorder %s11, 3
        %s146 = scalar_select %p145, %s11, 3
        %s147 = smul.addr %s146, 2
        %s148 = smul.addr %s147, 4
        %s149 = scalar_lea.vmem %s2, %s148
      $region24: #{forward_uncond.31} parent=15 // pred_fallthru
        _
      // Predicated region
      $region25: #{forward_uncond.31} parent=15 // pred_check
        %p150 = pneg %p83
      $region26: #{forward_uncond.31} parent=15 // pred_check_branch
        %152 = sbr.rel (%p150) target = $region28
      $region27: #{forward_uncond.31} parent=15 // pred_region
        %p153 = scmp.lt.s32.totalorder %s11, 3
        %s154 = scalar_select %p153, %s11, 3
        %s155 = smul.addr %s154, 2
        %s156 = smul.addr %s155, 4
        %s157 = scalar_lea.vmem %s3, %s156
      $region28: #{forward_uncond.31} parent=15 // pred_fallthru
        _
    $region16: #{forward_uncond.31} parent=5 // pred_fallthru
      _
    %p158 = scmp.le.s32.totalorder 1, %s11
    %p159 = scmp.lt.s32.totalorder %s11, 5
    %p160 = pnand %p158, %p159
    %p161 = pneg %p160
    // Predicated region
    $region29: #{forward_uncond.31} parent=5 // pred_check
      _
    $region30: #{forward_uncond.31} parent=5 // pred_check_branch
      %163 = sbr.rel (%p160) target = $region32
    $region31: #{forward_uncond.31} parent=5 // pred_region
      %s164 = ssub.s32 %s11, 1
      %p165 = scmp.lt.s32.totalorder %s16, 3
      %s166 = scalar_select %p165, %s16, 3
      %s167 = smul.addr %s166, 2
      %s168 = smul.addr %s167, 4
      %s169 = scalar_lea.vmem %s1, %s168
      %p170 = pneg %p37
      %p171 = pneg %p34
      %p172 = scmp.lt.s32.totalorder %s16, 3
      %s173 = scalar_select %p172, %s16, 3
      %s174 = smul.addr %s173, 2
      %s175 = smul.addr %s174, 4
      %s176 = scalar_lea.vmem %s2, %s175
      %p177 = pneg %p63
      %p178 = pneg %p60
      %p179 = scmp.lt.s32.totalorder %s16, 3
      %s180 = scalar_select %p179, %s16, 3
      %s181 = smul.addr %s180, 2
      %s182 = smul.addr %s181, 4
      %s183 = scalar_lea.vmem %s3, %s182
      %p184 = pneg %p89
      %p185 = pneg %p86
      %p186 = pneg %p115
      %p187 = pneg %p112
      %p188 = scmp.lt.s32.totalorder %s16, 3
      %s189 = scalar_select %p188, %s16, 3
      %s190 = smul.addr %s189, 2
      %s191 = smul.addr %s190, 8
      %s192 = scalar_lea.vmem %s4, %s191
      %p193 = scmp.lt.s32.totalorder %s16, 3
      %s194 = scalar_select %p193, %s16, 3
      %s195 = smul.addr %s194, 2
      %s196 = smul.addr %s195, 4
      %s197 = scalar_lea.vmem %s1, %s196
      %p198 = scmp.lt.s32.totalorder %s16, 3
      %s199 = scalar_select %p198, %s16, 3
      %s200 = smul.addr %s199, 2
      %s201 = smul.addr %s200, 4
      %s202 = scalar_lea.vmem %s2, %s201
      %p203 = scmp.lt.s32.totalorder %s16, 3
      %s204 = scalar_select %p203, %s16, 3
      %s205 = smul.addr %s204, 2
      %s206 = smul.addr %s205, 4
      %s207 = scalar_lea.vmem %s3, %s206
      %p208 = scmp.lt.s32.totalorder %s16, 3
      %s209 = scalar_select %p208, %s16, 3
      %s210 = smul.addr %s209, 2
      %s211 = smul.addr %s210, 8
      %s212 = scalar_lea.vmem %s4, %s211
      %v214 = vld [vmem:[%s197] sm:$0xf]
      %v215 = vld [vmem:[%s197 + $0x4] sm:$0xf]
      %v216 = vld [vmem:[%s202] sm:$0xf]
      %v217 = vld [vmem:[%s202 + $0x4] sm:$0xf]
      %v218 = vld [vmem:[%s207] sm:$0xf]
      %v219 = vld [vmem:[%s207 + $0x4] sm:$0xf]
      %v222 = vunpack.c.l.b16 %v214
      %v223 = vunpack.c.l.b16 %v215
      %v224 = vpack.c.b16 %v223, %v222
      %v228 = vunpack.c.l.b16 %v216
      %v229 = vunpack.c.l.b16 %v217
      %v230 = vpack.c.b16 %v229, %v228
      %232 = vmatprep.subr.bf16.mxu0 0
      %233 = vmatpush1.bf16.xpose.msra.mxu0 0
      %234 = vmatprep.subr.bf16.mxu0 0
      %235 = vmatpush1.bf16.xpose.msra.mxu0 0
      %236 = vmatprep.subr.bf16.mxu0 0
      %237 = vmatpush1.bf16.xpose.msra.mxu0 0
      %238 = vmatprep.subr.bf16.mxu0 0
      %239 = vmatpush1.bf16.xpose.msra.mxu0 0
      %240 = vmatprep.subr.bf16.mxu0 0
      %241 = vmatpush1.bf16.xpose.msra.mxu0 0
      %242 = vmatprep.subr.bf16.mxu0 0
      %243 = vmatpush1.bf16.xpose.msra.mxu0 0
      %244 = vmatprep.subr.bf16.mxu0 0
      %245 = vmatpush1.bf16.xpose.msra.mxu0 0
      %246 = vmatprep.subr.bf16.mxu0 0
      %247 = vmatpush1.bf16.xpose.msra.mxu0 %v230
      %248 = vmatprep.subr.bf16.mxu0 0
      %249 = vmatpush2.bf16.xpose.msra.mxu0 0
      %250 = vmatprep.subr.bf16.mxu0 0
      %251 = vmatpush2.bf16.xpose.msra.mxu0 0
      %252 = vmatprep.subr.bf16.mxu0 0
      %253 = vmatpush2.bf16.xpose.msra.mxu0 0
      %254 = vmatprep.subr.bf16.mxu0 0
      %255 = vmatpush2.bf16.xpose.msra.mxu0 0
      %256 = vmatprep.subr.bf16.mxu0 0
      %257 = vmatpush2.bf16.xpose.msra.mxu0 0
      %258 = vmatprep.subr.bf16.mxu0 0
      %259 = vmatpush2.bf16.xpose.msra.mxu0 0
      %260 = vmatprep.subr.bf16.mxu0 0
      %261 = vmatpush2.bf16.xpose.msra.mxu0 0
      %262 = vmatprep.subr.bf16.mxu0 0
      %263 = vmatpush2.bf16.xpose.msra.mxu0 0
      %264 = vmatprep.mubr.bf16.mxu0 0
      %265 = vmatmul.mubr.bf16.gmra.mxu0 %v224
      %v266 = vpop.f32.mrf.mxu0
      %v267 = vadd.f32 0.0, %v266
      %v268 = vpop.f32.mrf.mxu0
      %v269 = vpop.f32.mrf.mxu0
      %v270 = vadd.f32 0.0, %v269
      %v271 = vpop.f32.mrf.mxu0
      %272 = vdwg.mxu0
      %v273 = vlaneseq
      %v274 = vand.u32 %v273, 127
      %s275 = sld [smem:[#allocation3]]
      %v276 = vstv %s275
      %vm277 = vcmp.lt.s32.totalorder %v274, %v276
      %v278 = vsel %vm277, %v267, -1e+30
      %v279 = vsel %vm277, %v270, -1e+30
      %vm280 = vcmask 130048
      %v281 = vsel %vm280, %v278, -inf
      %282 = vmax.xlane.f32.xlu0 %v281
      %v283 = vpop.xlane.xlu0 %282
      %v284 = vsel %vm280, %v279, -inf
      %285 = vmax.xlane.f32.xlu0 %v284
      %v286 = vpop.xlane.xlu0 %285
      %v287 = vsub.f32 %v278, %v283
      %v288 = vsub.f32 %v279, %v286
      %v289 = vmul.f32 %v287, 1.442695
      %v290 = vpow.pop %v289
      %v291 = vmul.f32 %v288, 1.442695
      %v292 = vpow.pop %v291
      %v293 = vsel %vm280, %v290, 0.0
      %294 = vadd.xlane.f32.xlu0 %v293
      %v295 = vpop.xlane.xlu0 %294
      %v296 = vsel %vm280, %v292, 0.0
      %297 = vadd.xlane.f32.xlu0 %v296
      %v298 = vpop.xlane.xlu0 %297
      %v299 = vpack.c.bf16 %v292, %v290
      %v302 = vunpack.c.l.b16 %v218
      %v303 = vunpack.c.l.b16 %v219
      %v304 = vpack.c.b16 %v303, %v302
      %v307 = vsel %vm280, %v299, 0
      %309 = vmatprep.subr.bf16.mxu0 0
      %310 = vmatpush1.bf16.msra.mxu0 0
      %311 = vmatprep.subr.bf16.mxu0 0
      %312 = vmatpush1.bf16.msra.mxu0 0
      %313 = vmatprep.subr.bf16.mxu0 0
      %314 = vmatpush1.bf16.msra.mxu0 0
      %315 = vmatprep.subr.bf16.mxu0 0
      %316 = vmatpush1.bf16.msra.mxu0 0
      %317 = vmatprep.subr.bf16.mxu0 0
      %318 = vmatpush1.bf16.msra.mxu0 0
      %319 = vmatprep.subr.bf16.mxu0 0
      %320 = vmatpush1.bf16.msra.mxu0 0
      %321 = vmatprep.subr.bf16.mxu0 0
      %322 = vmatpush1.bf16.msra.mxu0 0
      %323 = vmatprep.subr.bf16.mxu0 0
      %324 = vmatpush1.bf16.msra.mxu0 %v304
      %325 = vmatprep.subr.bf16.mxu0 0
      %326 = vmatpush2.bf16.msra.mxu0 0
      %327 = vmatprep.subr.bf16.mxu0 0
      %328 = vmatpush2.bf16.msra.mxu0 0
      %329 = vmatprep.subr.bf16.mxu0 0
      %330 = vmatpush2.bf16.msra.mxu0 0
      %331 = vmatprep.subr.bf16.mxu0 0
      %332 = vmatpush2.bf16.msra.mxu0 0
      %333 = vmatprep.subr.bf16.mxu0 0
      %334 = vmatpush2.bf16.msra.mxu0 0
      %335 = vmatprep.subr.bf16.mxu0 0
      %336 = vmatpush2.bf16.msra.mxu0 0
      %337 = vmatprep.subr.bf16.mxu0 0
      %338 = vmatpush2.bf16.msra.mxu0 0
      %339 = vmatprep.subr.bf16.mxu0 0
      %340 = vmatpush2.bf16.msra.mxu0 0
      %341 = vmatprep.mubr.bf16.mxu0 0
      %342 = vmatmul.mubr.bf16.gmra.mxu0 %v307
      %v343 = vpop.f32.mrf.mxu0
      %v344 = vadd.f32 0.0, %v343
      %v345 = vpop.f32.mrf.mxu0
      %v346 = vpop.f32.mrf.mxu0
      %v347 = vadd.f32 0.0, %v346
      %v348 = vpop.f32.mrf.mxu0
      %349 = vdwg.mxu0
      %v350 = vrcp.pop %v295
      %v351 = vrcp.pop %v298
      %v352 = vmul.f32 %v344, %v350
      %v353 = vmul.f32 %v347, %v351
      %354 = vst [vmem:[%s212] sm:$0xff] %v352
      %355 = vst [vmem:[%s212 + $0x8] sm:$0xff] %v353
      %p356 = scmp.lt.s32.totalorder %s16, 3
      %s357 = scalar_select %p356, %s16, 3
      %s358 = smul.addr %s357, 2
      %s359 = smul.addr %s358, 8
      %s360 = scalar_lea.vmem %s4, %s359
      // Predicated region
      $region33: #{forward_uncond.31} parent=31 // pred_check
        %p361 = pneg %p112
      $region34: #{forward_uncond.31} parent=31 // pred_check_branch
        %363 = sbr.rel (%p361) target = $region36
      $region35: #{forward_uncond.31} parent=31 // pred_region
        _
      $region36: #{forward_uncond.31} parent=31 // pred_fallthru
        _
    $region32: #{forward_uncond.31} parent=5 // pred_fallthru
      _
    %p364 = scmp.le.s32.totalorder 2, %s11
    // Predicated region
    $region37: #{forward_uncond.31} parent=5 // pred_check
      %p365 = pneg %p364
    $region38: #{forward_uncond.31} parent=5 // pred_check_branch
      %367 = sbr.rel (%p365) target = $region40
    $region39: #{forward_uncond.31} parent=5 // pred_region
      %s368 = ssub.s32 %s11, 2
      // Predicated region
      $region41: #{forward_uncond.31} parent=39 // pred_check
        %p369 = pneg %p118
      $region42: #{forward_uncond.31} parent=39 // pred_check_branch
        %371 = sbr.rel (%p369) target = $region44
      $region43: #{forward_uncond.31} parent=39 // pred_region
        %p372 = scmp.lt.s32.totalorder %s17, 3
        %s373 = scalar_select %p372, %s17, 3
        %s374 = smul.addr %s373, 2
        %s375 = smul.addr %s374, 8
        %s376 = scalar_lea.vmem %s4, %s375
      $region44: #{forward_uncond.31} parent=39 // pred_fallthru
        _
    $region40: #{forward_uncond.31} parent=5 // pred_fallthru
      _
  $region6: #{forward_uncond.31} parent=0 // loop_footer
    %s15 = sadd.s32 1, %s11
  $region7: #{forward_uncond.31} parent=0 // loop_footer_branch
    %10 = sbr.rel target = $region3
  $region8: #{forward_uncond.31} parent=0 // loop_exit
    _

// kernel: forward_uncond.51
$region0: #{forward_uncond.51}
  #allocation0 [shape = 'u32[]', space=smem, size = 0x4, offset = 0x4, fixed_abs, tag = 'smem constant byte address 0x4 - core index']
  #allocation1 [shape = 'u32[144,128]{1,0:T(1,128)}', space=vmem, size = 0x12000, scoped, tag = 'internal scratch']
  %s0 = inlined_call_operand.vmem [shape: bf16[1024,1152], index: 0, kind: input, shape index: {}]
  %s1 = inlined_call_operand.vmem [shape: bf16[1152,128], index: 1, kind: input, shape index: {}]
  %s2 = inlined_call_operand.vmem [shape: f32[1,128], index: 2, kind: input, shape index: {}]
  %s3 = inlined_call_operand.vmem [shape: bf16[1024,128], index: 3, kind: output, shape index: {}]
  %s4 = sld [smem:[#allocation0]]
  $region45: #{forward_uncond.51} parent=0
    _
  %s6 = ssub.s32 1, %s4
  %s7 = scalar_select 0, %s6, %s4
  loop: start=0, step=1, limit=6
  $region2: #{forward_uncond.51} parent=0 // loop_pre_header
    _
  $region3: #{forward_uncond.51} parent=0 // loop_header
    %s9 = sphi 0, %s13
    %p10 = scmp.ge.s32.totalorder %s9, 6
    %s16 = sphi 0, %s28
    %s17 = sphi 0, %s24
    %s18 = sphi 0, %s16
    %s19 = sphi 0, %s17
    %s20 = sphi 0, %s18
    %s21 = sphi 0, %s19
    %s31 = sphi 0, %s33
    %s34 = sphi 0, %s31
    %s35 = sphi 0, %s34
    %s51 = sphi 0, %s35
    %s57 = sphi 0, %s59
    %s60 = sphi 0, %s57
    %s61 = sphi 0, %s60
    %s77 = sphi 0, %s61
    %s83 = sphi 0, %s85
    %s86 = sphi 0, %s83
    %s87 = sphi 0, %s86
    %s103 = sphi 0, %s87
    %s111 = sphi 0, %s113
    %s114 = sphi 0, %s111
    %s115 = sphi 0, %s114
    %s131 = sphi 0, %s115
  $region4: #{forward_uncond.51} parent=0 // loop_header_branch
    %12 = sbr.rel (%p10) target = $region8
  $region5: #{forward_uncond.51} parent=0 // loop_body
    %s14 = ssub.s32 %s9, 1
    %s15 = ssub.s32 %s9, 2
    %s22 = sadd.s32 1, %s17
    %p23 = scmp.ge.s32.totalorder %s22, 1
    %s24 = scalar_select %p23, 0, %s22
    %s25 = sadd.s32 1, %s16
    %s26 = scalar_select %p23, %s25, %s16
    %p27 = scmp.ge.s32.totalorder %s26, 4
    %s28 = scalar_select %p27, 0, %s26
    %s29 = ssub.s32 %s16, %s28
    %p30 = scmp.eq.s32.totalorder %s29, 0
    %s32 = sadd.s32 %s31, 1
    %s33 = scalar_select %p30, %s31, %s32
    %p36 = pneg %p30
    %p37 = scmp.eq.s32.totalorder %s9, 3
    %p38 = por %p36, %p37
    %p39 = scmp.ne.s32.totalorder %s31, %s34
    %p40 = scmp.eq.s32.totalorder %s9, 0
    %p41 = por %p39, %p40
    %p42 = scmp.ne.s32.totalorder %s31, %s34
    %p43 = scmp.eq.s32.totalorder %s14, 3
    %p44 = por %p42, %p43
    %p45 = scmp.ne.s32.totalorder %s34, %s35
    %p46 = scmp.eq.s32.totalorder %s14, 0
    %p47 = por %p45, %p46
    %p48 = scmp.ne.s32.totalorder %s34, %s35
    %p49 = scmp.eq.s32.totalorder %s15, 3
    %p50 = por %p48, %p49
    %p52 = scmp.ne.s32.totalorder %s35, %s51
    %p53 = scmp.eq.s32.totalorder %s15, 0
    %p54 = por %p52, %p53
    %s55 = ssub.s32 %s17, %s24
    %p56 = scmp.eq.s32.totalorder %s55, 0
    %s58 = sadd.s32 %s57, 1
    %s59 = scalar_select %p56, %s57, %s58
    %p62 = pneg %p56
    %p63 = scmp.eq.s32.totalorder %s9, 3
    %p64 = por %p62, %p63
    %p65 = scmp.ne.s32.totalorder %s57, %s60
    %p66 = scmp.eq.s32.totalorder %s9, 0
    %p67 = por %p65, %p66
    %p68 = scmp.ne.s32.totalorder %s57, %s60
    %p69 = scmp.eq.s32.totalorder %s14, 3
    %p70 = por %p68, %p69
    %p71 = scmp.ne.s32.totalorder %s60, %s61
    %p72 = scmp.eq.s32.totalorder %s14, 0
    %p73 = por %p71, %p72
    %p74 = scmp.ne.s32.totalorder %s60, %s61
    %p75 = scmp.eq.s32.totalorder %s15, 3
    %p76 = por %p74, %p75
    %p78 = scmp.ne.s32.totalorder %s61, %s77
    %p79 = scmp.eq.s32.totalorder %s15, 0
    %p80 = por %p78, %p79
    %s81 = ssub.s32 %s17, %s24
    %p82 = scmp.eq.s32.totalorder %s81, 0
    %s84 = sadd.s32 %s83, 1
    %s85 = scalar_select %p82, %s83, %s84
    %p88 = pneg %p82
    %p89 = scmp.eq.s32.totalorder %s9, 3
    %p90 = por %p88, %p89
    %p91 = scmp.ne.s32.totalorder %s83, %s86
    %p92 = scmp.eq.s32.totalorder %s9, 0
    %p93 = por %p91, %p92
    %p94 = scmp.ne.s32.totalorder %s83, %s86
    %p95 = scmp.eq.s32.totalorder %s14, 3
    %p96 = por %p94, %p95
    %p97 = scmp.ne.s32.totalorder %s86, %s87
    %p98 = scmp.eq.s32.totalorder %s14, 0
    %p99 = por %p97, %p98
    %p100 = scmp.ne.s32.totalorder %s86, %s87
    %p101 = scmp.eq.s32.totalorder %s15, 3
    %p102 = por %p100, %p101
    %p104 = scmp.ne.s32.totalorder %s87, %s103
    %p105 = scmp.eq.s32.totalorder %s15, 0
    %p106 = por %p104, %p105
    %s107 = ssub.s32 %s16, %s28
    %s108 = ssub.s32 %s17, %s24
    %s109 = sor.u32 %s107, %s108
    %p110 = scmp.eq.s32.totalorder %s109, 0
    %s112 = sadd.s32 %s111, 1
    %s113 = scalar_select %p110, %s111, %s112
    %p116 = pneg %p110
    %p117 = scmp.eq.s32.totalorder %s9, 3
    %p118 = por %p116, %p117
    %p119 = scmp.ne.s32.totalorder %s111, %s114
    %p120 = scmp.eq.s32.totalorder %s9, 0
    %p121 = por %p119, %p120
    %p122 = scmp.ne.s32.totalorder %s111, %s114
    %p123 = scmp.eq.s32.totalorder %s14, 3
    %p124 = por %p122, %p123
    %p125 = scmp.ne.s32.totalorder %s114, %s115
    %p126 = scmp.eq.s32.totalorder %s14, 0
    %p127 = por %p125, %p126
    %p128 = scmp.ne.s32.totalorder %s114, %s115
    %p129 = scmp.eq.s32.totalorder %s15, 3
    %p130 = por %p128, %p129
    %p132 = scmp.ne.s32.totalorder %s115, %s131
    %p133 = scmp.eq.s32.totalorder %s15, 0
    %p134 = por %p132, %p133
    %p135 = scmp.le.s32.totalorder 1, %s9
    %p136 = scmp.lt.s32.totalorder %s9, 5
    %p137 = pnand %p135, %p136
    %p138 = pneg %p137
    // Predicated region
    $region9: #{forward_uncond.51} parent=5 // pred_check
      _
    $region10: #{forward_uncond.51} parent=5 // pred_check_branch
      %140 = sbr.rel (%p137) target = $region12
    $region11: #{forward_uncond.51} parent=5 // pred_region
      %s141 = ssub.s32 %s9, 1
      // Predicated region
      $region13: #{forward_uncond.51} parent=11 // pred_check
        %p142 = pneg %p73
      $region14: #{forward_uncond.51} parent=11 // pred_check_branch
        %144 = sbr.rel (%p142) target = $region16
      $region15: #{forward_uncond.51} parent=11 // pred_region
        %p145 = scmp.lt.s32.totalorder %s19, 0
        %s146 = scalar_select %p145, %s19, 0
        %s147 = smul.addr %s146, 4
        %s148 = scalar_lea.vmem %s1, %s147
      $region16: #{forward_uncond.51} parent=11 // pred_fallthru
        _
      // Predicated region
      $region17: #{forward_uncond.51} parent=11 // pred_check
        %p149 = pneg %p99
      $region18: #{forward_uncond.51} parent=11 // pred_check_branch
        %151 = sbr.rel (%p149) target = $region20
      $region19: #{forward_uncond.51} parent=11 // pred_region
        %p152 = scmp.lt.s32.totalorder %s19, 0
        %s153 = scalar_select %p152, %s19, 0
        %s154 = scalar_lea.vmem %s2, %s153
      $region20: #{forward_uncond.51} parent=11 // pred_fallthru
        _
    $region12: #{forward_uncond.51} parent=5 // pred_fallthru
      _
    %p155 = scmp.lt.s32.totalorder %s9, 4
    // Predicated region
    $region21: #{forward_uncond.51} parent=5 // pred_check
      %p156 = pneg %p155
    $region22: #{forward_uncond.51} parent=5 // pred_check_branch
      %158 = sbr.rel (%p156) target = $region24
    $region23: #{forward_uncond.51} parent=5 // pred_region
      // Predicated region
      $region25: #{forward_uncond.51} parent=23 // pred_check
        %p159 = pneg %p41
      $region26: #{forward_uncond.51} parent=23 // pred_check_branch
        %161 = sbr.rel (%p159) target = $region28
      $region27: #{forward_uncond.51} parent=23 // pred_region
        %s162 = smul.u32 32, %s16
        %p163 = scmp.lt.s32.totalorder %s162, 127
        %s164 = scalar_select %p163, %s162, 127
        %s165 = smul.addr %s164, 9
        %s166 = smul.addr %s165, 4
        %s167 = scalar_lea.vmem %s0, %s166
        %s168 = smul.u32 32, %s16
      $region28: #{forward_uncond.51} parent=23 // pred_fallthru
        _
    $region24: #{forward_uncond.51} parent=5 // pred_fallthru
      _
    %p169 = scmp.le.s32.totalorder 1, %s9
    %p170 = scmp.lt.s32.totalorder %s9, 5
    %p171 = pnand %p169, %p170
    %p172 = pneg %p171
    // Predicated region
    $region29: #{forward_uncond.51} parent=5 // pred_check
      _
    $region30: #{forward_uncond.51} parent=5 // pred_check_branch
      %174 = sbr.rel (%p171) target = $region32
    $region31: #{forward_uncond.51} parent=5 // pred_region
      %s175 = ssub.s32 %s9, 1
      %s176 = smul.u32 32, %s18
      %p177 = scmp.lt.s32.totalorder %s176, 127
      %s178 = scalar_select %p177, %s176, 127
      %s179 = smul.addr %s178, 9
      %s180 = smul.addr %s179, 4
      %s181 = scalar_lea.vmem %s0, %s180
      %p182 = pneg %p47
      %p183 = pneg %p44
      %p184 = scmp.lt.s32.totalorder %s19, 0
      %s185 = scalar_select %p184, %s19, 0
      %s186 = smul.addr %s185, 4
      %s187 = scalar_lea.vmem %s1, %s186
      %p188 = pneg %p73
      %p189 = pneg %p70
      %p190 = scmp.lt.s32.totalorder %s19, 0
      %s191 = scalar_select %p190, %s19, 0
      %s192 = scalar_lea.vmem %s2, %s191
      %p193 = pneg %p99
      %p194 = pneg %p96
      %p195 = pneg %p127
      %p196 = pneg %p124
      %s197 = smul.u32 32, %s18
      %p198 = scmp.lt.s32.totalorder %s197, 127
      %s199 = scalar_select %p198, %s197, 127
      %p200 = scmp.lt.s32.totalorder %s19, 0
      %s201 = scalar_select %p200, %s19, 0
      %s202 = sadd.s32 %s201, %s199
      %s203 = smul.addr %s202, 4
      %s204 = scalar_lea.vmem %s3, %s203
      %s205 = smul.u32 32, %s18
      %p206 = scmp.lt.s32.totalorder %s205, 127
      %s207 = scalar_select %p206, %s205, 127
      %s208 = smul.addr %s207, 9
      %s209 = smul.addr %s208, 4
      %s210 = scalar_lea.vmem %s0, %s209
      %s211 = smul.u32 32, %s18
      %p212 = scmp.lt.s32.totalorder %s19, 0
      %s213 = scalar_select %p212, %s19, 0
      %s214 = smul.addr %s213, 4
      %s215 = scalar_lea.vmem %s1, %s214
      %p216 = scmp.lt.s32.totalorder %s19, 0
      %s217 = scalar_select %p216, %s19, 0
      %s218 = scalar_lea.vmem %s2, %s217
      %s219 = smul.u32 32, %s18
      %p220 = scmp.lt.s32.totalorder %s219, 127
      %s221 = scalar_select %p220, %s219, 127
      %p222 = scmp.lt.s32.totalorder %s19, 0
      %s223 = scalar_select %p222, %s19, 0
      %s224 = sadd.s32 %s223, %s221
      %s225 = smul.addr %s224, 4
      %s226 = scalar_lea.vmem %s3, %s225
      %s227 = smul.u32 32, %s18
      %v229 = vld [vmem:[%s210] sm:$0xff]
      %v230 = vld [vmem:[%s210 + $0x8] sm:$0xff]
      %v231 = vld [vmem:[%s210 + $0x10] sm:$0xff]
      %v232 = vld [vmem:[%s210 + $0x18] sm:$0xff]
      %v233 = vld [vmem:[%s210 + $0x20] sm:$0xf]
      %v234 = vld [vmem:[%s210 + $0x24] sm:$0xff]
      %v235 = vld [vmem:[%s210 + $0x2c] sm:$0xff]
      %v236 = vld [vmem:[%s210 + $0x34] sm:$0xff]
      %v237 = vld [vmem:[%s210 + $0x3c] sm:$0xff]
      %v238 = vld [vmem:[%s210 + $0x44] sm:$0xf]
      %v239 = vld [vmem:[%s210 + $0x48] sm:$0xff]
      %v240 = vld [vmem:[%s210 + $0x50] sm:$0xff]
      %v241 = vld [vmem:[%s210 + $0x58] sm:$0xff]
      %v242 = vld [vmem:[%s210 + $0x60] sm:$0xff]
      %v243 = vld [vmem:[%s210 + $0x68] sm:$0xf]
      %v244 = vld [vmem:[%s210 + $0x6c] sm:$0xff]
      %v245 = vld [vmem:[%s210 + $0x74] sm:$0xff]
      %v246 = vld [vmem:[%s210 + $0x7c] sm:$0xff]
      %v247 = vld [vmem:[%s210 + $0x84] sm:$0xff]
      %v248 = vld [vmem:[%s210 + $0x8c] sm:$0xf]
      %v249 = vld [vmem:[%s210 + $0x90] sm:$0xff]
      %v250 = vld [vmem:[%s210 + $0x98] sm:$0xff]
      %v251 = vld [vmem:[%s210 + $0xa0] sm:$0xff]
      %v252 = vld [vmem:[%s210 + $0xa8] sm:$0xff]
      %v253 = vld [vmem:[%s210 + $0xb0] sm:$0xf]
      %v254 = vld [vmem:[%s210 + $0xb4] sm:$0xff]
      %v255 = vld [vmem:[%s210 + $0xbc] sm:$0xff]
      %v256 = vld [vmem:[%s210 + $0xc4] sm:$0xff]
      %v257 = vld [vmem:[%s210 + $0xcc] sm:$0xff]
      %v258 = vld [vmem:[%s210 + $0xd4] sm:$0xf]
      %v259 = vld [vmem:[%s210 + $0xd8] sm:$0xff]
      %v260 = vld [vmem:[%s210 + $0xe0] sm:$0xff]
      %v261 = vld [vmem:[%s210 + $0xe8] sm:$0xff]
      %v262 = vld [vmem:[%s210 + $0xf0] sm:$0xff]
      %v263 = vld [vmem:[%s210 + $0xf8] sm:$0xf]
      %v264 = vld [vmem:[%s210 + $0xfc] sm:$0xff]
      %v265 = vld [vmem:[%s210 + $0x104] sm:$0xff]
      %v266 = vld [vmem:[%s210 + $0x10c] sm:$0xff]
      %v267 = vld [vmem:[%s210 + $0x114] sm:$0xff]
      %v268 = vld [vmem:[%s210 + $0x11c] sm:$0xf]
      %v269 = vld [vmem:[%s210 + $0x120] sm:$0xff]
      %v270 = vld [vmem:[%s210 + $0x128] sm:$0xff]
      %v271 = vld [vmem:[%s210 + $0x130] sm:$0xff]
      %v272 = vld [vmem:[%s210 + $0x138] sm:$0xff]
      %v273 = vld [vmem:[%s210 + $0x140] sm:$0xf]
      %v274 = vld [vmem:[%s210 + $0x144] sm:$0xff]
      %v275 = vld [vmem:[%s210 + $0x14c] sm:$0xff]
      %v276 = vld [vmem:[%s210 + $0x154] sm:$0xff]
      %v277 = vld [vmem:[%s210 + $0x15c] sm:$0xff]
      %v278 = vld [vmem:[%s210 + $0x164] sm:$0xf]
      %v279 = vld [vmem:[%s210 + $0x168] sm:$0xff]
      %v280 = vld [vmem:[%s210 + $0x170] sm:$0xff]
      %v281 = vld [vmem:[%s210 + $0x178] sm:$0xff]
      %v282 = vld [vmem:[%s210 + $0x180] sm:$0xff]
      %v283 = vld [vmem:[%s210 + $0x188] sm:$0xf]
      %v284 = vld [vmem:[%s210 + $0x18c] sm:$0xff]
      %v285 = vld [vmem:[%s210 + $0x194] sm:$0xff]
      %v286 = vld [vmem:[%s210 + $0x19c] sm:$0xff]
      %v287 = vld [vmem:[%s210 + $0x1a4] sm:$0xff]
      %v288 = vld [vmem:[%s210 + $0x1ac] sm:$0xf]
      %v289 = vld [vmem:[%s210 + $0x1b0] sm:$0xff]
      %v290 = vld [vmem:[%s210 + $0x1b8] sm:$0xff]
      %v291 = vld [vmem:[%s210 + $0x1c0] sm:$0xff]
      %v292 = vld [vmem:[%s210 + $0x1c8] sm:$0xff]
      %v293 = vld [vmem:[%s210 + $0x1d0] sm:$0xf]
      %v294 = vld [vmem:[%s210 + $0x1d4] sm:$0xff]
      %v295 = vld [vmem:[%s210 + $0x1dc] sm:$0xff]
      %v296 = vld [vmem:[%s210 + $0x1e4] sm:$0xff]
      %v297 = vld [vmem:[%s210 + $0x1ec] sm:$0xff]
      %v298 = vld [vmem:[%s210 + $0x1f4] sm:$0xf]
      %v299 = vld [vmem:[%s210 + $0x1f8] sm:$0xff]
      %v300 = vld [vmem:[%s210 + $0x200] sm:$0xff]
      %v301 = vld [vmem:[%s210 + $0x208] sm:$0xff]
      %v302 = vld [vmem:[%s210 + $0x210] sm:$0xff]
      %v303 = vld [vmem:[%s210 + $0x218] sm:$0xf]
      %v304 = vld [vmem:[%s210 + $0x21c] sm:$0xff]
      %v305 = vld [vmem:[%s210 + $0x224] sm:$0xff]
      %v306 = vld [vmem:[%s210 + $0x22c] sm:$0xff]
      %v307 = vld [vmem:[%s210 + $0x234] sm:$0xff]
      %v308 = vld [vmem:[%s210 + $0x23c] sm:$0xf]
      %v309 = vld [vmem:[%s210 + $0x240] sm:$0xff]
      %v310 = vld [vmem:[%s210 + $0x248] sm:$0xff]
      %v311 = vld [vmem:[%s210 + $0x250] sm:$0xff]
      %v312 = vld [vmem:[%s210 + $0x258] sm:$0xff]
      %v313 = vld [vmem:[%s210 + $0x260] sm:$0xf]
      %v314 = vld [vmem:[%s210 + $0x264] sm:$0xff]
      %v315 = vld [vmem:[%s210 + $0x26c] sm:$0xff]
      %v316 = vld [vmem:[%s210 + $0x274] sm:$0xff]
      %v317 = vld [vmem:[%s210 + $0x27c] sm:$0xff]
      %v318 = vld [vmem:[%s210 + $0x284] sm:$0xf]
      %v319 = vld [vmem:[%s210 + $0x288] sm:$0xff]
      %v320 = vld [vmem:[%s210 + $0x290] sm:$0xff]
      %v321 = vld [vmem:[%s210 + $0x298] sm:$0xff]
      %v322 = vld [vmem:[%s210 + $0x2a0] sm:$0xff]
      %v323 = vld [vmem:[%s210 + $0x2a8] sm:$0xf]
      %v324 = vld [vmem:[%s210 + $0x2ac] sm:$0xff]
      %v325 = vld [vmem:[%s210 + $0x2b4] sm:$0xff]
      %v326 = vld [vmem:[%s210 + $0x2bc] sm:$0xff]
      %v327 = vld [vmem:[%s210 + $0x2c4] sm:$0xff]
      %v328 = vld [vmem:[%s210 + $0x2cc] sm:$0xf]
      %v329 = vld [vmem:[%s210 + $0x2d0] sm:$0xff]
      %v330 = vld [vmem:[%s210 + $0x2d8] sm:$0xff]
      %v331 = vld [vmem:[%s210 + $0x2e0] sm:$0xff]
      %v332 = vld [vmem:[%s210 + $0x2e8] sm:$0xff]
      %v333 = vld [vmem:[%s210 + $0x2f0] sm:$0xf]
      %v334 = vld [vmem:[%s210 + $0x2f4] sm:$0xff]
      %v335 = vld [vmem:[%s210 + $0x2fc] sm:$0xff]
      %v336 = vld [vmem:[%s210 + $0x304] sm:$0xff]
      %v337 = vld [vmem:[%s210 + $0x30c] sm:$0xff]
      %v338 = vld [vmem:[%s210 + $0x314] sm:$0xf]
      %v339 = vld [vmem:[%s210 + $0x318] sm:$0xff]
      %v340 = vld [vmem:[%s210 + $0x320] sm:$0xff]
      %v341 = vld [vmem:[%s210 + $0x328] sm:$0xff]
      %v342 = vld [vmem:[%s210 + $0x330] sm:$0xff]
      %v343 = vld [vmem:[%s210 + $0x338] sm:$0xf]
      %v344 = vld [vmem:[%s210 + $0x33c] sm:$0xff]
      %v345 = vld [vmem:[%s210 + $0x344] sm:$0xff]
      %v346 = vld [vmem:[%s210 + $0x34c] sm:$0xff]
      %v347 = vld [vmem:[%s210 + $0x354] sm:$0xff]
      %v348 = vld [vmem:[%s210 + $0x35c] sm:$0xf]
      %v349 = vld [vmem:[%s210 + $0x360] sm:$0xff]
      %v350 = vld [vmem:[%s210 + $0x368] sm:$0xff]
      %v351 = vld [vmem:[%s210 + $0x370] sm:$0xff]
      %v352 = vld [vmem:[%s210 + $0x378] sm:$0xff]
      %v353 = vld [vmem:[%s210 + $0x380] sm:$0xf]
      %v354 = vld [vmem:[%s210 + $0x384] sm:$0xff]
      %v355 = vld [vmem:[%s210 + $0x38c] sm:$0xff]
      %v356 = vld [vmem:[%s210 + $0x394] sm:$0xff]
      %v357 = vld [vmem:[%s210 + $0x39c] sm:$0xff]
      %v358 = vld [vmem:[%s210 + $0x3a4] sm:$0xf]
      %v359 = vld [vmem:[%s210 + $0x3a8] sm:$0xff]
      %v360 = vld [vmem:[%s210 + $0x3b0] sm:$0xff]
      %v361 = vld [vmem:[%s210 + $0x3b8] sm:$0xff]
      %v362 = vld [vmem:[%s210 + $0x3c0] sm:$0xff]
      %v363 = vld [vmem:[%s210 + $0x3c8] sm:$0xf]
      %v364 = vld [vmem:[%s210 + $0x3cc] sm:$0xff]
      %v365 = vld [vmem:[%s210 + $0x3d4] sm:$0xff]
      %v366 = vld [vmem:[%s210 + $0x3dc] sm:$0xff]
      %v367 = vld [vmem:[%s210 + $0x3e4] sm:$0xff]
      %v368 = vld [vmem:[%s210 + $0x3ec] sm:$0xf]
      %v369 = vld [vmem:[%s210 + $0x3f0] sm:$0xff]
      %v370 = vld [vmem:[%s210 + $0x3f8] sm:$0xff]
      %v371 = vld [vmem:[%s210 + $0x400] sm:$0xff]
      %v372 = vld [vmem:[%s210 + $0x408] sm:$0xff]
      %v373 = vld [vmem:[%s210 + $0x410] sm:$0xf]
      %v374 = vld [vmem:[%s210 + $0x414] sm:$0xff]
      %v375 = vld [vmem:[%s210 + $0x41c] sm:$0xff]
      %v376 = vld [vmem:[%s210 + $0x424] sm:$0xff]
      %v377 = vld [vmem:[%s210 + $0x42c] sm:$0xff]
      %v378 = vld [vmem:[%s210 + $0x434] sm:$0xf]
      %v379 = vld [vmem:[%s210 + $0x438] sm:$0xff]
      %v380 = vld [vmem:[%s210 + $0x440] sm:$0xff]
      %v381 = vld [vmem:[%s210 + $0x448] sm:$0xff]
      %v382 = vld [vmem:[%s210 + $0x450] sm:$0xff]
      %v383 = vld [vmem:[%s210 + $0x458] sm:$0xf]
      %v384 = vld [vmem:[%s210 + $0x45c] sm:$0xff]
      %v385 = vld [vmem:[%s210 + $0x464] sm:$0xff]
      %v386 = vld [vmem:[%s210 + $0x46c] sm:$0xff]
      %v387 = vld [vmem:[%s210 + $0x474] sm:$0xff]
      %v388 = vld [vmem:[%s210 + $0x47c] sm:$0xf]
      %v389 = vld [vmem:[%s215] sm:$0xf]
      %v390 = vld [vmem:[%s215 + $0x4] sm:$0xf]
      %v391 = vld [vmem:[%s215 + $0x8] sm:$0xf]
      %v392 = vld [vmem:[%s215 + $0xc] sm:$0xf]
      %v393 = vld [vmem:[%s215 + $0x10] sm:$0xf]
      %v394 = vld [vmem:[%s215 + $0x14] sm:$0xf]
      %v395 = vld [vmem:[%s215 + $0x18] sm:$0xf]
      %v396 = vld [vmem:[%s215 + $0x1c] sm:$0xf]
      %v397 = vld [vmem:[%s215 + $0x20] sm:$0xf]
      %v398 = vld [vmem:[%s215 + $0x24] sm:$0xf]
      %v399 = vld [vmem:[%s215 + $0x28] sm:$0xf]
      %v400 = vld [vmem:[%s215 + $0x2c] sm:$0xf]
      %v401 = vld [vmem:[%s215 + $0x30] sm:$0xf]
      %v402 = vld [vmem:[%s215 + $0x34] sm:$0xf]
      %v403 = vld [vmem:[%s215 + $0x38] sm:$0xf]
      %v404 = vld [vmem:[%s215 + $0x3c] sm:$0xf]
      %v405 = vld [vmem:[%s215 + $0x40] sm:$0xf]
      %v406 = vld [vmem:[%s215 + $0x44] sm:$0xf]
      %v407 = vld [vmem:[%s215 + $0x48] sm:$0xf]
      %v408 = vld [vmem:[%s215 + $0x4c] sm:$0xf]
      %v409 = vld [vmem:[%s215 + $0x50] sm:$0xf]
      %v410 = vld [vmem:[%s215 + $0x54] sm:$0xf]
      %v411 = vld [vmem:[%s215 + $0x58] sm:$0xf]
      %v412 = vld [vmem:[%s215 + $0x5c] sm:$0xf]
      %v413 = vld [vmem:[%s215 + $0x60] sm:$0xf]
      %v414 = vld [vmem:[%s215 + $0x64] sm:$0xf]
      %v415 = vld [vmem:[%s215 + $0x68] sm:$0xf]
      %v416 = vld [vmem:[%s215 + $0x6c] sm:$0xf]
      %v417 = vld [vmem:[%s215 + $0x70] sm:$0xf]
      %v418 = vld [vmem:[%s215 + $0x74] sm:$0xf]
      %v419 = vld [vmem:[%s215 + $0x78] sm:$0xf]
      %v420 = vld [vmem:[%s215 + $0x7c] sm:$0xf]
      %v421 = vld [vmem:[%s215 + $0x80] sm:$0xf]
      %v422 = vld [vmem:[%s215 + $0x84] sm:$0xf]
      %v423 = vld [vmem:[%s215 + $0x88] sm:$0xf]
      %v424 = vld [vmem:[%s215 + $0x8c] sm:$0xf]
      %v425 = vld [vmem:[%s215 + $0x90] sm:$0xf]
      %v426 = vld [vmem:[%s215 + $0x94] sm:$0xf]
      %v427 = vld [vmem:[%s215 + $0x98] sm:$0xf]
      %v428 = vld [vmem:[%s215 + $0x9c] sm:$0xf]
      %v429 = vld [vmem:[%s215 + $0xa0] sm:$0xf]
      %v430 = vld [vmem:[%s215 + $0xa4] sm:$0xf]
      %v431 = vld [vmem:[%s215 + $0xa8] sm:$0xf]
      %v432 = vld [vmem:[%s215 + $0xac] sm:$0xf]
      %v433 = vld [vmem:[%s215 + $0xb0] sm:$0xf]
      %v434 = vld [vmem:[%s215 + $0xb4] sm:$0xf]
      %v435 = vld [vmem:[%s215 + $0xb8] sm:$0xf]
      %v436 = vld [vmem:[%s215 + $0xbc] sm:$0xf]
      %v437 = vld [vmem:[%s215 + $0xc0] sm:$0xf]
      %v438 = vld [vmem:[%s215 + $0xc4] sm:$0xf]
      %v439 = vld [vmem:[%s215 + $0xc8] sm:$0xf]
      %v440 = vld [vmem:[%s215 + $0xcc] sm:$0xf]
      %v441 = vld [vmem:[%s215 + $0xd0] sm:$0xf]
      %v442 = vld [vmem:[%s215 + $0xd4] sm:$0xf]
      %v443 = vld [vmem:[%s215 + $0xd8] sm:$0xf]
      %v444 = vld [vmem:[%s215 + $0xdc] sm:$0xf]
      %v445 = vld [vmem:[%s215 + $0xe0] sm:$0xf]
      %v446 = vld [vmem:[%s215 + $0xe4] sm:$0xf]
      %v447 = vld [vmem:[%s215 + $0xe8] sm:$0xf]
      %v448 = vld [vmem:[%s215 + $0xec] sm:$0xf]
      %v449 = vld [vmem:[%s215 + $0xf0] sm:$0xf]
      %v450 = vld [vmem:[%s215 + $0xf4] sm:$0xf]
      %v451 = vld [vmem:[%s215 + $0xf8] sm:$0xf]
      %v452 = vld [vmem:[%s215 + $0xfc] sm:$0xf]
      %v453 = vld [vmem:[%s215 + $0x100] sm:$0xf]
      %v454 = vld [vmem:[%s215 + $0x104] sm:$0xf]
      %v455 = vld [vmem:[%s215 + $0x108] sm:$0xf]
      %v456 = vld [vmem:[%s215 + $0x10c] sm:$0xf]
      %v457 = vld [vmem:[%s215 + $0x110] sm:$0xf]
      %v458 = vld [vmem:[%s215 + $0x114] sm:$0xf]
      %v459 = vld [vmem:[%s215 + $0x118] sm:$0xf]
      %v460 = vld [vmem:[%s215 + $0x11c] sm:$0xf]
      %v461 = vld [vmem:[%s215 + $0x120] sm:$0xf]
      %v462 = vld [vmem:[%s215 + $0x124] sm:$0xf]
      %v463 = vld [vmem:[%s215 + $0x128] sm:$0xf]
      %v464 = vld [vmem:[%s215 + $0x12c] sm:$0xf]
      %v465 = vld [vmem:[%s215 + $0x130] sm:$0xf]
      %v466 = vld [vmem:[%s215 + $0x134] sm:$0xf]
      %v467 = vld [vmem:[%s215 + $0x138] sm:$0xf]
      %v468 = vld [vmem:[%s215 + $0x13c] sm:$0xf]
      %v469 = vld [vmem:[%s215 + $0x140] sm:$0xf]
      %v470 = vld [vmem:[%s215 + $0x144] sm:$0xf]
      %v471 = vld [vmem:[%s215 + $0x148] sm:$0xf]
      %v472 = vld [vmem:[%s215 + $0x14c] sm:$0xf]
      %v473 = vld [vmem:[%s215 + $0x150] sm:$0xf]
      %v474 = vld [vmem:[%s215 + $0x154] sm:$0xf]
      %v475 = vld [vmem:[%s215 + $0x158] sm:$0xf]
      %v476 = vld [vmem:[%s215 + $0x15c] sm:$0xf]
      %v477 = vld [vmem:[%s215 + $0x160] sm:$0xf]
      %v478 = vld [vmem:[%s215 + $0x164] sm:$0xf]
      %v479 = vld [vmem:[%s215 + $0x168] sm:$0xf]
      %v480 = vld [vmem:[%s215 + $0x16c] sm:$0xf]
      %v481 = vld [vmem:[%s215 + $0x170] sm:$0xf]
      %v482 = vld [vmem:[%s215 + $0x174] sm:$0xf]
      %v483 = vld [vmem:[%s215 + $0x178] sm:$0xf]
      %v484 = vld [vmem:[%s215 + $0x17c] sm:$0xf]
      %v485 = vld [vmem:[%s215 + $0x180] sm:$0xf]
      %v486 = vld [vmem:[%s215 + $0x184] sm:$0xf]
      %v487 = vld [vmem:[%s215 + $0x188] sm:$0xf]
      %v488 = vld [vmem:[%s215 + $0x18c] sm:$0xf]
      %v489 = vld [vmem:[%s215 + $0x190] sm:$0xf]
      %v490 = vld [vmem:[%s215 + $0x194] sm:$0xf]
      %v491 = vld [vmem:[%s215 + $0x198] sm:$0xf]
      %v492 = vld [vmem:[%s215 + $0x19c] sm:$0xf]
      %v493 = vld [vmem:[%s215 + $0x1a0] sm:$0xf]
      %v494 = vld [vmem:[%s215 + $0x1a4] sm:$0xf]
      %v495 = vld [vmem:[%s215 + $0x1a8] sm:$0xf]
      %v496 = vld [vmem:[%s215 + $0x1ac] sm:$0xf]
      %v497 = vld [vmem:[%s215 + $0x1b0] sm:$0xf]
      %v498 = vld [vmem:[%s215 + $0x1b4] sm:$0xf]
      %v499 = vld [vmem:[%s215 + $0x1b8] sm:$0xf]
      %v500 = vld [vmem:[%s215 + $0x1bc] sm:$0xf]
      %v501 = vld [vmem:[%s215 + $0x1c0] sm:$0xf]
      %v502 = vld [vmem:[%s215 + $0x1c4] sm:$0xf]
      %v503 = vld [vmem:[%s215 + $0x1c8] sm:$0xf]
      %v504 = vld [vmem:[%s215 + $0x1cc] sm:$0xf]
      %v505 = vld [vmem:[%s215 + $0x1d0] sm:$0xf]
      %v506 = vld [vmem:[%s215 + $0x1d4] sm:$0xf]
      %v507 = vld [vmem:[%s215 + $0x1d8] sm:$0xf]
      %v508 = vld [vmem:[%s215 + $0x1dc] sm:$0xf]
      %v509 = vld [vmem:[%s215 + $0x1e0] sm:$0xf]
      %v510 = vld [vmem:[%s215 + $0x1e4] sm:$0xf]
      %v511 = vld [vmem:[%s215 + $0x1e8] sm:$0xf]
      %v512 = vld [vmem:[%s215 + $0x1ec] sm:$0xf]
      %v513 = vld [vmem:[%s215 + $0x1f0] sm:$0xf]
      %v514 = vld [vmem:[%s215 + $0x1f4] sm:$0xf]
      %v515 = vld [vmem:[%s215 + $0x1f8] sm:$0xf]
      %v516 = vld [vmem:[%s215 + $0x1fc] sm:$0xf]
      %v517 = vld [vmem:[%s215 + $0x200] sm:$0xf]
      %v518 = vld [vmem:[%s215 + $0x204] sm:$0xf]
      %v519 = vld [vmem:[%s215 + $0x208] sm:$0xf]
      %v520 = vld [vmem:[%s215 + $0x20c] sm:$0xf]
      %v521 = vld [vmem:[%s215 + $0x210] sm:$0xf]
      %v522 = vld [vmem:[%s215 + $0x214] sm:$0xf]
      %v523 = vld [vmem:[%s215 + $0x218] sm:$0xf]
      %v524 = vld [vmem:[%s215 + $0x21c] sm:$0xf]
      %v525 = vld [vmem:[%s215 + $0x220] sm:$0xf]
      %v526 = vld [vmem:[%s215 + $0x224] sm:$0xf]
      %v527 = vld [vmem:[%s215 + $0x228] sm:$0xf]
      %v528 = vld [vmem:[%s215 + $0x22c] sm:$0xf]
      %v529 = vld [vmem:[%s215 + $0x230] sm:$0xf]
      %v530 = vld [vmem:[%s215 + $0x234] sm:$0xf]
      %v531 = vld [vmem:[%s215 + $0x238] sm:$0xf]
      %v532 = vld [vmem:[%s215 + $0x23c] sm:$0xf]
      %v533 = vld [vmem:[%s218] sm:$0x1]
      %v535 = vlaneseq
      %v536 = vshrl.u32 %v535, 7
      %v537 = vsub.s32 0, %v536
      %v538 = vrot.slane %v533, %v537
      %v700 = vunpack.c.l.b16 %v229
      %v701 = vunpack.c.h.b16 %v229
      %v702 = vunpack.c.l.b16 %v230
      %v703 = vunpack.c.h.b16 %v230
      %v704 = vunpack.c.l.b16 %v231
      %v705 = vunpack.c.h.b16 %v231
      %v706 = vunpack.c.l.b16 %v232
      %v707 = vunpack.c.h.b16 %v232
      %v708 = vunpack.c.l.b16 %v233
      %v709 = vunpack.c.l.b16 %v234
      %v710 = vunpack.c.h.b16 %v234
      %v711 = vunpack.c.l.b16 %v235
      %v712 = vunpack.c.h.b16 %v235
      %v713 = vunpack.c.l.b16 %v236
      %v714 = vunpack.c.h.b16 %v236
      %v715 = vunpack.c.l.b16 %v237
      %v716 = vunpack.c.h.b16 %v237
      %v717 = vunpack.c.l.b16 %v238
      %v718 = vunpack.c.l.b16 %v239
      %v719 = vunpack.c.h.b16 %v239
      %v720 = vunpack.c.l.b16 %v240
      %v721 = vunpack.c.h.b16 %v240
      %v722 = vunpack.c.l.b16 %v241
      %v723 = vunpack.c.h.b16 %v241
      %v724 = vunpack.c.l.b16 %v242
      %v725 = vunpack.c.h.b16 %v242
      %v726 = vunpack.c.l.b16 %v243
      %v727 = vunpack.c.l.b16 %v244
      %v728 = vunpack.c.h.b16 %v244
      %v729 = vunpack.c.l.b16 %v245
      %v730 = vunpack.c.h.b16 %v245
      %v731 = vunpack.c.l.b16 %v246
      %v732 = vunpack.c.h.b16 %v246
      %v733 = vunpack.c.l.b16 %v247
      %v734 = vunpack.c.h.b16 %v247
      %v735 = vunpack.c.l.b16 %v248
      %v736 = vunpack.c.l.b16 %v249
      %v737 = vunpack.c.h.b16 %v249
      %v738 = vunpack.c.l.b16 %v250
      %v739 = vunpack.c.h.b16 %v250
      %v740 = vunpack.c.l.b16 %v251
      %v741 = vunpack.c.h.b16 %v251
      %v742 = vunpack.c.l.b16 %v252
      %v743 = vunpack.c.h.b16 %v252
      %v744 = vunpack.c.l.b16 %v253
      %v745 = vunpack.c.l.b16 %v254
      %v746 = vunpack.c.h.b16 %v254
      %v747 = vunpack.c.l.b16 %v255
      %v748 = vunpack.c.h.b16 %v255
      %v749 = vunpack.c.l.b16 %v256
      %v750 = vunpack.c.h.b16 %v256
      %v751 = vunpack.c.l.b16 %v257
      %v752 = vunpack.c.h.b16 %v257
      %v753 = vunpack.c.l.b16 %v258
      %v754 = vunpack.c.l.b16 %v259
      %v755 = vunpack.c.h.b16 %v259
      %v756 = vunpack.c.l.b16 %v260
      %v757 = vunpack.c.h.b16 %v260
      %v758 = vunpack.c.l.b16 %v261
      %v759 = vunpack.c.h.b16 %v261
      %v760 = vunpack.c.l.b16 %v262
      %v761 = vunpack.c.h.b16 %v262
      %v762 = vunpack.c.l.b16 %v263
      %v763 = vunpack.c.l.b16 %v264
      %v764 = vunpack.c.h.b16 %v264
      %v765 = vunpack.c.l.b16 %v265
      %v766 = vunpack.c.h.b16 %v265
      %v767 = vunpack.c.l.b16 %v266
      %v768 = vunpack.c.h.b16 %v266
      %v769 = vunpack.c.l.b16 %v267
      %v770 = vunpack.c.h.b16 %v267
      %v771 = vunpack.c.l.b16 %v268
      %v772 = vunpack.c.l.b16 %v269
      %v773 = vunpack.c.h.b16 %v269
      %v774 = vunpack.c.l.b16 %v270
      %v775 = vunpack.c.h.b16 %v270
      %v776 = vunpack.c.l.b16 %v271
      %v777 = vunpack.c.h.b16 %v271
      %v778 = vunpack.c.l.b16 %v272
      %v779 = vunpack.c.h.b16 %v272
      %v780 = vunpack.c.l.b16 %v273
      %v781 = vunpack.c.l.b16 %v274
      %v782 = vunpack.c.h.b16 %v274
      %v783 = vunpack.c.l.b16 %v275
      %v784 = vunpack.c.h.b16 %v275
      %v785 = vunpack.c.l.b16 %v276
      %v786 = vunpack.c.h.b16 %v276
      %v787 = vunpack.c.l.b16 %v277
      %v788 = vunpack.c.h.b16 %v277
      %v789 = vunpack.c.l.b16 %v278
      %v790 = vunpack.c.l.b16 %v279
      %v791 = vunpack.c.h.b16 %v279
      %v792 = vunpack.c.l.b16 %v280
      %v793 = vunpack.c.h.b16 %v280
      %v794 = vunpack.c.l.b16 %v281
      %v795 = vunpack.c.h.b16 %v281
      %v796 = vunpack.c.l.b16 %v282
      %v797 = vunpack.c.h.b16 %v282
      %v798 = vunpack.c.l.b16 %v283
      %v799 = vunpack.c.l.b16 %v284
      %v800 = vunpack.c.h.b16 %v284
      %v801 = vunpack.c.l.b16 %v285
      %v802 = vunpack.c.h.b16 %v285
      %v803 = vunpack.c.l.b16 %v286
      %v804 = vunpack.c.h.b16 %v286
      %v805 = vunpack.c.l.b16 %v287
      %v806 = vunpack.c.h.b16 %v287
      %v807 = vunpack.c.l.b16 %v288
      %v808 = vunpack.c.l.b16 %v289
      %v809 = vunpack.c.h.b16 %v289
      %v810 = vunpack.c.l.b16 %v290
      %v811 = vunpack.c.h.b16 %v290
      %v812 = vunpack.c.l.b16 %v291
      %v813 = vunpack.c.h.b16 %v291
      %v814 = vunpack.c.l.b16 %v292
      %v815 = vunpack.c.h.b16 %v292
      %v816 = vunpack.c.l.b16 %v293
      %v817 = vunpack.c.l.b16 %v294
      %v818 = vunpack.c.h.b16 %v294
      %v819 = vunpack.c.l.b16 %v295
      %v820 = vunpack.c.h.b16 %v295
      %v821 = vunpack.c.l.b16 %v296
      %v822 = vunpack.c.h.b16 %v296
      %v823 = vunpack.c.l.b16 %v297
      %v824 = vunpack.c.h.b16 %v297
      %v825 = vunpack.c.l.b16 %v298
      %v826 = vunpack.c.l.b16 %v299
      %v827 = vunpack.c.h.b16 %v299
      %v828 = vunpack.c.l.b16 %v300
      %v829 = vunpack.c.h.b16 %v300
      %v830 = vunpack.c.l.b16 %v301
      %v831 = vunpack.c.h.b16 %v301
      %v832 = vunpack.c.l.b16 %v302
      %v833 = vunpack.c.h.b16 %v302
      %v834 = vunpack.c.l.b16 %v303
      %v835 = vunpack.c.l.b16 %v304
      %v836 = vunpack.c.h.b16 %v304
      %v837 = vunpack.c.l.b16 %v305
      %v838 = vunpack.c.h.b16 %v305
      %v839 = vunpack.c.l.b16 %v306
      %v840 = vunpack.c.h.b16 %v306
      %v841 = vunpack.c.l.b16 %v307
      %v842 = vunpack.c.h.b16 %v307
      %v843 = vunpack.c.l.b16 %v308
      %v844 = vunpack.c.l.b16 %v309
      %v845 = vunpack.c.h.b16 %v309
      %v846 = vunpack.c.l.b16 %v310
      %v847 = vunpack.c.h.b16 %v310
      %v848 = vunpack.c.l.b16 %v311
      %v849 = vunpack.c.h.b16 %v311
      %v850 = vunpack.c.l.b16 %v312
      %v851 = vunpack.c.h.b16 %v312
      %v852 = vunpack.c.l.b16 %v313
      %v853 = vunpack.c.l.b16 %v314
      %v854 = vunpack.c.h.b16 %v314
      %v855 = vunpack.c.l.b16 %v315
      %v856 = vunpack.c.h.b16 %v315
      %v857 = vunpack.c.l.b16 %v316
      %v858 = vunpack.c.h.b16 %v316
      %v859 = vunpack.c.l.b16 %v317
      %v860 = vunpack.c.h.b16 %v317
      %v861 = vunpack.c.l.b16 %v318
      %v862 = vunpack.c.l.b16 %v319
      %v863 = vunpack.c.h.b16 %v319
      %v864 = vunpack.c.l.b16 %v320
      %v865 = vunpack.c.h.b16 %v320
      %v866 = vunpack.c.l.b16 %v321
      %v867 = vunpack.c.h.b16 %v321
      %v868 = vunpack.c.l.b16 %v322
      %v869 = vunpack.c.h.b16 %v322
      %v870 = vunpack.c.l.b16 %v323
      %v871 = vunpack.c.l.b16 %v324
      %v872 = vunpack.c.h.b16 %v324
      %v873 = vunpack.c.l.b16 %v325
      %v874 = vunpack.c.h.b16 %v325
      %v875 = vunpack.c.l.b16 %v326
      %v876 = vunpack.c.h.b16 %v326
      %v877 = vunpack.c.l.b16 %v327
      %v878 = vunpack.c.h.b16 %v327
      %v879 = vunpack.c.l.b16 %v328
      %v880 = vunpack.c.l.b16 %v329
      %v881 = vunpack.c.h.b16 %v329
      %v882 = vunpack.c.l.b16 %v330
      %v883 = vunpack.c.h.b16 %v330
      %v884 = vunpack.c.l.b16 %v331
      %v885 = vunpack.c.h.b16 %v331
      %v886 = vunpack.c.l.b16 %v332
      %v887 = vunpack.c.h.b16 %v332
      %v888 = vunpack.c.l.b16 %v333
      %v889 = vunpack.c.l.b16 %v334
      %v890 = vunpack.c.h.b16 %v334
      %v891 = vunpack.c.l.b16 %v335
      %v892 = vunpack.c.h.b16 %v335
      %v893 = vunpack.c.l.b16 %v336
      %v894 = vunpack.c.h.b16 %v336
      %v895 = vunpack.c.l.b16 %v337
      %v896 = vunpack.c.h.b16 %v337
      %v897 = vunpack.c.l.b16 %v338
      %v898 = vunpack.c.l.b16 %v339
      %v899 = vunpack.c.h.b16 %v339
      %v900 = vunpack.c.l.b16 %v340
      %v901 = vunpack.c.h.b16 %v340
      %v902 = vunpack.c.l.b16 %v341
      %v903 = vunpack.c.h.b16 %v341
      %v904 = vunpack.c.l.b16 %v342
      %v905 = vunpack.c.h.b16 %v342
      %v906 = vunpack.c.l.b16 %v343
      %v907 = vunpack.c.l.b16 %v344
      %v908 = vunpack.c.h.b16 %v344
      %v909 = vunpack.c.l.b16 %v345
      %v910 = vunpack.c.h.b16 %v345
      %v911 = vunpack.c.l.b16 %v346
      %v912 = vunpack.c.h.b16 %v346
      %v913 = vunpack.c.l.b16 %v347
      %v914 = vunpack.c.h.b16 %v347
      %v915 = vunpack.c.l.b16 %v348
      %v916 = vunpack.c.l.b16 %v349
      %v917 = vunpack.c.h.b16 %v349
      %v918 = vunpack.c.l.b16 %v350
      %v919 = vunpack.c.h.b16 %v350
      %v920 = vunpack.c.l.b16 %v351
      %v921 = vunpack.c.h.b16 %v351
      %v922 = vunpack.c.l.b16 %v352
      %v923 = vunpack.c.h.b16 %v352
      %v924 = vunpack.c.l.b16 %v353
      %v925 = vunpack.c.l.b16 %v354
      %v926 = vunpack.c.h.b16 %v354
      %v927 = vunpack.c.l.b16 %v355
      %v928 = vunpack.c.h.b16 %v355
      %v929 = vunpack.c.l.b16 %v356
      %v930 = vunpack.c.h.b16 %v356
      %v931 = vunpack.c.l.b16 %v357
      %v932 = vunpack.c.h.b16 %v357
      %v933 = vunpack.c.l.b16 %v358
      %v934 = vunpack.c.l.b16 %v359
      %v935 = vunpack.c.h.b16 %v359
      %v936 = vunpack.c.l.b16 %v360
      %v937 = vunpack.c.h.b16 %v360
      %v938 = vunpack.c.l.b16 %v361
      %v939 = vunpack.c.h.b16 %v361
      %v940 = vunpack.c.l.b16 %v362
      %v941 = vunpack.c.h.b16 %v362
      %v942 = vunpack.c.l.b16 %v363
      %v943 = vunpack.c.l.b16 %v364
      %v944 = vunpack.c.h.b16 %v364
      %v945 = vunpack.c.l.b16 %v365
      %v946 = vunpack.c.h.b16 %v365
      %v947 = vunpack.c.l.b16 %v366
      %v948 = vunpack.c.h.b16 %v366
      %v949 = vunpack.c.l.b16 %v367
      %v950 = vunpack.c.h.b16 %v367
      %v951 = vunpack.c.l.b16 %v368
      %v952 = vunpack.c.l.b16 %v369
      %v953 = vunpack.c.h.b16 %v369
      %v954 = vunpack.c.l.b16 %v370
      %v955 = vunpack.c.h.b16 %v370
      %v956 = vunpack.c.l.b16 %v371
      %v957 = vunpack.c.h.b16 %v371
      %v958 = vunpack.c.l.b16 %v372
      %v959 = vunpack.c.h.b16 %v372
      %v960 = vunpack.c.l.b16 %v373
      %v961 = vunpack.c.l.b16 %v374
      %v962 = vunpack.c.h.b16 %v374
      %v963 = vunpack.c.l.b16 %v375
      %v964 = vunpack.c.h.b16 %v375
      %v965 = vunpack.c.l.b16 %v376
      %v966 = vunpack.c.h.b16 %v376
      %v967 = vunpack.c.l.b16 %v377
      %v968 = vunpack.c.h.b16 %v377
      %v969 = vunpack.c.l.b16 %v378
      %v970 = vunpack.c.l.b16 %v379
      %v971 = vunpack.c.h.b16 %v379
      %v972 = vunpack.c.l.b16 %v380
      %v973 = vunpack.c.h.b16 %v380
      %v974 = vunpack.c.l.b16 %v381
      %v975 = vunpack.c.h.b16 %v381
      %v976 = vunpack.c.l.b16 %v382
      %v977 = vunpack.c.h.b16 %v382
      %v978 = vunpack.c.l.b16 %v383
      %v979 = vunpack.c.l.b16 %v384
      %v980 = vunpack.c.h.b16 %v384
      %v981 = vunpack.c.l.b16 %v385
      %v982 = vunpack.c.h.b16 %v385
      %v983 = vunpack.c.l.b16 %v386
      %v984 = vunpack.c.h.b16 %v386
      %v985 = vunpack.c.l.b16 %v387
      %v986 = vunpack.c.h.b16 %v387
      %v987 = vunpack.c.l.b16 %v388
      %v988 = vpack.c.b16 %v709, %v700
      %v989 = vpack.c.b16 %v710, %v701
      %v990 = vpack.c.b16 %v711, %v702
      %v991 = vpack.c.b16 %v712, %v703
      %v992 = vpack.c.b16 %v713, %v704
      %v993 = vpack.c.b16 %v714, %v705
      %v994 = vpack.c.b16 %v715, %v706
      %v995 = vpack.c.b16 %v716, %v707
      %v996 = vpack.c.b16 %v717, %v708
      %v997 = vpack.c.b16 %v727, %v718
      %v998 = vpack.c.b16 %v728, %v719
      %v999 = vpack.c.b16 %v729, %v720
      %v1000 = vpack.c.b16 %v730, %v721
      %v1001 = vpack.c.b16 %v731, %v722
      %v1002 = vpack.c.b16 %v732, %v723
      %v1003 = vpack.c.b16 %v733, %v724
      %v1004 = vpack.c.b16 %v734, %v725
      %v1005 = vpack.c.b16 %v735, %v726
      %v1006 = vpack.c.b16 %v745, %v736
      %v1007 = vpack.c.b16 %v746, %v737
      %v1008 = vpack.c.b16 %v747, %v738
      %v1009 = vpack.c.b16 %v748, %v739
      %v1010 = vpack.c.b16 %v749, %v740
      %v1011 = vpack.c.b16 %v750, %v741
      %v1012 = vpack.c.b16 %v751, %v742
      %v1013 = vpack.c.b16 %v752, %v743
      %v1014 = vpack.c.b16 %v753, %v744
      %v1015 = vpack.c.b16 %v763, %v754
      %v1016 = vpack.c.b16 %v764, %v755
      %v1017 = vpack.c.b16 %v765, %v756
      %v1018 = vpack.c.b16 %v766, %v757
      %v1019 = vpack.c.b16 %v767, %v758
      %v1020 = vpack.c.b16 %v768, %v759
      %v1021 = vpack.c.b16 %v769, %v760
      %v1022 = vpack.c.b16 %v770, %v761
      %v1023 = vpack.c.b16 %v771, %v762
      %v1024 = vpack.c.b16 %v781, %v772
      %v1025 = vpack.c.b16 %v782, %v773
      %v1026 = vpack.c.b16 %v783, %v774
      %v1027 = vpack.c.b16 %v784, %v775
      %v1028 = vpack.c.b16 %v785, %v776
      %v1029 = vpack.c.b16 %v786, %v777
      %v1030 = vpack.c.b16 %v787, %v778
      %v1031 = vpack.c.b16 %v788, %v779
      %v1032 = vpack.c.b16 %v789, %v780
      %v1033 = vpack.c.b16 %v799, %v790
      %v1034 = vpack.c.b16 %v800, %v791
      %v1035 = vpack.c.b16 %v801, %v792
      %v1036 = vpack.c.b16 %v802, %v793
      %v1037 = vpack.c.b16 %v803, %v794
      %v1038 = vpack.c.b16 %v804, %v795
      %v1039 = vpack.c.b16 %v805, %v796
      %v1040 = vpack.c.b16 %v806, %v797
      %v1041 = vpack.c.b16 %v807, %v798
      %v1042 = vpack.c.b16 %v817, %v808
      %v1043 = vpack.c.b16 %v818, %v809
      %v1044 = vpack.c.b16 %v819, %v810
      %v1045 = vpack.c.b16 %v820, %v811
      %v1046 = vpack.c.b16 %v821, %v812
      %v1047 = vpack.c.b16 %v822, %v813
      %v1048 = vpack.c.b16 %v823, %v814
      %v1049 = vpack.c.b16 %v824, %v815
      %v1050 = vpack.c.b16 %v825, %v816
      %v1051 = vpack.c.b16 %v835, %v826
      %v1052 = vpack.c.b16 %v836, %v827
      %v1053 = vpack.c.b16 %v837, %v828
      %v1054 = vpack.c.b16 %v838, %v829
      %v1055 = vpack.c.b16 %v839, %v830
      %v1056 = vpack.c.b16 %v840, %v831
      %v1057 = vpack.c.b16 %v841, %v832
      %v1058 = vpack.c.b16 %v842, %v833
      %v1059 = vpack.c.b16 %v843, %v834
      %v1060 = vpack.c.b16 %v853, %v844
      %v1061 = vpack.c.b16 %v854, %v845
      %v1062 = vpack.c.b16 %v855, %v846
      %v1063 = vpack.c.b16 %v856, %v847
      %v1064 = vpack.c.b16 %v857, %v848
      %v1065 = vpack.c.b16 %v858, %v849
      %v1066 = vpack.c.b16 %v859, %v850
      %v1067 = vpack.c.b16 %v860, %v851
      %v1068 = vpack.c.b16 %v861, %v852
      %v1069 = vpack.c.b16 %v871, %v862
      %v1070 = vpack.c.b16 %v872, %v863
      %v1071 = vpack.c.b16 %v873, %v864
      %v1072 = vpack.c.b16 %v874, %v865
      %v1073 = vpack.c.b16 %v875, %v866
      %v1074 = vpack.c.b16 %v876, %v867
      %v1075 = vpack.c.b16 %v877, %v868
      %v1076 = vpack.c.b16 %v878, %v869
      %v1077 = vpack.c.b16 %v879, %v870
      %v1078 = vpack.c.b16 %v889, %v880
      %v1079 = vpack.c.b16 %v890, %v881
      %v1080 = vpack.c.b16 %v891, %v882
      %v1081 = vpack.c.b16 %v892, %v883
      %v1082 = vpack.c.b16 %v893, %v884
      %v1083 = vpack.c.b16 %v894, %v885
      %v1084 = vpack.c.b16 %v895, %v886
      %v1085 = vpack.c.b16 %v896, %v887
      %v1086 = vpack.c.b16 %v897, %v888
      %v1087 = vpack.c.b16 %v907, %v898
      %v1088 = vpack.c.b16 %v908, %v899
      %v1089 = vpack.c.b16 %v909, %v900
      %v1090 = vpack.c.b16 %v910, %v901
      %v1091 = vpack.c.b16 %v911, %v902
      %v1092 = vpack.c.b16 %v912, %v903
      %v1093 = vpack.c.b16 %v913, %v904
      %v1094 = vpack.c.b16 %v914, %v905
      %v1095 = vpack.c.b16 %v915, %v906
      %v1096 = vpack.c.b16 %v925, %v916
      %v1097 = vpack.c.b16 %v926, %v917
      %v1098 = vpack.c.b16 %v927, %v918
      %v1099 = vpack.c.b16 %v928, %v919
      %v1100 = vpack.c.b16 %v929, %v920
      %v1101 = vpack.c.b16 %v930, %v921
      %v1102 = vpack.c.b16 %v931, %v922
      %v1103 = vpack.c.b16 %v932, %v923
      %v1104 = vpack.c.b16 %v933, %v924
      %v1105 = vpack.c.b16 %v943, %v934
      %v1106 = vpack.c.b16 %v944, %v935
      %v1107 = vpack.c.b16 %v945, %v936
      %v1108 = vpack.c.b16 %v946, %v937
      %v1109 = vpack.c.b16 %v947, %v938
      %v1110 = vpack.c.b16 %v948, %v939
      %v1111 = vpack.c.b16 %v949, %v940
      %v1112 = vpack.c.b16 %v950, %v941
      %v1113 = vpack.c.b16 %v951, %v942
      %v1114 = vpack.c.b16 %v961, %v952
      %v1115 = vpack.c.b16 %v962, %v953
      %v1116 = vpack.c.b16 %v963, %v954
      %v1117 = vpack.c.b16 %v964, %v955
      %v1118 = vpack.c.b16 %v965, %v956
      %v1119 = vpack.c.b16 %v966, %v957
      %v1120 = vpack.c.b16 %v967, %v958
      %v1121 = vpack.c.b16 %v968, %v959
      %v1122 = vpack.c.b16 %v969, %v960
      %v1123 = vpack.c.b16 %v979, %v970
      %v1124 = vpack.c.b16 %v980, %v971
      %v1125 = vpack.c.b16 %v981, %v972
      %v1126 = vpack.c.b16 %v982, %v973
      %v1127 = vpack.c.b16 %v983, %v974
      %v1128 = vpack.c.b16 %v984, %v975
      %v1129 = vpack.c.b16 %v985, %v976
      %v1130 = vpack.c.b16 %v986, %v977
      %v1131 = vpack.c.b16 %v987, %v978
      %v1420 = vunpack.c.l.b16 %v389
      %v1421 = vunpack.c.l.b16 %v390
      %v1422 = vunpack.c.l.b16 %v391
      %v1423 = vunpack.c.l.b16 %v392
      %v1424 = vunpack.c.l.b16 %v393
      %v1425 = vunpack.c.l.b16 %v394
      %v1426 = vunpack.c.l.b16 %v395
      %v1427 = vunpack.c.l.b16 %v396
      %v1428 = vunpack.c.l.b16 %v397
      %v1429 = vunpack.c.l.b16 %v398
      %v1430 = vunpack.c.l.b16 %v399
      %v1431 = vunpack.c.l.b16 %v400
      %v1432 = vunpack.c.l.b16 %v401
      %v1433 = vunpack.c.l.b16 %v402
      %v1434 = vunpack.c.l.b16 %v403
      %v1435 = vunpack.c.l.b16 %v404
      %v1436 = vunpack.c.l.b16 %v405
      %v1437 = vunpack.c.l.b16 %v406
      %v1438 = vunpack.c.l.b16 %v407
      %v1439 = vunpack.c.l.b16 %v408
      %v1440 = vunpack.c.l.b16 %v409
      %v1441 = vunpack.c.l.b16 %v410
      %v1442 = vunpack.c.l.b16 %v411
      %v1443 = vunpack.c.l.b16 %v412
      %v1444 = vunpack.c.l.b16 %v413
      %v1445 = vunpack.c.l.b16 %v414
      %v1446 = vunpack.c.l.b16 %v415
      %v1447 = vunpack.c.l.b16 %v416
      %v1448 = vunpack.c.l.b16 %v417
      %v1449 = vunpack.c.l.b16 %v418
      %v1450 = vunpack.c.l.b16 %v419
      %v1451 = vunpack.c.l.b16 %v420
      %v1452 = vunpack.c.l.b16 %v421
      %v1453 = vunpack.c.l.b16 %v422
      %v1454 = vunpack.c.l.b16 %v423
      %v1455 = vunpack.c.l.b16 %v424
      %v1456 = vunpack.c.l.b16 %v425
      %v1457 = vunpack.c.l.b16 %v426
      %v1458 = vunpack.c.l.b16 %v427
      %v1459 = vunpack.c.l.b16 %v428
      %v1460 = vunpack.c.l.b16 %v429
      %v1461 = vunpack.c.l.b16 %v430
      %v1462 = vunpack.c.l.b16 %v431
      %v1463 = vunpack.c.l.b16 %v432
      %v1464 = vunpack.c.l.b16 %v433
      %v1465 = vunpack.c.l.b16 %v434
      %v1466 = vunpack.c.l.b16 %v435
      %v1467 = vunpack.c.l.b16 %v436
      %v1468 = vunpack.c.l.b16 %v437
      %v1469 = vunpack.c.l.b16 %v438
      %v1470 = vunpack.c.l.b16 %v439
      %v1471 = vunpack.c.l.b16 %v440
      %v1472 = vunpack.c.l.b16 %v441
      %v1473 = vunpack.c.l.b16 %v442
      %v1474 = vunpack.c.l.b16 %v443
      %v1475 = vunpack.c.l.b16 %v444
      %v1476 = vunpack.c.l.b16 %v445
      %v1477 = vunpack.c.l.b16 %v446
      %v1478 = vunpack.c.l.b16 %v447
      %v1479 = vunpack.c.l.b16 %v448
      %v1480 = vunpack.c.l.b16 %v449
      %v1481 = vunpack.c.l.b16 %v450
      %v1482 = vunpack.c.l.b16 %v451
      %v1483 = vunpack.c.l.b16 %v452
      %v1484 = vunpack.c.l.b16 %v453
      %v1485 = vunpack.c.l.b16 %v454
      %v1486 = vunpack.c.l.b16 %v455
      %v1487 = vunpack.c.l.b16 %v456
      %v1488 = vunpack.c.l.b16 %v457
      %v1489 = vunpack.c.l.b16 %v458
      %v1490 = vunpack.c.l.b16 %v459
      %v1491 = vunpack.c.l.b16 %v460
      %v1492 = vunpack.c.l.b16 %v461
      %v1493 = vunpack.c.l.b16 %v462
      %v1494 = vunpack.c.l.b16 %v463
      %v1495 = vunpack.c.l.b16 %v464
      %v1496 = vunpack.c.l.b16 %v465
      %v1497 = vunpack.c.l.b16 %v466
      %v1498 = vunpack.c.l.b16 %v467
      %v1499 = vunpack.c.l.b16 %v468
      %v1500 = vunpack.c.l.b16 %v469
      %v1501 = vunpack.c.l.b16 %v470
      %v1502 = vunpack.c.l.b16 %v471
      %v1503 = vunpack.c.l.b16 %v472
      %v1504 = vunpack.c.l.b16 %v473
      %v1505 = vunpack.c.l.b16 %v474
      %v1506 = vunpack.c.l.b16 %v475
      %v1507 = vunpack.c.l.b16 %v476
      %v1508 = vunpack.c.l.b16 %v477
      %v1509 = vunpack.c.l.b16 %v478
      %v1510 = vunpack.c.l.b16 %v479
      %v1511 = vunpack.c.l.b16 %v480
      %v1512 = vunpack.c.l.b16 %v481
      %v1513 = vunpack.c.l.b16 %v482
      %v1514 = vunpack.c.l.b16 %v483
      %v1515 = vunpack.c.l.b16 %v484
      %v1516 = vunpack.c.l.b16 %v485
      %v1517 = vunpack.c.l.b16 %v486
      %v1518 = vunpack.c.l.b16 %v487
      %v1519 = vunpack.c.l.b16 %v488
      %v1520 = vunpack.c.l.b16 %v489
      %v1521 = vunpack.c.l.b16 %v490
      %v1522 = vunpack.c.l.b16 %v491
      %v1523 = vunpack.c.l.b16 %v492
      %v1524 = vunpack.c.l.b16 %v493
      %v1525 = vunpack.c.l.b16 %v494
      %v1526 = vunpack.c.l.b16 %v495
      %v1527 = vunpack.c.l.b16 %v496
      %v1528 = vunpack.c.l.b16 %v497
      %v1529 = vunpack.c.l.b16 %v498
      %v1530 = vunpack.c.l.b16 %v499
      %v1531 = vunpack.c.l.b16 %v500
      %v1532 = vunpack.c.l.b16 %v501
      %v1533 = vunpack.c.l.b16 %v502
      %v1534 = vunpack.c.l.b16 %v503
      %v1535 = vunpack.c.l.b16 %v504
      %v1536 = vunpack.c.l.b16 %v505
      %v1537 = vunpack.c.l.b16 %v506
      %v1538 = vunpack.c.l.b16 %v507
      %v1539 = vunpack.c.l.b16 %v508
      %v1540 = vunpack.c.l.b16 %v509
      %v1541 = vunpack.c.l.b16 %v510
      %v1542 = vunpack.c.l.b16 %v511
      %v1543 = vunpack.c.l.b16 %v512
      %v1544 = vunpack.c.l.b16 %v513
      %v1545 = vunpack.c.l.b16 %v514
      %v1546 = vunpack.c.l.b16 %v515
      %v1547 = vunpack.c.l.b16 %v516
      %v1548 = vunpack.c.l.b16 %v517
      %v1549 = vunpack.c.l.b16 %v518
      %v1550 = vunpack.c.l.b16 %v519
      %v1551 = vunpack.c.l.b16 %v520
      %v1552 = vunpack.c.l.b16 %v521
      %v1553 = vunpack.c.l.b16 %v522
      %v1554 = vunpack.c.l.b16 %v523
      %v1555 = vunpack.c.l.b16 %v524
      %v1556 = vunpack.c.l.b16 %v525
      %v1557 = vunpack.c.l.b16 %v526
      %v1558 = vunpack.c.l.b16 %v527
      %v1559 = vunpack.c.l.b16 %v528
      %v1560 = vunpack.c.l.b16 %v529
      %v1561 = vunpack.c.l.b16 %v530
      %v1562 = vunpack.c.l.b16 %v531
      %v1563 = vunpack.c.l.b16 %v532
      %v1564 = vpack.c.b16 %v1421, %v1420
      %v1565 = vpack.c.b16 %v1423, %v1422
      %v1566 = vpack.c.b16 %v1425, %v1424
      %v1567 = vpack.c.b16 %v1427, %v1426
      %v1568 = vpack.c.b16 %v1429, %v1428
      %v1569 = vpack.c.b16 %v1431, %v1430
      %v1570 = vpack.c.b16 %v1433, %v1432
      %v1571 = vpack.c.b16 %v1435, %v1434
      %v1572 = vpack.c.b16 %v1437, %v1436
      %v1573 = vpack.c.b16 %v1439, %v1438
      %v1574 = vpack.c.b16 %v1441, %v1440
      %v1575 = vpack.c.b16 %v1443, %v1442
      %v1576 = vpack.c.b16 %v1445, %v1444
      %v1577 = vpack.c.b16 %v1447, %v1446
      %v1578 = vpack.c.b16 %v1449, %v1448
      %v1579 = vpack.c.b16 %v1451, %v1450
      %v1580 = vpack.c.b16 %v1453, %v1452
      %v1581 = vpack.c.b16 %v1455, %v1454
      %v1582 = vpack.c.b16 %v1457, %v1456
      %v1583 = vpack.c.b16 %v1459, %v1458
      %v1584 = vpack.c.b16 %v1461, %v1460
      %v1585 = vpack.c.b16 %v1463, %v1462
      %v1586 = vpack.c.b16 %v1465, %v1464
      %v1587 = vpack.c.b16 %v1467, %v1466
      %v1588 = vpack.c.b16 %v1469, %v1468
      %v1589 = vpack.c.b16 %v1471, %v1470
      %v1590 = vpack.c.b16 %v1473, %v1472
      %v1591 = vpack.c.b16 %v1475, %v1474
      %v1592 = vpack.c.b16 %v1477, %v1476
      %v1593 = vpack.c.b16 %v1479, %v1478
      %v1594 = vpack.c.b16 %v1481, %v1480
      %v1595 = vpack.c.b16 %v1483, %v1482
      %v1596 = vpack.c.b16 %v1485, %v1484
      %v1597 = vpack.c.b16 %v1487, %v1486
      %v1598 = vpack.c.b16 %v1489, %v1488
      %v1599 = vpack.c.b16 %v1491, %v1490
      %v1600 = vpack.c.b16 %v1493, %v1492
      %v1601 = vpack.c.b16 %v1495, %v1494
      %v1602 = vpack.c.b16 %v1497, %v1496
      %v1603 = vpack.c.b16 %v1499, %v1498
      %v1604 = vpack.c.b16 %v1501, %v1500
      %v1605 = vpack.c.b16 %v1503, %v1502
      %v1606 = vpack.c.b16 %v1505, %v1504
      %v1607 = vpack.c.b16 %v1507, %v1506
      %v1608 = vpack.c.b16 %v1509, %v1508
      %v1609 = vpack.c.b16 %v1511, %v1510
      %v1610 = vpack.c.b16 %v1513, %v1512
      %v1611 = vpack.c.b16 %v1515, %v1514
      %v1612 = vpack.c.b16 %v1517, %v1516
      %v1613 = vpack.c.b16 %v1519, %v1518
      %v1614 = vpack.c.b16 %v1521, %v1520
      %v1615 = vpack.c.b16 %v1523, %v1522
      %v1616 = vpack.c.b16 %v1525, %v1524
      %v1617 = vpack.c.b16 %v1527, %v1526
      %v1618 = vpack.c.b16 %v1529, %v1528
      %v1619 = vpack.c.b16 %v1531, %v1530
      %v1620 = vpack.c.b16 %v1533, %v1532
      %v1621 = vpack.c.b16 %v1535, %v1534
      %v1622 = vpack.c.b16 %v1537, %v1536
      %v1623 = vpack.c.b16 %v1539, %v1538
      %v1624 = vpack.c.b16 %v1541, %v1540
      %v1625 = vpack.c.b16 %v1543, %v1542
      %v1626 = vpack.c.b16 %v1545, %v1544
      %v1627 = vpack.c.b16 %v1547, %v1546
      %v1628 = vpack.c.b16 %v1549, %v1548
      %v1629 = vpack.c.b16 %v1551, %v1550
      %v1630 = vpack.c.b16 %v1553, %v1552
      %v1631 = vpack.c.b16 %v1555, %v1554
      %v1632 = vpack.c.b16 %v1557, %v1556
      %v1633 = vpack.c.b16 %v1559, %v1558
      %v1634 = vpack.c.b16 %v1561, %v1560
      %v1635 = vpack.c.b16 %v1563, %v1562
      %1708 = vmatprep.subr.bf16.mxu0 0
      %1709 = vmatpush1.bf16.msra.mxu0 %v1571
      %1710 = vmatprep.subr.bf16.mxu0 0
      %1711 = vmatpush1.bf16.msra.mxu0 %v1570
      %1712 = vmatprep.subr.bf16.mxu0 0
      %1713 = vmatpush1.bf16.msra.mxu0 %v1569
      %1714 = vmatprep.subr.bf16.mxu0 0
      %1715 = vmatpush1.bf16.msra.mxu0 %v1568
      %1716 = vmatprep.subr.bf16.mxu0 0
      %1717 = vmatpush1.bf16.msra.mxu0 %v1567
      %1718 = vmatprep.subr.bf16.mxu0 0
      %1719 = vmatpush1.bf16.msra.mxu0 %v1566
      %1720 = vmatprep.subr.bf16.mxu0 0
      %1721 = vmatpush1.bf16.msra.mxu0 %v1565
      %1722 = vmatprep.subr.bf16.mxu0 0
      %1723 = vmatpush1.bf16.msra.mxu0 %v1564
      %1724 = vmatprep.subr.bf16.mxu0 0
      %1725 = vmatpush2.bf16.msra.mxu0 %v1579
      %1726 = vmatprep.subr.bf16.mxu0 0
      %1727 = vmatpush2.bf16.msra.mxu0 %v1578
      %1728 = vmatprep.subr.bf16.mxu0 0
      %1729 = vmatpush2.bf16.msra.mxu0 %v1577
      %1730 = vmatprep.subr.bf16.mxu0 0
      %1731 = vmatpush2.bf16.msra.mxu0 %v1576
      %1732 = vmatprep.subr.bf16.mxu0 0
      %1733 = vmatpush2.bf16.msra.mxu0 %v1575
      %1734 = vmatprep.subr.bf16.mxu0 0
      %1735 = vmatpush2.bf16.msra.mxu0 %v1574
      %1736 = vmatprep.subr.bf16.mxu0 0
      %1737 = vmatpush2.bf16.msra.mxu0 %v1573
      %1738 = vmatprep.subr.bf16.mxu0 0
      %1739 = vmatpush2.bf16.msra.mxu0 %v1572
      %1740 = vmatprep.mubr.bf16.mxu0 %v989
      %1741 = vmatmul.mubr.bf16.gmra.mxu0 %v988
      %v1742 = vpop.f32.mrf.mxu0
      %v1743 = vadd.f32 %v538, %v1742
      %v1744 = vpop.f32.mrf.mxu0
      %v1745 = vpop.f32.mrf.mxu0
      %v1746 = vadd.f32 %v538, %v1745
      %v1747 = vpop.f32.mrf.mxu0
      %1748 = vmatprep.mubr.bf16.mxu0 %v998
      %1749 = vmatmul.mubr.bf16.gmra.mxu0 %v997
      %v1750 = vpop.f32.mrf.mxu0
      %v1751 = vadd.f32 %v538, %v1750
      %v1752 = vpop.f32.mrf.mxu0
      %v1753 = vpop.f32.mrf.mxu0
      %v1754 = vadd.f32 %v538, %v1753
      %v1755 = vpop.f32.mrf.mxu0
      %1756 = vmatprep.mubr.bf16.mxu0 %v1007
      %1757 = vmatmul.mubr.bf16.gmra.mxu0 %v1006
      %v1758 = vpop.f32.mrf.mxu0
      %v1759 = vadd.f32 %v538, %v1758
      %v1760 = vpop.f32.mrf.mxu0
      %v1761 = vpop.f32.mrf.mxu0
      %v1762 = vadd.f32 %v538, %v1761
      %v1763 = vpop.f32.mrf.mxu0
      %1764 = vmatprep.mubr.bf16.mxu0 %v1016
      %1765 = vmatmul.mubr.bf16.gmra.mxu0 %v1015
      %v1766 = vpop.f32.mrf.mxu0
      %v1767 = vadd.f32 %v538, %v1766
      %v1768 = vpop.f32.mrf.mxu0
      %v1769 = vpop.f32.mrf.mxu0
      %v1770 = vadd.f32 %v538, %v1769
      %v1771 = vpop.f32.mrf.mxu0
      %1772 = vmatprep.mubr.bf16.mxu0 %v1025
      %1773 = vmatmul.mubr.bf16.gmra.mxu0 %v1024
      %v1774 = vpop.f32.mrf.mxu0
      %v1775 = vadd.f32 %v538, %v1774
      %v1776 = vpop.f32.mrf.mxu0
      %v1777 = vpop.f32.mrf.mxu0
      %v1778 = vadd.f32 %v538, %v1777
      %v1779 = vpop.f32.mrf.mxu0
      %1780 = vmatprep.mubr.bf16.mxu0 %v1034
      %1781 = vmatmul.mubr.bf16.gmra.mxu0 %v1033
      %v1782 = vpop.f32.mrf.mxu0
      %v1783 = vadd.f32 %v538, %v1782
      %v1784 = vpop.f32.mrf.mxu0
      %v1785 = vpop.f32.mrf.mxu0
      %v1786 = vadd.f32 %v538, %v1785
      %v1787 = vpop.f32.mrf.mxu0
      %1788 = vmatprep.mubr.bf16.mxu0 %v1043
      %1789 = vmatmul.mubr.bf16.gmra.mxu0 %v1042
      %v1790 = vpop.f32.mrf.mxu0
      %v1791 = vadd.f32 %v538, %v1790
      %v1792 = vpop.f32.mrf.mxu0
      %v1793 = vpop.f32.mrf.mxu0
      %v1794 = vadd.f32 %v538, %v1793
      %v1795 = vpop.f32.mrf.mxu0
      %1796 = vmatprep.mubr.bf16.mxu0 %v1052
      %1797 = vmatmul.mubr.bf16.gmra.mxu0 %v1051
      %v1798 = vpop.f32.mrf.mxu0
      %v1799 = vadd.f32 %v538, %v1798
      %v1800 = vpop.f32.mrf.mxu0
      %v1801 = vpop.f32.mrf.mxu0
      %v1802 = vadd.f32 %v538, %v1801
      %v1803 = vpop.f32.mrf.mxu0
      %1804 = vmatprep.mubr.bf16.mxu0 %v1061
      %1805 = vmatmul.mubr.bf16.gmra.mxu0 %v1060
      %v1806 = vpop.f32.mrf.mxu0
      %v1807 = vadd.f32 %v538, %v1806
      %v1808 = vpop.f32.mrf.mxu0
      %v1809 = vpop.f32.mrf.mxu0
      %v1810 = vadd.f32 %v538, %v1809
      %v1811 = vpop.f32.mrf.mxu0
      %1812 = vmatprep.mubr.bf16.mxu0 %v1070
      %1813 = vmatmul.mubr.bf16.gmra.mxu0 %v1069
      %v1814 = vpop.f32.mrf.mxu0
      %v1815 = vadd.f32 %v538, %v1814
      %v1816 = vpop.f32.mrf.mxu0
      %v1817 = vpop.f32.mrf.mxu0
      %v1818 = vadd.f32 %v538, %v1817
      %v1819 = vpop.f32.mrf.mxu0
      %1820 = vmatprep.mubr.bf16.mxu0 %v1079
      %1821 = vmatmul.mubr.bf16.gmra.mxu0 %v1078
      %v1822 = vpop.f32.mrf.mxu0
      %v1823 = vadd.f32 %v538, %v1822
      %v1824 = vpop.f32.mrf.mxu0
      %v1825 = vpop.f32.mrf.mxu0
      %v1826 = vadd.f32 %v538, %v1825
      %v1827 = vpop.f32.mrf.mxu0
      %1828 = vmatprep.mubr.bf16.mxu0 %v1088
      %1829 = vmatmul.mubr.bf16.gmra.mxu0 %v1087
      %v1830 = vpop.f32.mrf.mxu0
      %v1831 = vadd.f32 %v538, %v1830
      %v1832 = vpop.f32.mrf.mxu0
      %v1833 = vpop.f32.mrf.mxu0
      %v1834 = vadd.f32 %v538, %v1833
      %v1835 = vpop.f32.mrf.mxu0
      %1836 = vmatprep.mubr.bf16.mxu0 %v1097
      %1837 = vmatmul.mubr.bf16.gmra.mxu0 %v1096
      %v1838 = vpop.f32.mrf.mxu0
      %v1839 = vadd.f32 %v538, %v1838
      %v1840 = vpop.f32.mrf.mxu0
      %v1841 = vpop.f32.mrf.mxu0
      %v1842 = vadd.f32 %v538, %v1841
      %v1843 = vpop.f32.mrf.mxu0
      %1844 = vmatprep.mubr.bf16.mxu0 %v1106
      %1845 = vmatmul.mubr.bf16.gmra.mxu0 %v1105
      %v1846 = vpop.f32.mrf.mxu0
      %v1847 = vadd.f32 %v538, %v1846
      %v1848 = vpop.f32.mrf.mxu0
      %v1849 = vpop.f32.mrf.mxu0
      %v1850 = vadd.f32 %v538, %v1849
      %v1851 = vpop.f32.mrf.mxu0
      %1852 = vmatprep.mubr.bf16.mxu0 %v1115
      %1853 = vmatmul.mubr.bf16.gmra.mxu0 %v1114
      %v1854 = vpop.f32.mrf.mxu0
      %v1855 = vadd.f32 %v538, %v1854
      %v1856 = vpop.f32.mrf.mxu0
      %v1857 = vpop.f32.mrf.mxu0
      %v1858 = vadd.f32 %v538, %v1857
      %v1859 = vpop.f32.mrf.mxu0
      %1860 = vmatprep.mubr.bf16.mxu0 %v1124
      %1861 = vmatmul.mubr.bf16.gmra.mxu0 %v1123
      %v1862 = vpop.f32.mrf.mxu0
      %v1863 = vadd.f32 %v538, %v1862
      %v1864 = vpop.f32.mrf.mxu0
      %v1865 = vpop.f32.mrf.mxu0
      %v1866 = vadd.f32 %v538, %v1865
      %v1867 = vpop.f32.mrf.mxu0
      %1868 = vdwg.mxu0
      %1869 = vmatprep.subr.bf16.mxu0 0
      %1870 = vmatpush1.bf16.msra.mxu0 %v1587
      %1871 = vmatprep.subr.bf16.mxu0 0
      %1872 = vmatpush1.bf16.msra.mxu0 %v1586
      %1873 = vmatprep.subr.bf16.mxu0 0
      %1874 = vmatpush1.bf16.msra.mxu0 %v1585
      %1875 = vmatprep.subr.bf16.mxu0 0
      %1876 = vmatpush1.bf16.msra.mxu0 %v1584
      %1877 = vmatprep.subr.bf16.mxu0 0
      %1878 = vmatpush1.bf16.msra.mxu0 %v1583
      %1879 = vmatprep.subr.bf16.mxu0 0
      %1880 = vmatpush1.bf16.msra.mxu0 %v1582
      %1881 = vmatprep.subr.bf16.mxu0 0
      %1882 = vmatpush1.bf16.msra.mxu0 %v1581
      %1883 = vmatprep.subr.bf16.mxu0 0
      %1884 = vmatpush1.bf16.msra.mxu0 %v1580
      %1885 = vmatprep.subr.bf16.mxu0 0
      %1886 = vmatpush2.bf16.msra.mxu0 %v1595
      %1887 = vmatprep.subr.bf16.mxu0 0
      %1888 = vmatpush2.bf16.msra.mxu0 %v1594
      %1889 = vmatprep.subr.bf16.mxu0 0
      %1890 = vmatpush2.bf16.msra.mxu0 %v1593
      %1891 = vmatprep.subr.bf16.mxu0 0
      %1892 = vmatpush2.bf16.msra.mxu0 %v1592
      %1893 = vmatprep.subr.bf16.mxu0 0
      %1894 = vmatpush2.bf16.msra.mxu0 %v1591
      %1895 = vmatprep.subr.bf16.mxu0 0
      %1896 = vmatpush2.bf16.msra.mxu0 %v1590
      %1897 = vmatprep.subr.bf16.mxu0 0
      %1898 = vmatpush2.bf16.msra.mxu0 %v1589
      %1899 = vmatprep.subr.bf16.mxu0 0
      %1900 = vmatpush2.bf16.msra.mxu0 %v1588
      %1901 = vmatprep.mubr.bf16.mxu0 %v991
      %1902 = vmatmul.mubr.bf16.gmra.mxu0 %v990
      %v1903 = vpop.f32.mrf.mxu0
      %v1904 = vadd.f32 %v1743, %v1903
      %v1905 = vpop.f32.mrf.mxu0
      %v1906 = vpop.f32.mrf.mxu0
      %v1907 = vadd.f32 %v1746, %v1906
      %v1908 = vpop.f32.mrf.mxu0
      %1909 = vmatprep.mubr.bf16.mxu0 %v1000
      %1910 = vmatmul.mubr.bf16.gmra.mxu0 %v999
      %v1911 = vpop.f32.mrf.mxu0
      %v1912 = vadd.f32 %v1751, %v1911
      %v1913 = vpop.f32.mrf.mxu0
      %v1914 = vpop.f32.mrf.mxu0
      %v1915 = vadd.f32 %v1754, %v1914
      %v1916 = vpop.f32.mrf.mxu0
      %1917 = vmatprep.mubr.bf16.mxu0 %v1009
      %1918 = vmatmul.mubr.bf16.gmra.mxu0 %v1008
      %v1919 = vpop.f32.mrf.mxu0
      %v1920 = vadd.f32 %v1759, %v1919
      %v1921 = vpop.f32.mrf.mxu0
      %v1922 = vpop.f32.mrf.mxu0
      %v1923 = vadd.f32 %v1762, %v1922
      %v1924 = vpop.f32.mrf.mxu0
      %1925 = vmatprep.mubr.bf16.mxu0 %v1018
      %1926 = vmatmul.mubr.bf16.gmra.mxu0 %v1017
      %v1927 = vpop.f32.mrf.mxu0
      %v1928 = vadd.f32 %v1767, %v1927
      %v1929 = vpop.f32.mrf.mxu0
      %v1930 = vpop.f32.mrf.mxu0
      %v1931 = vadd.f32 %v1770, %v1930
      %v1932 = vpop.f32.mrf.mxu0
      %1933 = vmatprep.mubr.bf16.mxu0 %v1027
      %1934 = vmatmul.mubr.bf16.gmra.mxu0 %v1026
      %v1935 = vpop.f32.mrf.mxu0
      %v1936 = vadd.f32 %v1775, %v1935
      %v1937 = vpop.f32.mrf.mxu0
      %v1938 = vpop.f32.mrf.mxu0
      %v1939 = vadd.f32 %v1778, %v1938
      %v1940 = vpop.f32.mrf.mxu0
      %1941 = vmatprep.mubr.bf16.mxu0 %v1036
      %1942 = vmatmul.mubr.bf16.gmra.mxu0 %v1035
      %v1943 = vpop.f32.mrf.mxu0
      %v1944 = vadd.f32 %v1783, %v1943
      %v1945 = vpop.f32.mrf.mxu0
      %v1946 = vpop.f32.mrf.mxu0
      %v1947 = vadd.f32 %v1786, %v1946
      %v1948 = vpop.f32.mrf.mxu0
      %1949 = vmatprep.mubr.bf16.mxu0 %v1045
      %1950 = vmatmul.mubr.bf16.gmra.mxu0 %v1044
      %v1951 = vpop.f32.mrf.mxu0
      %v1952 = vadd.f32 %v1791, %v1951
      %v1953 = vpop.f32.mrf.mxu0
      %v1954 = vpop.f32.mrf.mxu0
      %v1955 = vadd.f32 %v1794, %v1954
      %v1956 = vpop.f32.mrf.mxu0
      %1957 = vmatprep.mubr.bf16.mxu0 %v1054
      %1958 = vmatmul.mubr.bf16.gmra.mxu0 %v1053
      %v1959 = vpop.f32.mrf.mxu0
      %v1960 = vadd.f32 %v1799, %v1959
      %v1961 = vpop.f32.mrf.mxu0
      %v1962 = vpop.f32.mrf.mxu0
      %v1963 = vadd.f32 %v1802, %v1962
      %v1964 = vpop.f32.mrf.mxu0
      %1965 = vmatprep.mubr.bf16.mxu0 %v1063
      %1966 = vmatmul.mubr.bf16.gmra.mxu0 %v1062
      %v1967 = vpop.f32.mrf.mxu0
      %v1968 = vadd.f32 %v1807, %v1967
      %v1969 = vpop.f32.mrf.mxu0
      %v1970 = vpop.f32.mrf.mxu0
      %v1971 = vadd.f32 %v1810, %v1970
      %v1972 = vpop.f32.mrf.mxu0
      %1973 = vmatprep.mubr.bf16.mxu0 %v1072
      %1974 = vmatmul.mubr.bf16.gmra.mxu0 %v1071
      %v1975 = vpop.f32.mrf.mxu0
      %v1976 = vadd.f32 %v1815, %v1975
      %v1977 = vpop.f32.mrf.mxu0
      %v1978 = vpop.f32.mrf.mxu0
      %v1979 = vadd.f32 %v1818, %v1978
      %v1980 = vpop.f32.mrf.mxu0
      %1981 = vmatprep.mubr.bf16.mxu0 %v1081
      %1982 = vmatmul.mubr.bf16.gmra.mxu0 %v1080
      %v1983 = vpop.f32.mrf.mxu0
      %v1984 = vadd.f32 %v1823, %v1983
      %v1985 = vpop.f32.mrf.mxu0
      %v1986 = vpop.f32.mrf.mxu0
      %v1987 = vadd.f32 %v1826, %v1986
      %v1988 = vpop.f32.mrf.mxu0
      %1989 = vmatprep.mubr.bf16.mxu0 %v1090
      %1990 = vmatmul.mubr.bf16.gmra.mxu0 %v1089
      %v1991 = vpop.f32.mrf.mxu0
      %v1992 = vadd.f32 %v1831, %v1991
      %v1993 = vpop.f32.mrf.mxu0
      %v1994 = vpop.f32.mrf.mxu0
      %v1995 = vadd.f32 %v1834, %v1994
      %v1996 = vpop.f32.mrf.mxu0
      %1997 = vmatprep.mubr.bf16.mxu0 %v1099
      %1998 = vmatmul.mubr.bf16.gmra.mxu0 %v1098
      %v1999 = vpop.f32.mrf.mxu0
      %v2000 = vadd.f32 %v1839, %v1999
      %v2001 = vpop.f32.mrf.mxu0
      %v2002 = vpop.f32.mrf.mxu0
      %v2003 = vadd.f32 %v1842, %v2002
      %v2004 = vpop.f32.mrf.mxu0
      %2005 = vmatprep.mubr.bf16.mxu0 %v1108
      %2006 = vmatmul.mubr.bf16.gmra.mxu0 %v1107
      %v2007 = vpop.f32.mrf.mxu0
      %v2008 = vadd.f32 %v1847, %v2007
      %v2009 = vpop.f32.mrf.mxu0
      %v2010 = vpop.f32.mrf.mxu0
      %v2011 = vadd.f32 %v1850, %v2010
      %v2012 = vpop.f32.mrf.mxu0
      %2013 = vmatprep.mubr.bf16.mxu0 %v1117
      %2014 = vmatmul.mubr.bf16.gmra.mxu0 %v1116
      %v2015 = vpop.f32.mrf.mxu0
      %v2016 = vadd.f32 %v1855, %v2015
      %v2017 = vpop.f32.mrf.mxu0
      %v2018 = vpop.f32.mrf.mxu0
      %v2019 = vadd.f32 %v1858, %v2018
      %v2020 = vpop.f32.mrf.mxu0
      %2021 = vmatprep.mubr.bf16.mxu0 %v1126
      %2022 = vmatmul.mubr.bf16.gmra.mxu0 %v1125
      %v2023 = vpop.f32.mrf.mxu0
      %v2024 = vadd.f32 %v1863, %v2023
      %v2025 = vpop.f32.mrf.mxu0
      %v2026 = vpop.f32.mrf.mxu0
      %v2027 = vadd.f32 %v1866, %v2026
      %v2028 = vpop.f32.mrf.mxu0
      %2029 = vdwg.mxu0
      %2030 = vmatprep.subr.bf16.mxu0 0
      %2031 = vmatpush1.bf16.msra.mxu0 %v1603
      %2032 = vmatprep.subr.bf16.mxu0 0
      %2033 = vmatpush1.bf16.msra.mxu0 %v1602
      %2034 = vmatprep.subr.bf16.mxu0 0
      %2035 = vmatpush1.bf16.msra.mxu0 %v1601
      %2036 = vmatprep.subr.bf16.mxu0 0
      %2037 = vmatpush1.bf16.msra.mxu0 %v1600
      %2038 = vmatprep.subr.bf16.mxu0 0
      %2039 = vmatpush1.bf16.msra.mxu0 %v1599
      %2040 = vmatprep.subr.bf16.mxu0 0
      %2041 = vmatpush1.bf16.msra.mxu0 %v1598
      %2042 = vmatprep.subr.bf16.mxu0 0
      %2043 = vmatpush1.bf16.msra.mxu0 %v1597
      %2044 = vmatprep.subr.bf16.mxu0 0
      %2045 = vmatpush1.bf16.msra.mxu0 %v1596
      %2046 = vmatprep.subr.bf16.mxu0 0
      %2047 = vmatpush2.bf16.msra.mxu0 %v1611
      %2048 = vmatprep.subr.bf16.mxu0 0
      %2049 = vmatpush2.bf16.msra.mxu0 %v1610
      %2050 = vmatprep.subr.bf16.mxu0 0
      %2051 = vmatpush2.bf16.msra.mxu0 %v1609
      %2052 = vmatprep.subr.bf16.mxu0 0
      %2053 = vmatpush2.bf16.msra.mxu0 %v1608
      %2054 = vmatprep.subr.bf16.mxu0 0
      %2055 = vmatpush2.bf16.msra.mxu0 %v1607
      %2056 = vmatprep.subr.bf16.mxu0 0
      %2057 = vmatpush2.bf16.msra.mxu0 %v1606
      %2058 = vmatprep.subr.bf16.mxu0 0
      %2059 = vmatpush2.bf16.msra.mxu0 %v1605
      %2060 = vmatprep.subr.bf16.mxu0 0
      %2061 = vmatpush2.bf16.msra.mxu0 %v1604
      %2062 = vmatprep.mubr.bf16.mxu0 %v993
      %2063 = vmatmul.mubr.bf16.gmra.mxu0 %v992
      %v2064 = vpop.f32.mrf.mxu0
      %v2065 = vadd.f32 %v1904, %v2064
      %v2066 = vpop.f32.mrf.mxu0
      %v2067 = vpop.f32.mrf.mxu0
      %v2068 = vadd.f32 %v1907, %v2067
      %v2069 = vpop.f32.mrf.mxu0
      %2070 = vmatprep.mubr.bf16.mxu0 %v1002
      %2071 = vmatmul.mubr.bf16.gmra.mxu0 %v1001
      %v2072 = vpop.f32.mrf.mxu0
      %v2073 = vadd.f32 %v1912, %v2072
      %v2074 = vpop.f32.mrf.mxu0
      %v2075 = vpop.f32.mrf.mxu0
      %v2076 = vadd.f32 %v1915, %v2075
      %v2077 = vpop.f32.mrf.mxu0
      %2078 = vmatprep.mubr.bf16.mxu0 %v1011
      %2079 = vmatmul.mubr.bf16.gmra.mxu0 %v1010
      %v2080 = vpop.f32.mrf.mxu0
      %v2081 = vadd.f32 %v1920, %v2080
      %v2082 = vpop.f32.mrf.mxu0
      %v2083 = vpop.f32.mrf.mxu0
      %v2084 = vadd.f32 %v1923, %v2083
      %v2085 = vpop.f32.mrf.mxu0
      %2086 = vmatprep.mubr.bf16.mxu0 %v1020
      %2087 = vmatmul.mubr.bf16.gmra.mxu0 %v1019
      %v2088 = vpop.f32.mrf.mxu0
      %v2089 = vadd.f32 %v1928, %v2088
      %v2090 = vpop.f32.mrf.mxu0
      %v2091 = vpop.f32.mrf.mxu0
      %v2092 = vadd.f32 %v1931, %v2091
      %v2093 = vpop.f32.mrf.mxu0
      %2094 = vmatprep.mubr.bf16.mxu0 %v1029
      %2095 = vmatmul.mubr.bf16.gmra.mxu0 %v1028
      %v2096 = vpop.f32.mrf.mxu0
      %v2097 = vadd.f32 %v1936, %v2096
      %v2098 = vpop.f32.mrf.mxu0
      %v2099 = vpop.f32.mrf.mxu0
      %v2100 = vadd.f32 %v1939, %v2099
      %v2101 = vpop.f32.mrf.mxu0
      %2102 = vmatprep.mubr.bf16.mxu0 %v1038
      %2103 = vmatmul.mubr.bf16.gmra.mxu0 %v1037
      %v2104 = vpop.f32.mrf.mxu0
      %v2105 = vadd.f32 %v1944, %v2104
      %v2106 = vpop.f32.mrf.mxu0
      %v2107 = vpop.f32.mrf.mxu0
      %v2108 = vadd.f32 %v1947, %v2107
      %v2109 = vpop.f32.mrf.mxu0
      %2110 = vmatprep.mubr.bf16.mxu0 %v1047
      %2111 = vmatmul.mubr.bf16.gmra.mxu0 %v1046
      %v2112 = vpop.f32.mrf.mxu0
      %v2113 = vadd.f32 %v1952, %v2112
      %v2114 = vpop.f32.mrf.mxu0
      %v2115 = vpop.f32.mrf.mxu0
      %v2116 = vadd.f32 %v1955, %v2115
      %v2117 = vpop.f32.mrf.mxu0
      %2118 = vmatprep.mubr.bf16.mxu0 %v1056
      %2119 = vmatmul.mubr.bf16.gmra.mxu0 %v1055
      %v2120 = vpop.f32.mrf.mxu0
      %v2121 = vadd.f32 %v1960, %v2120
      %v2122 = vpop.f32.mrf.mxu0
      %v2123 = vpop.f32.mrf.mxu0
      %v2124 = vadd.f32 %v1963, %v2123
      %v2125 = vpop.f32.mrf.mxu0
      %2126 = vmatprep.mubr.bf16.mxu0 %v1065
      %2127 = vmatmul.mubr.bf16.gmra.mxu0 %v1064
      %v2128 = vpop.f32.mrf.mxu0
      %v2129 = vadd.f32 %v1968, %v2128
      %v2130 = vpop.f32.mrf.mxu0
      %v2131 = vpop.f32.mrf.mxu0
      %v2132 = vadd.f32 %v1971, %v2131
      %v2133 = vpop.f32.mrf.mxu0
      %2134 = vmatprep.mubr.bf16.mxu0 %v1074
      %2135 = vmatmul.mubr.bf16.gmra.mxu0 %v1073
      %v2136 = vpop.f32.mrf.mxu0
      %v2137 = vadd.f32 %v1976, %v2136
      %v2138 = vpop.f32.mrf.mxu0
      %v2139 = vpop.f32.mrf.mxu0
      %v2140 = vadd.f32 %v1979, %v2139
      %v2141 = vpop.f32.mrf.mxu0
      %2142 = vmatprep.mubr.bf16.mxu0 %v1083
      %2143 = vmatmul.mubr.bf16.gmra.mxu0 %v1082
      %v2144 = vpop.f32.mrf.mxu0
      %v2145 = vadd.f32 %v1984, %v2144
      %v2146 = vpop.f32.mrf.mxu0
      %v2147 = vpop.f32.mrf.mxu0
      %v2148 = vadd.f32 %v1987, %v2147
      %v2149 = vpop.f32.mrf.mxu0
      %2150 = vmatprep.mubr.bf16.mxu0 %v1092
      %2151 = vmatmul.mubr.bf16.gmra.mxu0 %v1091
      %v2152 = vpop.f32.mrf.mxu0
      %v2153 = vadd.f32 %v1992, %v2152
      %v2154 = vpop.f32.mrf.mxu0
      %v2155 = vpop.f32.mrf.mxu0
      %v2156 = vadd.f32 %v1995, %v2155
      %v2157 = vpop.f32.mrf.mxu0
      %2158 = vmatprep.mubr.bf16.mxu0 %v1101
      %2159 = vmatmul.mubr.bf16.gmra.mxu0 %v1100
      %v2160 = vpop.f32.mrf.mxu0
      %v2161 = vadd.f32 %v2000, %v2160
      %v2162 = vpop.f32.mrf.mxu0
      %v2163 = vpop.f32.mrf.mxu0
      %v2164 = vadd.f32 %v2003, %v2163
      %v2165 = vpop.f32.mrf.mxu0
      %2166 = vmatprep.mubr.bf16.mxu0 %v1110
      %2167 = vmatmul.mubr.bf16.gmra.mxu0 %v1109
      %v2168 = vpop.f32.mrf.mxu0
      %v2169 = vadd.f32 %v2008, %v2168
      %v2170 = vpop.f32.mrf.mxu0
      %v2171 = vpop.f32.mrf.mxu0
      %v2172 = vadd.f32 %v2011, %v2171
      %v2173 = vpop.f32.mrf.mxu0
      %2174 = vmatprep.mubr.bf16.mxu0 %v1119
      %2175 = vmatmul.mubr.bf16.gmra.mxu0 %v1118
      %v2176 = vpop.f32.mrf.mxu0
      %v2177 = vadd.f32 %v2016, %v2176
      %v2178 = vpop.f32.mrf.mxu0
      %v2179 = vpop.f32.mrf.mxu0
      %v2180 = vadd.f32 %v2019, %v2179
      %v2181 = vpop.f32.mrf.mxu0
      %2182 = vmatprep.mubr.bf16.mxu0 %v1128
      %2183 = vmatmul.mubr.bf16.gmra.mxu0 %v1127
      %v2184 = vpop.f32.mrf.mxu0
      %v2185 = vadd.f32 %v2024, %v2184
      %v2186 = vpop.f32.mrf.mxu0
      %v2187 = vpop.f32.mrf.mxu0
      %v2188 = vadd.f32 %v2027, %v2187
      %v2189 = vpop.f32.mrf.mxu0
      %2190 = vdwg.mxu0
      %2191 = vmatprep.subr.bf16.mxu0 0
      %2192 = vmatpush1.bf16.msra.mxu0 %v1619
      %2193 = vmatprep.subr.bf16.mxu0 0
      %2194 = vmatpush1.bf16.msra.mxu0 %v1618
      %2195 = vmatprep.subr.bf16.mxu0 0
      %2196 = vmatpush1.bf16.msra.mxu0 %v1617
      %2197 = vmatprep.subr.bf16.mxu0 0
      %2198 = vmatpush1.bf16.msra.mxu0 %v1616
      %2199 = vmatprep.subr.bf16.mxu0 0
      %2200 = vmatpush1.bf16.msra.mxu0 %v1615
      %2201 = vmatprep.subr.bf16.mxu0 0
      %2202 = vmatpush1.bf16.msra.mxu0 %v1614
      %2203 = vmatprep.subr.bf16.mxu0 0
      %2204 = vmatpush1.bf16.msra.mxu0 %v1613
      %2205 = vmatprep.subr.bf16.mxu0 0
      %2206 = vmatpush1.bf16.msra.mxu0 %v1612
      %2207 = vmatprep.subr.bf16.mxu0 0
      %2208 = vmatpush2.bf16.msra.mxu0 %v1627
      %2209 = vmatprep.subr.bf16.mxu0 0
      %2210 = vmatpush2.bf16.msra.mxu0 %v1626
      %2211 = vmatprep.subr.bf16.mxu0 0
      %2212 = vmatpush2.bf16.msra.mxu0 %v1625
      %2213 = vmatprep.subr.bf16.mxu0 0
      %2214 = vmatpush2.bf16.msra.mxu0 %v1624
      %2215 = vmatprep.subr.bf16.mxu0 0
      %2216 = vmatpush2.bf16.msra.mxu0 %v1623
      %2217 = vmatprep.subr.bf16.mxu0 0
      %2218 = vmatpush2.bf16.msra.mxu0 %v1622
      %2219 = vmatprep.subr.bf16.mxu0 0
      %2220 = vmatpush2.bf16.msra.mxu0 %v1621
      %2221 = vmatprep.subr.bf16.mxu0 0
      %2222 = vmatpush2.bf16.msra.mxu0 %v1620
      %2223 = vmatprep.mubr.bf16.mxu0 %v995
      %2224 = vmatmul.mubr.bf16.gmra.mxu0 %v994
      %v2225 = vpop.f32.mrf.mxu0
      %v2226 = vadd.f32 %v2065, %v2225
      %v2227 = vpop.f32.mrf.mxu0
      %v2228 = vpop.f32.mrf.mxu0
      %v2229 = vadd.f32 %v2068, %v2228
      %v2230 = vpop.f32.mrf.mxu0
      %2231 = vmatprep.mubr.bf16.mxu0 %v1004
      %2232 = vmatmul.mubr.bf16.gmra.mxu0 %v1003
      %v2233 = vpop.f32.mrf.mxu0
      %v2234 = vadd.f32 %v2073, %v2233
      %v2235 = vpop.f32.mrf.mxu0
      %v2236 = vpop.f32.mrf.mxu0
      %v2237 = vadd.f32 %v2076, %v2236
      %v2238 = vpop.f32.mrf.mxu0
      %2239 = vmatprep.mubr.bf16.mxu0 %v1013
      %2240 = vmatmul.mubr.bf16.gmra.mxu0 %v1012
      %v2241 = vpop.f32.mrf.mxu0
      %v2242 = vadd.f32 %v2081, %v2241
      %v2243 = vpop.f32.mrf.mxu0
      %v2244 = vpop.f32.mrf.mxu0
      %v2245 = vadd.f32 %v2084, %v2244
      %v2246 = vpop.f32.mrf.mxu0
      %2247 = vmatprep.mubr.bf16.mxu0 %v1022
      %2248 = vmatmul.mubr.bf16.gmra.mxu0 %v1021
      %v2249 = vpop.f32.mrf.mxu0
      %v2250 = vadd.f32 %v2089, %v2249
      %v2251 = vpop.f32.mrf.mxu0
      %v2252 = vpop.f32.mrf.mxu0
      %v2253 = vadd.f32 %v2092, %v2252
      %v2254 = vpop.f32.mrf.mxu0
      %2255 = vmatprep.mubr.bf16.mxu0 %v1031
      %2256 = vmatmul.mubr.bf16.gmra.mxu0 %v1030
      %v2257 = vpop.f32.mrf.mxu0
      %v2258 = vadd.f32 %v2097, %v2257
      %v2259 = vpop.f32.mrf.mxu0
      %v2260 = vpop.f32.mrf.mxu0
      %v2261 = vadd.f32 %v2100, %v2260
      %v2262 = vpop.f32.mrf.mxu0
      %2263 = vmatprep.mubr.bf16.mxu0 %v1040
      %2264 = vmatmul.mubr.bf16.gmra.mxu0 %v1039
      %v2265 = vpop.f32.mrf.mxu0
      %v2266 = vadd.f32 %v2105, %v2265
      %v2267 = vpop.f32.mrf.mxu0
      %v2268 = vpop.f32.mrf.mxu0
      %v2269 = vadd.f32 %v2108, %v2268
      %v2270 = vpop.f32.mrf.mxu0
      %2271 = vmatprep.mubr.bf16.mxu0 %v1049
      %2272 = vmatmul.mubr.bf16.gmra.mxu0 %v1048
      %v2273 = vpop.f32.mrf.mxu0
      %v2274 = vadd.f32 %v2113, %v2273
      %v2275 = vpop.f32.mrf.mxu0
      %v2276 = vpop.f32.mrf.mxu0
      %v2277 = vadd.f32 %v2116, %v2276
      %v2278 = vpop.f32.mrf.mxu0
      %2279 = vmatprep.mubr.bf16.mxu0 %v1058
      %2280 = vmatmul.mubr.bf16.gmra.mxu0 %v1057
      %v2281 = vpop.f32.mrf.mxu0
      %v2282 = vadd.f32 %v2121, %v2281
      %v2283 = vpop.f32.mrf.mxu0
      %v2284 = vpop.f32.mrf.mxu0
      %v2285 = vadd.f32 %v2124, %v2284
      %v2286 = vpop.f32.mrf.mxu0
      %2287 = vmatprep.mubr.bf16.mxu0 %v1067
      %2288 = vmatmul.mubr.bf16.gmra.mxu0 %v1066
      %v2289 = vpop.f32.mrf.mxu0
      %v2290 = vadd.f32 %v2129, %v2289
      %v2291 = vpop.f32.mrf.mxu0
      %v2292 = vpop.f32.mrf.mxu0
      %v2293 = vadd.f32 %v2132, %v2292
      %v2294 = vpop.f32.mrf.mxu0
      %2295 = vmatprep.mubr.bf16.mxu0 %v1076
      %2296 = vmatmul.mubr.bf16.gmra.mxu0 %v1075
      %v2297 = vpop.f32.mrf.mxu0
      %v2298 = vadd.f32 %v2137, %v2297
      %v2299 = vpop.f32.mrf.mxu0
      %v2300 = vpop.f32.mrf.mxu0
      %v2301 = vadd.f32 %v2140, %v2300
      %v2302 = vpop.f32.mrf.mxu0
      %2303 = vmatprep.mubr.bf16.mxu0 %v1085
      %2304 = vmatmul.mubr.bf16.gmra.mxu0 %v1084
      %v2305 = vpop.f32.mrf.mxu0
      %v2306 = vadd.f32 %v2145, %v2305
      %v2307 = vpop.f32.mrf.mxu0
      %v2308 = vpop.f32.mrf.mxu0
      %v2309 = vadd.f32 %v2148, %v2308
      %v2310 = vpop.f32.mrf.mxu0
      %2311 = vmatprep.mubr.bf16.mxu0 %v1094
      %2312 = vmatmul.mubr.bf16.gmra.mxu0 %v1093
      %v2313 = vpop.f32.mrf.mxu0
      %v2314 = vadd.f32 %v2153, %v2313
      %v2315 = vpop.f32.mrf.mxu0
      %v2316 = vpop.f32.mrf.mxu0
      %v2317 = vadd.f32 %v2156, %v2316
      %v2318 = vpop.f32.mrf.mxu0
      %2319 = vmatprep.mubr.bf16.mxu0 %v1103
      %2320 = vmatmul.mubr.bf16.gmra.mxu0 %v1102
      %v2321 = vpop.f32.mrf.mxu0
      %v2322 = vadd.f32 %v2161, %v2321
      %v2323 = vpop.f32.mrf.mxu0
      %v2324 = vpop.f32.mrf.mxu0
      %v2325 = vadd.f32 %v2164, %v2324
      %v2326 = vpop.f32.mrf.mxu0
      %2327 = vmatprep.mubr.bf16.mxu0 %v1112
      %2328 = vmatmul.mubr.bf16.gmra.mxu0 %v1111
      %v2329 = vpop.f32.mrf.mxu0
      %v2330 = vadd.f32 %v2169, %v2329
      %v2331 = vpop.f32.mrf.mxu0
      %v2332 = vpop.f32.mrf.mxu0
      %v2333 = vadd.f32 %v2172, %v2332
      %v2334 = vpop.f32.mrf.mxu0
      %2335 = vmatprep.mubr.bf16.mxu0 %v1121
      %2336 = vmatmul.mubr.bf16.gmra.mxu0 %v1120
      %v2337 = vpop.f32.mrf.mxu0
      %v2338 = vadd.f32 %v2177, %v2337
      %v2339 = vpop.f32.mrf.mxu0
      %v2340 = vpop.f32.mrf.mxu0
      %v2341 = vadd.f32 %v2180, %v2340
      %v2342 = vpop.f32.mrf.mxu0
      %2343 = vmatprep.mubr.bf16.mxu0 %v1130
      %2344 = vmatmul.mubr.bf16.gmra.mxu0 %v1129
      %v2345 = vpop.f32.mrf.mxu0
      %v2346 = vadd.f32 %v2185, %v2345
      %v2347 = vpop.f32.mrf.mxu0
      %v2348 = vpop.f32.mrf.mxu0
      %v2349 = vadd.f32 %v2188, %v2348
      %v2350 = vpop.f32.mrf.mxu0
      %2351 = vdwg.mxu0
      %2352 = vmatprep.subr.bf16.mxu0 0
      %2353 = vmatpush1.bf16.msra.mxu0 %v1635
      %2354 = vmatprep.subr.bf16.mxu0 0
      %2355 = vmatpush1.bf16.msra.mxu0 %v1634
      %2356 = vmatprep.subr.bf16.mxu0 0
      %2357 = vmatpush1.bf16.msra.mxu0 %v1633
      %2358 = vmatprep.subr.bf16.mxu0 0
      %2359 = vmatpush1.bf16.msra.mxu0 %v1632
      %2360 = vmatprep.subr.bf16.mxu0 0
      %2361 = vmatpush1.bf16.msra.mxu0 %v1631
      %2362 = vmatprep.subr.bf16.mxu0 0
      %2363 = vmatpush1.bf16.msra.mxu0 %v1630
      %2364 = vmatprep.subr.bf16.mxu0 0
      %2365 = vmatpush1.bf16.msra.mxu0 %v1629
      %2366 = vmatprep.subr.bf16.mxu0 0
      %2367 = vmatpush1.bf16.msra.mxu0 %v1628
      %2368 = vmatprep.subr.bf16.mxu0 0
      %2369 = vmatpush2.bf16.msra.mxu0 0
      %2370 = vmatprep.subr.bf16.mxu0 0
      %2371 = vmatpush2.bf16.msra.mxu0 0
      %2372 = vmatprep.subr.bf16.mxu0 0
      %2373 = vmatpush2.bf16.msra.mxu0 0
      %2374 = vmatprep.subr.bf16.mxu0 0
      %2375 = vmatpush2.bf16.msra.mxu0 0
      %2376 = vmatprep.subr.bf16.mxu0 0
      %2377 = vmatpush2.bf16.msra.mxu0 0
      %2378 = vmatprep.subr.bf16.mxu0 0
      %2379 = vmatpush2.bf16.msra.mxu0 0
      %2380 = vmatprep.subr.bf16.mxu0 0
      %2381 = vmatpush2.bf16.msra.mxu0 0
      %2382 = vmatprep.subr.bf16.mxu0 0
      %2383 = vmatpush2.bf16.msra.mxu0 0
      %2384 = vmatprep.mubr.bf16.mxu0 0
      %2385 = vmatmul.mubr.bf16.gmra.mxu0 %v996
      %v2386 = vpop.f32.mrf.mxu0
      %v2387 = vadd.f32 %v2226, %v2386
      %v2388 = vpop.f32.mrf.mxu0
      %v2389 = vpop.f32.mrf.mxu0
      %v2390 = vadd.f32 %v2229, %v2389
      %v2391 = vpop.f32.mrf.mxu0
      %2392 = vmatprep.mubr.bf16.mxu0 0
      %2393 = vmatmul.mubr.bf16.gmra.mxu0 %v1005
      %v2394 = vpop.f32.mrf.mxu0
      %v2395 = vadd.f32 %v2234, %v2394
      %v2396 = vpop.f32.mrf.mxu0
      %v2397 = vpop.f32.mrf.mxu0
      %v2398 = vadd.f32 %v2237, %v2397
      %v2399 = vpop.f32.mrf.mxu0
      %2400 = vmatprep.mubr.bf16.mxu0 0
      %2401 = vmatmul.mubr.bf16.gmra.mxu0 %v1014
      %v2402 = vpop.f32.mrf.mxu0
      %v2403 = vadd.f32 %v2242, %v2402
      %v2404 = vpop.f32.mrf.mxu0
      %v2405 = vpop.f32.mrf.mxu0
      %v2406 = vadd.f32 %v2245, %v2405
      %v2407 = vpop.f32.mrf.mxu0
      %2408 = vmatprep.mubr.bf16.mxu0 0
      %2409 = vmatmul.mubr.bf16.gmra.mxu0 %v1023
      %v2410 = vpop.f32.mrf.mxu0
      %v2411 = vadd.f32 %v2250, %v2410
      %v2412 = vpop.f32.mrf.mxu0
      %v2413 = vpop.f32.mrf.mxu0
      %v2414 = vadd.f32 %v2253, %v2413
      %v2415 = vpop.f32.mrf.mxu0
      %2416 = vmatprep.mubr.bf16.mxu0 0
      %2417 = vmatmul.mubr.bf16.gmra.mxu0 %v1032
      %v2418 = vpop.f32.mrf.mxu0
      %v2419 = vadd.f32 %v2258, %v2418
      %v2420 = vpop.f32.mrf.mxu0
      %v2421 = vpop.f32.mrf.mxu0
      %v2422 = vadd.f32 %v2261, %v2421
      %v2423 = vpop.f32.mrf.mxu0
      %2424 = vmatprep.mubr.bf16.mxu0 0
      %2425 = vmatmul.mubr.bf16.gmra.mxu0 %v1041
      %v2426 = vpop.f32.mrf.mxu0
      %v2427 = vadd.f32 %v2266, %v2426
      %v2428 = vpop.f32.mrf.mxu0
      %v2429 = vpop.f32.mrf.mxu0
      %v2430 = vadd.f32 %v2269, %v2429
      %v2431 = vpop.f32.mrf.mxu0
      %2432 = vmatprep.mubr.bf16.mxu0 0
      %2433 = vmatmul.mubr.bf16.gmra.mxu0 %v1050
      %v2434 = vpop.f32.mrf.mxu0
      %v2435 = vadd.f32 %v2274, %v2434
      %v2436 = vpop.f32.mrf.mxu0
      %v2437 = vpop.f32.mrf.mxu0
      %v2438 = vadd.f32 %v2277, %v2437
      %v2439 = vpop.f32.mrf.mxu0
      %2440 = vmatprep.mubr.bf16.mxu0 0
      %2441 = vmatmul.mubr.bf16.gmra.mxu0 %v1059
      %v2442 = vpop.f32.mrf.mxu0
      %v2443 = vadd.f32 %v2282, %v2442
      %v2444 = vpop.f32.mrf.mxu0
      %v2445 = vpop.f32.mrf.mxu0
      %v2446 = vadd.f32 %v2285, %v2445
      %v2447 = vpop.f32.mrf.mxu0
      %2448 = vmatprep.mubr.bf16.mxu0 0
      %2449 = vmatmul.mubr.bf16.gmra.mxu0 %v1068
      %v2450 = vpop.f32.mrf.mxu0
      %v2451 = vadd.f32 %v2290, %v2450
      %v2452 = vpop.f32.mrf.mxu0
      %v2453 = vpop.f32.mrf.mxu0
      %v2454 = vadd.f32 %v2293, %v2453
      %v2455 = vpop.f32.mrf.mxu0
      %2456 = vmatprep.mubr.bf16.mxu0 0
      %2457 = vmatmul.mubr.bf16.gmra.mxu0 %v1077
      %v2458 = vpop.f32.mrf.mxu0
      %v2459 = vadd.f32 %v2298, %v2458
      %v2460 = vpop.f32.mrf.mxu0
      %v2461 = vpop.f32.mrf.mxu0
      %v2462 = vadd.f32 %v2301, %v2461
      %v2463 = vpop.f32.mrf.mxu0
      %2464 = vmatprep.mubr.bf16.mxu0 0
      %2465 = vmatmul.mubr.bf16.gmra.mxu0 %v1086
      %v2466 = vpop.f32.mrf.mxu0
      %v2467 = vadd.f32 %v2306, %v2466
      %v2468 = vpop.f32.mrf.mxu0
      %v2469 = vpop.f32.mrf.mxu0
      %v2470 = vadd.f32 %v2309, %v2469
      %v2471 = vpop.f32.mrf.mxu0
      %2472 = vmatprep.mubr.bf16.mxu0 0
      %2473 = vmatmul.mubr.bf16.gmra.mxu0 %v1095
      %v2474 = vpop.f32.mrf.mxu0
      %v2475 = vadd.f32 %v2314, %v2474
      %v2476 = vpop.f32.mrf.mxu0
      %v2477 = vpop.f32.mrf.mxu0
      %v2478 = vadd.f32 %v2317, %v2477
      %v2479 = vpop.f32.mrf.mxu0
      %2480 = vmatprep.mubr.bf16.mxu0 0
      %2481 = vmatmul.mubr.bf16.gmra.mxu0 %v1104
      %v2482 = vpop.f32.mrf.mxu0
      %v2483 = vadd.f32 %v2322, %v2482
      %v2484 = vpop.f32.mrf.mxu0
      %v2485 = vpop.f32.mrf.mxu0
      %v2486 = vadd.f32 %v2325, %v2485
      %v2487 = vpop.f32.mrf.mxu0
      %2488 = vmatprep.mubr.bf16.mxu0 0
      %2489 = vmatmul.mubr.bf16.gmra.mxu0 %v1113
      %v2490 = vpop.f32.mrf.mxu0
      %v2491 = vadd.f32 %v2330, %v2490
      %v2492 = vpop.f32.mrf.mxu0
      %v2493 = vpop.f32.mrf.mxu0
      %v2494 = vadd.f32 %v2333, %v2493
      %v2495 = vpop.f32.mrf.mxu0
      %2496 = vmatprep.mubr.bf16.mxu0 0
      %2497 = vmatmul.mubr.bf16.gmra.mxu0 %v1122
      %v2498 = vpop.f32.mrf.mxu0
      %v2499 = vadd.f32 %v2338, %v2498
      %v2500 = vpop.f32.mrf.mxu0
      %v2501 = vpop.f32.mrf.mxu0
      %v2502 = vadd.f32 %v2341, %v2501
      %v2503 = vpop.f32.mrf.mxu0
      %2504 = vmatprep.mubr.bf16.mxu0 0
      %2505 = vmatmul.mubr.bf16.gmra.mxu0 %v1131
      %v2506 = vpop.f32.mrf.mxu0
      %v2507 = vadd.f32 %v2346, %v2506
      %v2508 = vpop.f32.mrf.mxu0
      %v2509 = vpop.f32.mrf.mxu0
      %v2510 = vadd.f32 %v2349, %v2509
      %v2511 = vpop.f32.mrf.mxu0
      %2512 = vdwg.mxu0
      %v2513 = vpack.c.bf16 %v2390, %v2387
      %v2514 = vpack.c.bf16 %v2398, %v2395
      %v2515 = vpack.c.bf16 %v2406, %v2403
      %v2516 = vpack.c.bf16 %v2414, %v2411
      %v2517 = vpack.c.bf16 %v2422, %v2419
      %v2518 = vpack.c.bf16 %v2430, %v2427
      %v2519 = vpack.c.bf16 %v2438, %v2435
      %v2520 = vpack.c.bf16 %v2446, %v2443
      %v2521 = vpack.c.bf16 %v2454, %v2451
      %v2522 = vpack.c.bf16 %v2462, %v2459
      %v2523 = vpack.c.bf16 %v2470, %v2467
      %v2524 = vpack.c.bf16 %v2478, %v2475
      %v2525 = vpack.c.bf16 %v2486, %v2483
      %v2526 = vpack.c.bf16 %v2494, %v2491
      %v2527 = vpack.c.bf16 %v2502, %v2499
      %v2528 = vpack.c.bf16 %v2510, %v2507
      %v2545 = vunpack.c.l.b16 %v2513
      %v2546 = vunpack.c.h.b16 %v2513
      %v2547 = vunpack.c.l.b16 %v2514
      %v2548 = vunpack.c.h.b16 %v2514
      %v2549 = vunpack.c.l.b16 %v2515
      %v2550 = vunpack.c.h.b16 %v2515
      %v2551 = vunpack.c.l.b16 %v2516
      %v2552 = vunpack.c.h.b16 %v2516
      %v2553 = vunpack.c.l.b16 %v2517
      %v2554 = vunpack.c.h.b16 %v2517
      %v2555 = vunpack.c.l.b16 %v2518
      %v2556 = vunpack.c.h.b16 %v2518
      %v2557 = vunpack.c.l.b16 %v2519
      %v2558 = vunpack.c.h.b16 %v2519
      %v2559 = vunpack.c.l.b16 %v2520
      %v2560 = vunpack.c.h.b16 %v2520
      %v2561 = vunpack.c.l.b16 %v2521
      %v2562 = vunpack.c.h.b16 %v2521
      %v2563 = vunpack.c.l.b16 %v2522
      %v2564 = vunpack.c.h.b16 %v2522
      %v2565 = vunpack.c.l.b16 %v2523
      %v2566 = vunpack.c.h.b16 %v2523
      %v2567 = vunpack.c.l.b16 %v2524
      %v2568 = vunpack.c.h.b16 %v2524
      %v2569 = vunpack.c.l.b16 %v2525
      %v2570 = vunpack.c.h.b16 %v2525
      %v2571 = vunpack.c.l.b16 %v2526
      %v2572 = vunpack.c.h.b16 %v2526
      %v2573 = vunpack.c.l.b16 %v2527
      %v2574 = vunpack.c.h.b16 %v2527
      %v2575 = vunpack.c.l.b16 %v2528
      %v2576 = vunpack.c.h.b16 %v2528
      %v2577 = vpack.c.b16 %v2545, %v2545
      %v2578 = vpack.c.b16 %v2546, %v2546
      %v2579 = vpack.c.b16 %v2547, %v2547
      %v2580 = vpack.c.b16 %v2548, %v2548
      %v2581 = vpack.c.b16 %v2549, %v2549
      %v2582 = vpack.c.b16 %v2550, %v2550
      %v2583 = vpack.c.b16 %v2551, %v2551
      %v2584 = vpack.c.b16 %v2552, %v2552
      %v2585 = vpack.c.b16 %v2553, %v2553
      %v2586 = vpack.c.b16 %v2554, %v2554
      %v2587 = vpack.c.b16 %v2555, %v2555
      %v2588 = vpack.c.b16 %v2556, %v2556
      %v2589 = vpack.c.b16 %v2557, %v2557
      %v2590 = vpack.c.b16 %v2558, %v2558
      %v2591 = vpack.c.b16 %v2559, %v2559
      %v2592 = vpack.c.b16 %v2560, %v2560
      %v2593 = vpack.c.b16 %v2561, %v2561
      %v2594 = vpack.c.b16 %v2562, %v2562
      %v2595 = vpack.c.b16 %v2563, %v2563
      %v2596 = vpack.c.b16 %v2564, %v2564
      %v2597 = vpack.c.b16 %v2565, %v2565
      %v2598 = vpack.c.b16 %v2566, %v2566
      %v2599 = vpack.c.b16 %v2567, %v2567
      %v2600 = vpack.c.b16 %v2568, %v2568
      %v2601 = vpack.c.b16 %v2569, %v2569
      %v2602 = vpack.c.b16 %v2570, %v2570
      %v2603 = vpack.c.b16 %v2571, %v2571
      %v2604 = vpack.c.b16 %v2572, %v2572
      %v2605 = vpack.c.b16 %v2573, %v2573
      %v2606 = vpack.c.b16 %v2574, %v2574
      %v2607 = vpack.c.b16 %v2575, %v2575
      %v2608 = vpack.c.b16 %v2576, %v2576
      %2641 = vst [vmem:[%s226] sm:$0xf] %v2577
      %2642 = vst [vmem:[%s226 + $0x4] sm:$0xf] %v2578
      %2643 = vst [vmem:[%s226 + $0x8] sm:$0xf] %v2579
      %2644 = vst [vmem:[%s226 + $0xc] sm:$0xf] %v2580
      %2645 = vst [vmem:[%s226 + $0x10] sm:$0xf] %v2581
      %2646 = vst [vmem:[%s226 + $0x14] sm:$0xf] %v2582
      %2647 = vst [vmem:[%s226 + $0x18] sm:$0xf] %v2583
      %2648 = vst [vmem:[%s226 + $0x1c] sm:$0xf] %v2584
      %2649 = vst [vmem:[%s226 + $0x20] sm:$0xf] %v2585
      %2650 = vst [vmem:[%s226 + $0x24] sm:$0xf] %v2586
      %2651 = vst [vmem:[%s226 + $0x28] sm:$0xf] %v2587
      %2652 = vst [vmem:[%s226 + $0x2c] sm:$0xf] %v2588
      %2653 = vst [vmem:[%s226 + $0x30] sm:$0xf] %v2589
      %2654 = vst [vmem:[%s226 + $0x34] sm:$0xf] %v2590
      %2655 = vst [vmem:[%s226 + $0x38] sm:$0xf] %v2591
      %2656 = vst [vmem:[%s226 + $0x3c] sm:$0xf] %v2592
      %2657 = vst [vmem:[%s226 + $0x40] sm:$0xf] %v2593
      %2658 = vst [vmem:[%s226 + $0x44] sm:$0xf] %v2594
      %2659 = vst [vmem:[%s226 + $0x48] sm:$0xf] %v2595
      %2660 = vst [vmem:[%s226 + $0x4c] sm:$0xf] %v2596
      %2661 = vst [vmem:[%s226 + $0x50] sm:$0xf] %v2597
      %2662 = vst [vmem:[%s226 + $0x54] sm:$0xf] %v2598
      %2663 = vst [vmem:[%s226 + $0x58] sm:$0xf] %v2599
      %2664 = vst [vmem:[%s226 + $0x5c] sm:$0xf] %v2600
      %2665 = vst [vmem:[%s226 + $0x60] sm:$0xf] %v2601
      %2666 = vst [vmem:[%s226 + $0x64] sm:$0xf] %v2602
      %2667 = vst [vmem:[%s226 + $0x68] sm:$0xf] %v2603
      %2668 = vst [vmem:[%s226 + $0x6c] sm:$0xf] %v2604
      %2669 = vst [vmem:[%s226 + $0x70] sm:$0xf] %v2605
      %2670 = vst [vmem:[%s226 + $0x74] sm:$0xf] %v2606
      %2671 = vst [vmem:[%s226 + $0x78] sm:$0xf] %v2607
      %2672 = vst [vmem:[%s226 + $0x7c] sm:$0xf] %v2608
      %s2673 = smul.u32 32, %s18
      %p2674 = scmp.lt.s32.totalorder %s2673, 127
      %s2675 = scalar_select %p2674, %s2673, 127
      %p2676 = scmp.lt.s32.totalorder %s19, 0
      %s2677 = scalar_select %p2676, %s19, 0
      %s2678 = sadd.s32 %s2677, %s2675
      %s2679 = smul.addr %s2678, 4
      %s2680 = scalar_lea.vmem %s3, %s2679
      // Predicated region
      $region33: #{forward_uncond.51} parent=31 // pred_check
        %p2681 = pneg %p124
      $region34: #{forward_uncond.51} parent=31 // pred_check_branch
        %2683 = sbr.rel (%p2681) target = $region36
      $region35: #{forward_uncond.51} parent=31 // pred_region
        %s2684 = smul.u32 32, %s18
      $region36: #{forward_uncond.51} parent=31 // pred_fallthru
        _
    $region32: #{forward_uncond.51} parent=5 // pred_fallthru
      _
    %p2685 = scmp.le.s32.totalorder 2, %s9
    // Predicated region
    $region37: #{forward_uncond.51} parent=5 // pred_check
      %p2686 = pneg %p2685
    $region38: #{forward_uncond.51} parent=5 // pred_check_branch
      %2688 = sbr.rel (%p2686) target = $region40
    $region39: #{forward_uncond.51} parent=5 // pred_region
      %s2689 = ssub.s32 %s9, 2
      // Predicated region
      $region41: #{forward_uncond.51} parent=39 // pred_check
        %p2690 = pneg %p130
      $region42: #{forward_uncond.51} parent=39 // pred_check_branch
        %2692 = sbr.rel (%p2690) target = $region44
      $region43: #{forward_uncond.51} parent=39 // pred_region
        %s2693 = smul.u32 32, %s20
        %p2694 = scmp.lt.s32.totalorder %s2693, 127
        %s2695 = scalar_select %p2694, %s2693, 127
        %p2696 = scmp.lt.s32.totalorder %s21, 0
        %s2697 = scalar_select %p2696, %s21, 0
        %s2698 = sadd.s32 %s2697, %s2695
        %s2699 = smul.addr %s2698, 4
        %s2700 = scalar_lea.vmem %s3, %s2699
      $region44: #{forward_uncond.51} parent=39 // pred_fallthru
        _
    $region40: #{forward_uncond.51} parent=5 // pred_fallthru
      _
  $region6: #{forward_uncond.51} parent=0 // loop_footer
    %s13 = sadd.s32 1, %s9
  $region7: #{forward_uncond.51} parent=0 // loop_footer_branch
    %8 = sbr.rel target = $region3
  $region8: #{forward_uncond.51} parent=0 // loop_exit
    _

</llo_original>
